<compile_context>
chip_gen: v7x
topology: tpu7x:2x2x1
jax: 0.10.0
libtpu: 0.0.40
codegen_flags: <defaults>
</compile_context>

<pallas_src>
import jax
import jax.numpy as jnp
from jax.experimental import pallas as pl
from jax.experimental.pallas import tpu as pltpu

EPS = 1e-5
_LP = 8   # left zero-pad width in the dwconv scratch so the interior store is sublane-aligned


# ------------- Kernel 1: fc1 (1x1 conv, no bias) + fused BN1 partial statistics -------------
def fc1_stats_kernel(x_ref, w1_ref, y_ref, sum_ref, sq_ref):
    # x_ref: (1, H, W, Cin); w1_ref: (Cin, Chid)
    # y_ref: (1, H, W, Chid); sum_ref/sq_ref: (1, 1, Chid) per-image partial stats
    H, W, Cin = x_ref.shape[1], x_ref.shape[2], x_ref.shape[3]
    Chid = w1_ref.shape[1]
    xm = x_ref[0].reshape(H * W, Cin)
    y = jnp.dot(xm, w1_ref[...], preferred_element_type=jnp.float32)    # (H*W, Chid)
    y_ref[...] = y.reshape(1, H, W, Chid)
    sum_ref[...] = jnp.sum(y, axis=0, keepdims=True).reshape(1, 1, Chid)
    sq_ref[...] = jnp.sum(y * y, axis=0, keepdims=True).reshape(1, 1, Chid)


# -- Kernel 2: BN1 affine + depthwise 3x3 conv(+bias) + ReLU6 + fc2 + fused BN2 partial stats --
def dwconv_fc2_stats_kernel(y_ref, scale_ref, shift_ref, wdw_ref, bdw_ref, w2_ref,
                            o_ref, sum_ref, sq_ref, pad_ref):
    # y_ref: (1, H, W, Chid); scale/shift/bdw: (1, Chid); wdw: (9, Chid); w2: (Chid, Cout)
    # o_ref: (1, H, W, Cout); sum/sq: (1, 1, Cout); pad_ref: VMEM (H+2, W+2*_LP, Chid)
    H, W, Chid = y_ref.shape[1], y_ref.shape[2], y_ref.shape[3]
    Cout = w2_ref.shape[1]

    # BN1 affine applied to the un-normalized fc1 output.
    a = y_ref[0] * scale_ref[...].reshape(1, 1, Chid) + shift_ref[...].reshape(1, 1, Chid)

    # Zero-padded frame for the depthwise conv, built in VMEM (no HBM pad pass).
    pad_ref[...] = jnp.zeros_like(pad_ref)
    pad_ref[1:H + 1, _LP:_LP + W, :] = a           # aligned interior store
    xp = pad_ref[...]                              # (H+2, W+2*_LP, Chid)

    wdw = wdw_ref[...]                             # (9, Chid), tap order dy*3+dx
    acc = jnp.zeros((H, W, Chid), jnp.float32)
    for dy in range(3):
        for dx in range(3):
            k = dy * 3 + dx
            tap = wdw[k:k + 1, :].reshape(1, 1, Chid)
            acc = acc + xp[dy:dy + H, (_LP - 1) + dx:(_LP - 1) + dx + W, :] * tap
    acc = acc + bdw_ref[...].reshape(1, 1, Chid)   # depthwise conv bias

    act = jnp.clip(acc, 0.0, 6.0)                  # ReLU6 (Dropout p=0.0 is identity)

    y2 = jnp.dot(act.reshape(H * W, Chid), w2_ref[...],
                 preferred_element_type=jnp.float32)                   # (H*W, Cout)
    o_ref[...] = y2.reshape(1, H, W, Cout)
    sum_ref[...] = jnp.sum(y2, axis=0, keepdims=True).reshape(1, 1, Cout)
    sq_ref[...] = jnp.sum(y2 * y2, axis=0, keepdims=True).reshape(1, 1, Cout)


# -------------------- Kernel 3: BN2 affine (in place over the fc2 output) --------------------
def bn2_affine_kernel(y_ref, scale_ref, shift_ref, o_ref):
    C = y_ref.shape[3]
    o_ref[...] = (y_ref[...] * scale_ref[...].reshape(1, 1, 1, C)
                  + shift_ref[...].reshape(1, 1, 1, C))


# ----------------------------------------- Wrapper -------------------------------------------
def _bn_scale_shift(sum_parts, sq_parts, gamma, beta, count):
    s = jnp.sum(sum_parts, axis=(0, 1))
    q = jnp.sum(sq_parts, axis=(0, 1))
    mean = s / count
    # NOTE: E[y^2]-E[y]^2 can cancel for very large activations; fine at these magnitudes.
    var = q / count - mean * mean
    inv = gamma.astype(jnp.float32) / jnp.sqrt(var + EPS)
    return inv.reshape(1, -1), (beta.astype(jnp.float32) - mean * inv).reshape(1, -1)


@jax.jit
def mlp_forward(x_nchw, w1_oihw, gamma1, beta1, wdw_oihw, bdw, w2_oihw, gamma2, beta2):
    N, Cin, H, W = x_nchw.shape
    Chid = w1_oihw.shape[0]
    Cout = w2_oihw.shape[0]

    # NCHW -> NHWC once; repack weights for channel-matmul / tap-major forms.
    x_nhwc = jnp.transpose(x_nchw, (0, 2, 3, 1)).astype(jnp.float32)
    w1 = jnp.transpose(w1_oihw[:, :, 0, 0], (1, 0)).astype(jnp.float32)     # (Cin, Chid)
    w2 = jnp.transpose(w2_oihw[:, :, 0, 0], (1, 0)).astype(jnp.float32)     # (Chid, Cout)
    wdw = jnp.transpose(wdw_oihw[:, 0], (1, 2, 0)).reshape(9, Chid).astype(jnp.float32)
    bdw2d = bdw.reshape(1, Chid).astype(jnp.float32)

    par = pltpu.CompilerParams(dimension_semantics=("parallel",))

    # ---- pass 1: fc1 matmul + fused BN1 per-image partial stats ----
    y1, s1p, q1p = pl.pallas_call(
        fc1_stats_kernel,
        out_shape=(jax.ShapeDtypeStruct((N, H, W, Chid), jnp.float32),
                   jax.ShapeDtypeStruct((N, 1, Chid), jnp.float32),
                   jax.ShapeDtypeStruct((N, 1, Chid), jnp.float32)),
        grid=(N,),
        in_specs=[pl.BlockSpec((1, H, W, Cin), lambda n: (n, 0, 0, 0)),
                  pl.BlockSpec((Cin, Chid), lambda n: (0, 0))],
        out_specs=(pl.BlockSpec((1, H, W, Chid), lambda n: (n, 0, 0, 0)),
                   pl.BlockSpec((1, 1, Chid), lambda n: (n, 0, 0)),
                   pl.BlockSpec((1, 1, Chid), lambda n: (n, 0, 0))),
        compiler_params=par,
    )(x_nhwc, w1)

    count = jnp.float32(N * H * W)
    scale1, shift1 = _bn_scale_shift(s1p, q1p, gamma1, beta1, count)

    # ---- pass 2: BN1 affine + dwconv3x3(+bias) + ReLU6 + fc2 matmul + fused BN2 stats ----
    y2, s2p, q2p = pl.pallas_call(
        dwconv_fc2_stats_kernel,
        out_shape=(jax.ShapeDtypeStruct((N, H, W, Cout), jnp.float32),
                   jax.ShapeDtypeStruct((N, 1, Cout), jnp.float32),
                   jax.ShapeDtypeStruct((N, 1, Cout), jnp.float32)),
        grid=(N,),
        in_specs=[pl.BlockSpec((1, H, W, Chid), lambda n: (n, 0, 0, 0)),
                  pl.BlockSpec((1, Chid), lambda n: (0, 0)),
                  pl.BlockSpec((1, Chid), lambda n: (0, 0)),
                  pl.BlockSpec((9, Chid), lambda n: (0, 0)),
                  pl.BlockSpec((1, Chid), lambda n: (0, 0)),
                  pl.BlockSpec((Chid, Cout), lambda n: (0, 0))],
        out_specs=(pl.BlockSpec((1, H, W, Cout), lambda n: (n, 0, 0, 0)),
                   pl.BlockSpec((1, 1, Cout), lambda n: (n, 0, 0)),
                   pl.BlockSpec((1, 1, Cout), lambda n: (n, 0, 0))),
        scratch_shapes=[pltpu.VMEM((H + 2, W + 2 * _LP, Chid), jnp.float32)],
        compiler_params=par,
    )(y1, scale1, shift1, wdw, bdw2d, w2)

    scale2, shift2 = _bn_scale_shift(s2p, q2p, gamma2, beta2, count)

    # ---- pass 3: BN2 affine, written in place over y2 (input/output aliased) ----
    out_nhwc = pl.pallas_call(
        bn2_affine_kernel,
        out_shape=jax.ShapeDtypeStruct((N, H, W, Cout), jnp.float32),
        grid=(N,),
        in_specs=[pl.BlockSpec((1, H, W, Cout), lambda n: (n, 0, 0, 0)),
                  pl.BlockSpec((1, Cout), lambda n: (0, 0)),
                  pl.BlockSpec((1, Cout), lambda n: (0, 0))],
        out_specs=pl.BlockSpec((1, H, W, Cout), lambda n: (n, 0, 0, 0)),
        input_output_aliases={0: 0},
        compiler_params=par,
    )(y2, scale2, shift2)

    # back to NCHW to match the PyTorch module's I/O convention
    return jnp.transpose(out_nhwc, (0, 3, 1, 2))


# --------------------------------- pure-JAX reference ----------------------------------------
def ref_forward(x, w1, g1, b1, wdw, bdw, w2, g2, b2):
    def bn_train(y, g, b):
        mean = jnp.mean(y, axis=(0, 2, 3), keepdims=True)
        var = jnp.var(y, axis=(0, 2, 3), keepdims=True)      # biased var (PyTorch BN norm)
        yh = (y - mean) / jnp.sqrt(var + EPS)
        return yh * g[None, :, None, None] + b[None, :, None, None]

    dn = ("NCHW", "OIHW", "NCHW")
    y = jax.lax.conv_general_dilated(x, w1, (1, 1), "VALID", dimension_numbers=dn)
    y = bn_train(y, g1, b1)                                   # fc1 (Conv 1x1 + BN, act=False)
    y = jax.lax.conv_general_dilated(y, wdw, (1, 1), ((1, 1), (1, 1)),
                                     dimension_numbers=dn,
                                     feature_group_count=wdw.shape[0])
    y = y + bdw[None, :, None, None]                          # depthwise 3x3 + bias
    y = jnp.clip(y, 0.0, 6.0)                                 # ReLU6; Dropout p=0.0 = identity
    y = jax.lax.conv_general_dilated(y, w2, (1, 1), "VALID", dimension_numbers=dn)
    y = bn_train(y, g2, b2)                                   # fc2 (Conv 1x1 + BN, act=False)
    return y


if __name__ == "__main__":
    key = jax.random.PRNGKey(0)
    ks = jax.random.split(key, 9)

    N, Cin, Chid, H, W = 2, 4, 32, 16, 16
    Cout = Cin                                                # Mlp default: out = in_features

    def uinit(k, shape, fan_in):
        bound = 1.0 / (fan_in ** 0.5)
        return jax.random.uniform(k, shape, jnp.float32, -bound, bound)

    x = jax.random.normal(ks[0], (N, Cin, H, W), jnp.float32)
    w1 = uinit(ks[1], (Chid, Cin, 1, 1), Cin)                 # fc1.conv weight (bias=False)
    g1 = 1.0 + 0.1 * jax.random.normal(ks[2], (Chid,), jnp.float32)
    b1 = 0.1 * jax.random.normal(ks[3], (Chid,), jnp.float32)
    wdw = uinit(ks[4], (Chid, 1, 3, 3), 9)                    # depthwise conv weight
    bdw = uinit(ks[5], (Chid,), 9)                            # depthwise conv bias
    w2 = uinit(ks[6], (Cout, Chid, 1, 1), Chid)               # fc2.conv weight (bias=False)
    g2 = 1.0 + 0.1 * jax.random.normal(ks[7], (Cout,), jnp.float32)
    b2 = 0.1 * jax.random.normal(ks[8], (Cout,), jnp.float32)

    out = mlp_forward(x, w1, g1, b1, wdw, bdw, w2, g2, b2)
    jax.block_until_ready(out)

    ref = ref_forward(x, w1, g1, b1, wdw, bdw, w2, g2, b2)
    assert out.shape == (N, Cout, H, W)
    err = float(jnp.max(jnp.abs(out - ref)))
    assert err < 1e-3, f"mismatch vs reference: {err}"
    print("KERNEL_OK")
</pallas_src>

<mosaic_0001>
module attributes {stable_mosaic.version = 11 : i64} {
  func.func @fc1_stats_kernel(%arg0: i32, %arg1: memref<1x16x16x4xf32, #tpu.memory_space<vmem>>, %arg2: memref<4x32xf32, #tpu.memory_space<vmem>>, %arg3: memref<1x16x16x32xf32, #tpu.memory_space<vmem>>, %arg4: memref<1x1x32xf32, #tpu.memory_space<vmem>>, %arg5: memref<1x1x32xf32, #tpu.memory_space<vmem>>) attributes {dimension_semantics = [#tpu.dimension_semantics<parallel>], iteration_bounds = array<i64: 2>, scalar_prefetch = 0 : i64, scratch_operands = 0 : i64, tpu.core_type = #tpu.core_type<tc>, window_params = [{transform_indices = @transform_0, window_bounds = array<i64: 1, 16, 16, 4>}, {pipeline_mode = #tpu.pipeline_mode<synchronous>, transform_indices = @transform_1, window_bounds = array<i64: 4, 32>}, {transform_indices = @transform_2, window_bounds = array<i64: 1, 16, 16, 32>}, {transform_indices = @transform_3, window_bounds = array<i64: 1, 1, 32>}, {transform_indices = @transform_4, window_bounds = array<i64: 1, 1, 32>}]} {
    %c0 = arith.constant 0 : index
    %c0_0 = arith.constant 0 : index
    %c0_1 = arith.constant 0 : index
    %c0_2 = arith.constant 0 : index
    %0 = vector.load %arg1[%c0, %c0_0, %c0_1, %c0_2] : memref<1x16x16x4xf32, #tpu.memory_space<vmem>>, vector<1x16x16x4xf32>
    %1 = vector.shape_cast %0 : vector<1x16x16x4xf32> to vector<16x16x4xf32>
    %2 = vector.shape_cast %1 : vector<16x16x4xf32> to vector<256x4xf32>
    %c0_3 = arith.constant 0 : index
    %c0_4 = arith.constant 0 : index
    %3 = vector.load %arg2[%c0_3, %c0_4] : memref<4x32xf32, #tpu.memory_space<vmem>>, vector<4x32xf32>
    %cst = arith.constant dense<0.000000e+00> : vector<256x32xf32>
    %4 = tpu.matmul %2, %3, %cst {dimension_numbers = #tpu.dot_dimension_numbers<[1], [0], [0], [1], [0, 0, 1, 1], [], []>} : vector<256x4xf32>, vector<4x32xf32>, vector<256x32xf32> -> vector<256x32xf32>
    %5 = vector.shape_cast %4 : vector<256x32xf32> to vector<1x16x16x32xf32>
    %c0_5 = arith.constant 0 : index
    %c0_6 = arith.constant 0 : index
    %c0_7 = arith.constant 0 : index
    %c0_8 = arith.constant 0 : index
    %6 = vector.load %arg3[%c0_5, %c0_6, %c0_7, %c0_8] : memref<1x16x16x32xf32, #tpu.memory_space<vmem>>, vector<1x16x16x32xf32>
    tpu.vector_store %arg3[%c0_5, %c0_6, %c0_7, %c0_8], %5 {strides = array<i32>} : memref<1x16x16x32xf32, #tpu.memory_space<vmem>>, vector<1x16x16x32xf32>,
    %cst_9 = arith.constant dense<0.000000e+00> : vector<32xf32>
    %7 = vector.multi_reduction <add>, %4, %cst_9 [0] : vector<256x32xf32> to vector<32xf32>
    %8 = vector.shape_cast %7 : vector<32xf32> to vector<1x32xf32>
    %9 = vector.shape_cast %8 : vector<1x32xf32> to vector<1x1x32xf32>
    %c0_10 = arith.constant 0 : index
    %c0_11 = arith.constant 0 : index
    %c0_12 = arith.constant 0 : index
    %10 = vector.load %arg4[%c0_10, %c0_11, %c0_12] : memref<1x1x32xf32, #tpu.memory_space<vmem>>, vector<1x1x32xf32>
    tpu.vector_store %arg4[%c0_10, %c0_11, %c0_12], %9 {strides = array<i32>} : memref<1x1x32xf32, #tpu.memory_space<vmem>>, vector<1x1x32xf32>,
    %11 = arith.mulf %4, %4 : vector<256x32xf32>
    %cst_13 = arith.constant dense<0.000000e+00> : vector<32xf32>
    %12 = vector.multi_reduction <add>, %11, %cst_13 [0] : vector<256x32xf32> to vector<32xf32>
    %13 = vector.shape_cast %12 : vector<32xf32> to vector<1x32xf32>
    %14 = vector.shape_cast %13 : vector<1x32xf32> to vector<1x1x32xf32>
    %c0_14 = arith.constant 0 : index
    %c0_15 = arith.constant 0 : index
    %c0_16 = arith.constant 0 : index
    %15 = vector.load %arg5[%c0_14, %c0_15, %c0_16] : memref<1x1x32xf32, #tpu.memory_space<vmem>>, vector<1x1x32xf32>
    tpu.vector_store %arg5[%c0_14, %c0_15, %c0_16], %14 {strides = array<i32>} : memref<1x1x32xf32, #tpu.memory_space<vmem>>, vector<1x1x32xf32>,
    return
  }
  func.func @transform_0(%arg0: i32) -> (i32, i32, i32, i32) {
    %c0_i32 = arith.constant 0 : i32
    %c0_i32_0 = arith.constant 0 : i32
    %c0_i32_1 = arith.constant 0 : i32
    %c0_i32_2 = arith.constant 0 : i32
    return %arg0, %c0_i32, %c0_i32_0, %c0_i32_1 : i32, i32, i32, i32
  }
  func.func @transform_1(%arg0: i32) -> (i32, i32) {
    %c0_i32 = arith.constant 0 : i32
    %c0_i32_0 = arith.constant 0 : i32
    %c0_i32_1 = arith.constant 0 : i32
    return %c0_i32, %c0_i32_0 : i32, i32
  }
  func.func @transform_2(%arg0: i32) -> (i32, i32, i32, i32) {
    %c0_i32 = arith.constant 0 : i32
    %c0_i32_0 = arith.constant 0 : i32
    %c0_i32_1 = arith.constant 0 : i32
    %c0_i32_2 = arith.constant 0 : i32
    return %arg0, %c0_i32, %c0_i32_0, %c0_i32_1 : i32, i32, i32, i32
  }
  func.func @transform_3(%arg0: i32) -> (i32, i32, i32) {
    %c0_i32 = arith.constant 0 : i32
    %c0_i32_0 = arith.constant 0 : i32
    %c0_i32_1 = arith.constant 0 : i32
    return %arg0, %c0_i32, %c0_i32_0 : i32, i32, i32
  }
  func.func @transform_4(%arg0: i32) -> (i32, i32, i32) {
    %c0_i32 = arith.constant 0 : i32
    %c0_i32_0 = arith.constant 0 : i32
    %c0_i32_1 = arith.constant 0 : i32
    return %arg0, %c0_i32, %c0_i32_0 : i32, i32, i32
  }
}

module attributes {stable_mosaic.version = 11 : i64} {
  func.func @bn2_affine_kernel(%arg0: i32, %arg1: memref<1x16x16x4xf32, #tpu.memory_space<vmem>>, %arg2: memref<1x4xf32, #tpu.memory_space<vmem>>, %arg3: memref<1x4xf32, #tpu.memory_space<vmem>>, %arg4: memref<1x16x16x4xf32, #tpu.memory_space<vmem>>) attributes {dimension_semantics = [#tpu.dimension_semantics<parallel>], iteration_bounds = array<i64: 2>, scalar_prefetch = 0 : i64, scratch_operands = 0 : i64, tpu.core_type = #tpu.core_type<tc>, window_params = [{transform_indices = @transform_0, window_bounds = array<i64: 1, 16, 16, 4>}, {pipeline_mode = #tpu.pipeline_mode<synchronous>, transform_indices = @transform_1, window_bounds = array<i64: 1, 4>}, {pipeline_mode = #tpu.pipeline_mode<synchronous>, transform_indices = @transform_2, window_bounds = array<i64: 1, 4>}, {transform_indices = @transform_3, window_bounds = array<i64: 1, 16, 16, 4>}]} {
    %c0 = arith.constant 0 : index
    %c0_0 = arith.constant 0 : index
    %c0_1 = arith.constant 0 : index
    %c0_2 = arith.constant 0 : index
    %0 = vector.load %arg1[%c0, %c0_0, %c0_1, %c0_2] : memref<1x16x16x4xf32, #tpu.memory_space<vmem>>, vector<1x16x16x4xf32>
    %c0_3 = arith.constant 0 : index
    %c0_4 = arith.constant 0 : index
    %1 = vector.load %arg2[%c0_3, %c0_4] : memref<1x4xf32, #tpu.memory_space<vmem>>, vector<1x4xf32>
    %2 = vector.shape_cast %1 : vector<1x4xf32> to vector<1x1x1x4xf32>
    %3 = vector.broadcast %2 : vector<1x1x1x4xf32> to vector<1x16x16x4xf32>
    %4 = arith.mulf %0, %3 : vector<1x16x16x4xf32>
    %c0_5 = arith.constant 0 : index
    %c0_6 = arith.constant 0 : index
    %5 = vector.load %arg3[%c0_5, %c0_6] : memref<1x4xf32, #tpu.memory_space<vmem>>, vector<1x4xf32>
    %6 = vector.shape_cast %5 : vector<1x4xf32> to vector<1x1x1x4xf32>
    %7 = vector.broadcast %6 : vector<1x1x1x4xf32> to vector<1x16x16x4xf32>
    %8 = arith.addf %4, %7 : vector<1x16x16x4xf32>
    %c0_7 = arith.constant 0 : index
    %c0_8 = arith.constant 0 : index
    %c0_9 = arith.constant 0 : index
    %c0_10 = arith.constant 0 : index
    %9 = vector.load %arg4[%c0_7, %c0_8, %c0_9, %c0_10] : memref<1x16x16x4xf32, #tpu.memory_space<vmem>>, vector<1x16x16x4xf32>
    tpu.vector_store %arg4[%c0_7, %c0_8, %c0_9, %c0_10], %8 {strides = array<i32>} : memref<1x16x16x4xf32, #tpu.memory_space<vmem>>, vector<1x16x16x4xf32>,
    return
  }
  func.func @transform_0(%arg0: i32) -> (i32, i32, i32, i32) {
    %c0_i32 = arith.constant 0 : i32
    %c0_i32_0 = arith.constant 0 : i32
    %c0_i32_1 = arith.constant 0 : i32
    %c0_i32_2 = arith.constant 0 : i32
    return %arg0, %c0_i32, %c0_i32_0, %c0_i32_1 : i32, i32, i32, i32
  }
  func.func @transform_1(%arg0: i32) -> (i32, i32) {
    %c0_i32 = arith.constant 0 : i32
    %c0_i32_0 = arith.constant 0 : i32
    %c0_i32_1 = arith.constant 0 : i32
    return %c0_i32, %c0_i32_0 : i32, i32
  }
  func.func @transform_2(%arg0: i32) -> (i32, i32) {
    %c0_i32 = arith.constant 0 : i32
    %c0_i32_0 = arith.constant 0 : i32
    %c0_i32_1 = arith.constant 0 : i32
    return %c0_i32, %c0_i32_0 : i32, i32
  }
  func.func @transform_3(%arg0: i32) -> (i32, i32, i32, i32) {
    %c0_i32 = arith.constant 0 : i32
    %c0_i32_0 = arith.constant 0 : i32
    %c0_i32_1 = arith.constant 0 : i32
    %c0_i32_2 = arith.constant 0 : i32
    return %arg0, %c0_i32, %c0_i32_0, %c0_i32_1 : i32, i32, i32, i32
  }
}

module attributes {stable_mosaic.version = 11 : i64} {
  func.func @dwconv_fc2_stats_kernel(%arg0: i32, %arg1: memref<1x16x16x32xf32, #tpu.memory_space<vmem>>, %arg2: memref<1x32xf32, #tpu.memory_space<vmem>>, %arg3: memref<1x32xf32, #tpu.memory_space<vmem>>, %arg4: memref<9x32xf32, #tpu.memory_space<vmem>>, %arg5: memref<1x32xf32, #tpu.memory_space<vmem>>, %arg6: memref<32x4xf32, #tpu.memory_space<vmem>>, %arg7: memref<1x16x16x4xf32, #tpu.memory_space<vmem>>, %arg8: memref<1x1x4xf32, #tpu.memory_space<vmem>>, %arg9: memref<1x1x4xf32, #tpu.memory_space<vmem>>, %arg10: memref<18x32x32xf32, #tpu.memory_space<vmem>>) attributes {dimension_semantics = [#tpu.dimension_semantics<parallel>], iteration_bounds = array<i64: 2>, scalar_prefetch = 0 : i64, scratch_operands = 1 : i64, tpu.core_type = #tpu.core_type<tc>, window_params = [{transform_indices = @transform_0, window_bounds = array<i64: 1, 16, 16, 32>}, {pipeline_mode = #tpu.pipeline_mode<synchronous>, transform_indices = @transform_1, window_bounds = array<i64: 1, 32>}, {pipeline_mode = #tpu.pipeline_mode<synchronous>, transform_indices = @transform_2, window_bounds = array<i64: 1, 32>}, {pipeline_mode = #tpu.pipeline_mode<synchronous>, transform_indices = @transform_3, window_bounds = array<i64: 9, 32>}, {pipeline_mode = #tpu.pipeline_mode<synchronous>, transform_indices = @transform_4, window_bounds = array<i64: 1, 32>}, {pipeline_mode = #tpu.pipeline_mode<synchronous>, transform_indices = @transform_5, window_bounds = array<i64: 32, 4>}, {transform_indices = @transform_6, window_bounds = array<i64: 1, 16, 16, 4>}, {transform_indices = @transform_7, window_bounds = array<i64: 1, 1, 4>}, {transform_indices = @transform_8, window_bounds = array<i64: 1, 1, 4>}]} {
    %c0 = arith.constant 0 : index
    %c0_0 = arith.constant 0 : index
    %c0_1 = arith.constant 0 : index
    %c0_2 = arith.constant 0 : index
    %0 = vector.load %arg1[%c0, %c0_0, %c0_1, %c0_2] : memref<1x16x16x32xf32, #tpu.memory_space<vmem>>, vector<1x16x16x32xf32>
    %1 = vector.shape_cast %0 : vector<1x16x16x32xf32> to vector<16x16x32xf32>
    %c0_3 = arith.constant 0 : index
    %c0_4 = arith.constant 0 : index
    %2 = vector.load %arg2[%c0_3, %c0_4] : memref<1x32xf32, #tpu.memory_space<vmem>>, vector<1x32xf32>
    %3 = vector.shape_cast %2 : vector<1x32xf32> to vector<1x1x32xf32>
    %4 = vector.broadcast %3 : vector<1x1x32xf32> to vector<16x16x32xf32>
    %5 = arith.mulf %1, %4 : vector<16x16x32xf32>
    %c0_5 = arith.constant 0 : index
    %c0_6 = arith.constant 0 : index
    %6 = vector.load %arg3[%c0_5, %c0_6] : memref<1x32xf32, #tpu.memory_space<vmem>>, vector<1x32xf32>
    %7 = vector.shape_cast %6 : vector<1x32xf32> to vector<1x1x32xf32>
    %8 = vector.broadcast %7 : vector<1x1x32xf32> to vector<16x16x32xf32>
    %9 = arith.addf %5, %8 : vector<16x16x32xf32>
    %cst = arith.constant 0.000000e+00 : f32
    %10 = vector.broadcast %cst : f32 to vector<18x32x32xf32>
    %c0_7 = arith.constant 0 : index
    %c0_8 = arith.constant 0 : index
    %c0_9 = arith.constant 0 : index
    %11 = vector.load %arg10[%c0_7, %c0_8, %c0_9] : memref<18x32x32xf32, #tpu.memory_space<vmem>>, vector<18x32x32xf32>
    tpu.vector_store %arg10[%c0_7, %c0_8, %c0_9], %10 {strides = array<i32>} : memref<18x32x32xf32, #tpu.memory_space<vmem>>, vector<18x32x32xf32>,
    %c1 = arith.constant 1 : index
    %c8 = arith.constant 8 : index
    %c0_10 = arith.constant 0 : index
    %12 = vector.load %arg10[%c1, %c8, %c0_10] : memref<18x32x32xf32, #tpu.memory_space<vmem>>, vector<16x16x32xf32>
    tpu.vector_store %arg10[%c1, %c8, %c0_10], %9 {strides = array<i32>} : memref<18x32x32xf32, #tpu.memory_space<vmem>>, vector<16x16x32xf32>,
    %c0_11 = arith.constant 0 : index
    %c0_12 = arith.constant 0 : index
    %c0_13 = arith.constant 0 : index
    %13 = vector.load %arg10[%c0_11, %c0_12, %c0_13] : memref<18x32x32xf32, #tpu.memory_space<vmem>>, vector<18x32x32xf32>
    %c0_14 = arith.constant 0 : index
    %c0_15 = arith.constant 0 : index
    %14 = vector.load %arg4[%c0_14, %c0_15] : memref<9x32xf32, #tpu.memory_space<vmem>>, vector<9x32xf32>
    %cst_16 = arith.constant 0.000000e+00 : f32
    %15 = vector.broadcast %cst_16 : f32 to vector<16x16x32xf32>
    %16 = vector.extract_strided_slice %14 {offsets = [0, 0], sizes = [1, 32], strides = [1, 1]} : vector<9x32xf32> to vector<1x32xf32>
    %17 = vector.shape_cast %16 : vector<1x32xf32> to vector<1x1x32xf32>
    %18 = vector.extract_strided_slice %13 {offsets = [0, 7, 0], sizes = [16, 16, 32], strides = [1, 1, 1]} : vector<18x32x32xf32> to vector<16x16x32xf32>
    %19 = vector.broadcast %17 : vector<1x1x32xf32> to vector<16x16x32xf32>
    %20 = arith.mulf %18, %19 : vector<16x16x32xf32>
    %21 = arith.addf %15, %20 : vector<16x16x32xf32>
    %22 = vector.extract_strided_slice %14 {offsets = [1, 0], sizes = [1, 32], strides = [1, 1]} : vector<9x32xf32> to vector<1x32xf32>
    %23 = vector.shape_cast %22 : vector<1x32xf32> to vector<1x1x32xf32>
    %24 = vector.extract_strided_slice %13 {offsets = [0, 8, 0], sizes = [16, 16, 32], strides = [1, 1, 1]} : vector<18x32x32xf32> to vector<16x16x32xf32>
    %25 = vector.broadcast %23 : vector<1x1x32xf32> to vector<16x16x32xf32>
    %26 = arith.mulf %24, %25 : vector<16x16x32xf32>
    %27 = arith.addf %21, %26 : vector<16x16x32xf32>
    %28 = vector.extract_strided_slice %14 {offsets = [2, 0], sizes = [1, 32], strides = [1, 1]} : vector<9x32xf32> to vector<1x32xf32>
    %29 = vector.shape_cast %28 : vector<1x32xf32> to vector<1x1x32xf32>
    %30 = vector.extract_strided_slice %13 {offsets = [0, 9, 0], sizes = [16, 16, 32], strides = [1, 1, 1]} : vector<18x32x32xf32> to vector<16x16x32xf32>
    %31 = vector.broadcast %29 : vector<1x1x32xf32> to vector<16x16x32xf32>
    %32 = arith.mulf %30, %31 : vector<16x16x32xf32>
    %33 = arith.addf %27, %32 : vector<16x16x32xf32>
    %34 = vector.extract_strided_slice %14 {offsets = [3, 0], sizes = [1, 32], strides = [1, 1]} : vector<9x32xf32> to vector<1x32xf32>
    %35 = vector.shape_cast %34 : vector<1x32xf32> to vector<1x1x32xf32>
    %36 = vector.extract_strided_slice %13 {offsets = [1, 7, 0], sizes = [16, 16, 32], strides = [1, 1, 1]} : vector<18x32x32xf32> to vector<16x16x32xf32>
    %37 = vector.broadcast %35 : vector<1x1x32xf32> to vector<16x16x32xf32>
    %38 = arith.mulf %36, %37 : vector<16x16x32xf32>
    %39 = arith.addf %33, %38 : vector<16x16x32xf32>
    %40 = vector.extract_strided_slice %14 {offsets = [4, 0], sizes = [1, 32], strides = [1, 1]} : vector<9x32xf32> to vector<1x32xf32>
    %41 = vector.shape_cast %40 : vector<1x32xf32> to vector<1x1x32xf32>
    %42 = vector.extract_strided_slice %13 {offsets = [1, 8, 0], sizes = [16, 16, 32], strides = [1, 1, 1]} : vector<18x32x32xf32> to vector<16x16x32xf32>
    %43 = vector.broadcast %41 : vector<1x1x32xf32> to vector<16x16x32xf32>
    %44 = arith.mulf %42, %43 : vector<16x16x32xf32>
    %45 = arith.addf %39, %44 : vector<16x16x32xf32>
    %46 = vector.extract_strided_slice %14 {offsets = [5, 0], sizes = [1, 32], strides = [1, 1]} : vector<9x32xf32> to vector<1x32xf32>
    %47 = vector.shape_cast %46 : vector<1x32xf32> to vector<1x1x32xf32>
    %48 = vector.extract_strided_slice %13 {offsets = [1, 9, 0], sizes = [16, 16, 32], strides = [1, 1, 1]} : vector<18x32x32xf32> to vector<16x16x32xf32>
    %49 = vector.broadcast %47 : vector<1x1x32xf32> to vector<16x16x32xf32>
    %50 = arith.mulf %48, %49 : vector<16x16x32xf32>
    %51 = arith.addf %45, %50 : vector<16x16x32xf32>
    %52 = vector.extract_strided_slice %14 {offsets = [6, 0], sizes = [1, 32], strides = [1, 1]} : vector<9x32xf32> to vector<1x32xf32>
    %53 = vector.shape_cast %52 : vector<1x32xf32> to vector<1x1x32xf32>
    %54 = vector.extract_strided_slice %13 {offsets = [2, 7, 0], sizes = [16, 16, 32], strides = [1, 1, 1]} : vector<18x32x32xf32> to vector<16x16x32xf32>
    %55 = vector.broadcast %53 : vector<1x1x32xf32> to vector<16x16x32xf32>
    %56 = arith.mulf %54, %55 : vector<16x16x32xf32>
    %57 = arith.addf %51, %56 : vector<16x16x32xf32>
    %58 = vector.extract_strided_slice %14 {offsets = [7, 0], sizes = [1, 32], strides = [1, 1]} : vector<9x32xf32> to vector<1x32xf32>
    %59 = vector.shape_cast %58 : vector<1x32xf32> to vector<1x1x32xf32>
    %60 = vector.extract_strided_slice %13 {offsets = [2, 8, 0], sizes = [16, 16, 32], strides = [1, 1, 1]} : vector<18x32x32xf32> to vector<16x16x32xf32>
    %61 = vector.broadcast %59 : vector<1x1x32xf32> to vector<16x16x32xf32>
    %62 = arith.mulf %60, %61 : vector<16x16x32xf32>
    %63 = arith.addf %57, %62 : vector<16x16x32xf32>
    %64 = vector.extract_strided_slice %14 {offsets = [8, 0], sizes = [1, 32], strides = [1, 1]} : vector<9x32xf32> to vector<1x32xf32>
    %65 = vector.shape_cast %64 : vector<1x32xf32> to vector<1x1x32xf32>
    %66 = vector.extract_strided_slice %13 {offsets = [2, 9, 0], sizes = [16, 16, 32], strides = [1, 1, 1]} : vector<18x32x32xf32> to vector<16x16x32xf32>
    %67 = vector.broadcast %65 : vector<1x1x32xf32> to vector<16x16x32xf32>
    %68 = arith.mulf %66, %67 : vector<16x16x32xf32>
    %69 = arith.addf %63, %68 : vector<16x16x32xf32>
    %c0_17 = arith.constant 0 : index
    %c0_18 = arith.constant 0 : index
    %70 = vector.load %arg5[%c0_17, %c0_18] : memref<1x32xf32, #tpu.memory_space<vmem>>, vector<1x32xf32>
    %71 = vector.shape_cast %70 : vector<1x32xf32> to vector<1x1x32xf32>
    %72 = vector.broadcast %71 : vector<1x1x32xf32> to vector<16x16x32xf32>
    %73 = arith.addf %69, %72 : vector<16x16x32xf32>
    %cst_19 = arith.constant 0.000000e+00 : f32
    %cst_20 = arith.constant 6.000000e+00 : f32
    %74 = vector.broadcast %cst_19 : f32 to vector<16x16x32xf32>
    %75 = arith.maximumf %74, %73 : vector<16x16x32xf32>
    %76 = vector.broadcast %cst_20 : f32 to vector<16x16x32xf32>
    %77 = arith.minimumf %76, %75 : vector<16x16x32xf32>
    %78 = vector.shape_cast %77 : vector<16x16x32xf32> to vector<256x32xf32>
    %c0_21 = arith.constant 0 : index
    %c0_22 = arith.constant 0 : index
    %79 = vector.load %arg6[%c0_21, %c0_22] : memref<32x4xf32, #tpu.memory_space<vmem>>, vector<32x4xf32>
    %cst_23 = arith.constant dense<0.000000e+00> : vector<256x4xf32>
    %80 = tpu.matmul %78, %79, %cst_23 {dimension_numbers = #tpu.dot_dimension_numbers<[1], [0], [0], [1], [0, 0, 1, 1], [], []>} : vector<256x32xf32>, vector<32x4xf32>, vector<256x4xf32> -> vector<256x4xf32>
    %81 = vector.shape_cast %80 : vector<256x4xf32> to vector<1x16x16x4xf32>
    %c0_24 = arith.constant 0 : index
    %c0_25 = arith.constant 0 : index
    %c0_26 = arith.constant 0 : index
    %c0_27 = arith.constant 0 : index
    %82 = vector.load %arg7[%c0_24, %c0_25, %c0_26, %c0_27] : memref<1x16x16x4xf32, #tpu.memory_space<vmem>>, vector<1x16x16x4xf32>
    tpu.vector_store %arg7[%c0_24, %c0_25, %c0_26, %c0_27], %81 {strides = array<i32>} : memref<1x16x16x4xf32, #tpu.memory_space<vmem>>, vector<1x16x16x4xf32>,
    %cst_28 = arith.constant dense<0.000000e+00> : vector<4xf32>
    %83 = vector.multi_reduction <add>, %80, %cst_28 [0] : vector<256x4xf32> to vector<4xf32>
    %84 = vector.shape_cast %83 : vector<4xf32> to vector<1x4xf32>
    %85 = vector.shape_cast %84 : vector<1x4xf32> to vector<1x1x4xf32>
    %c0_29 = arith.constant 0 : index
    %c0_30 = arith.constant 0 : index
    %c0_31 = arith.constant 0 : index
    %86 = vector.load %arg8[%c0_29, %c0_30, %c0_31] : memref<1x1x4xf32, #tpu.memory_space<vmem>>, vector<1x1x4xf32>
    tpu.vector_store %arg8[%c0_29, %c0_30, %c0_31], %85 {strides = array<i32>} : memref<1x1x4xf32, #tpu.memory_space<vmem>>, vector<1x1x4xf32>,
    %87 = arith.mulf %80, %80 : vector<256x4xf32>
    %cst_32 = arith.constant dense<0.000000e+00> : vector<4xf32>
    %88 = vector.multi_reduction <add>, %87, %cst_32 [0] : vector<256x4xf32> to vector<4xf32>
    %89 = vector.shape_cast %88 : vector<4xf32> to vector<1x4xf32>
    %90 = vector.shape_cast %89 : vector<1x4xf32> to vector<1x1x4xf32>
    %c0_33 = arith.constant 0 : index
    %c0_34 = arith.constant 0 : index
    %c0_35 = arith.constant 0 : index
    %91 = vector.load %arg9[%c0_33, %c0_34, %c0_35] : memref<1x1x4xf32, #tpu.memory_space<vmem>>, vector<1x1x4xf32>
    tpu.vector_store %arg9[%c0_33, %c0_34, %c0_35], %90 {strides = array<i32>} : memref<1x1x4xf32, #tpu.memory_space<vmem>>, vector<1x1x4xf32>,
    return
  }
  func.func @transform_0(%arg0: i32) -> (i32, i32, i32, i32) {
    %c0_i32 = arith.constant 0 : i32
    %c0_i32_0 = arith.constant 0 : i32
    %c0_i32_1 = arith.constant 0 : i32
    %c0_i32_2 = arith.constant 0 : i32
    return %arg0, %c0_i32, %c0_i32_0, %c0_i32_1 : i32, i32, i32, i32
  }
  func.func @transform_1(%arg0: i32) -> (i32, i32) {
    %c0_i32 = arith.constant 0 : i32
    %c0_i32_0 = arith.constant 0 : i32
    %c0_i32_1 = arith.constant 0 : i32
    return %c0_i32, %c0_i32_0 : i32, i32
  }
  func.func @transform_2(%arg0: i32) -> (i32, i32) {
    %c0_i32 = arith.constant 0 : i32
    %c0_i32_0 = arith.constant 0 : i32
    %c0_i32_1 = arith.constant 0 : i32
    return %c0_i32, %c0_i32_0 : i32, i32
  }
  func.func @transform_3(%arg0: i32) -> (i32, i32) {
    %c0_i32 = arith.constant 0 : i32
    %c0_i32_0 = arith.constant 0 : i32
    %c0_i32_1 = arith.constant 0 : i32
    return %c0_i32, %c0_i32_0 : i32, i32
  }
  func.func @transform_4(%arg0: i32) -> (i32, i32) {
    %c0_i32 = arith.constant 0 : i32
    %c0_i32_0 = arith.constant 0 : i32
    %c0_i32_1 = arith.constant 0 : i32
    return %c0_i32, %c0_i32_0 : i32, i32
  }
  func.func @transform_5(%arg0: i32) -> (i32, i32) {
    %c0_i32 = arith.constant 0 : i32
    %c0_i32_0 = arith.constant 0 : i32
    %c0_i32_1 = arith.constant 0 : i32
    return %c0_i32, %c0_i32_0 : i32, i32
  }
  func.func @transform_6(%arg0: i32) -> (i32, i32, i32, i32) {
    %c0_i32 = arith.constant 0 : i32
    %c0_i32_0 = arith.constant 0 : i32
    %c0_i32_1 = arith.constant 0 : i32
    %c0_i32_2 = arith.constant 0 : i32
    return %arg0, %c0_i32, %c0_i32_0, %c0_i32_1 : i32, i32, i32, i32
  }
  func.func @transform_7(%arg0: i32) -> (i32, i32, i32) {
    %c0_i32 = arith.constant 0 : i32
    %c0_i32_0 = arith.constant 0 : i32
    %c0_i32_1 = arith.constant 0 : i32
    return %arg0, %c0_i32, %c0_i32_0 : i32, i32, i32
  }
  func.func @transform_8(%arg0: i32) -> (i32, i32, i32) {
    %c0_i32 = arith.constant 0 : i32
    %c0_i32_0 = arith.constant 0 : i32
    %c0_i32_1 = arith.constant 0 : i32
    return %arg0, %c0_i32, %c0_i32_0 : i32, i32, i32
  }
}

</mosaic_0001>

<llo_original>
// kernel: mlp_forward.5
$region0: #{mlp_forward.5}
  #allocation0 [shape = 'u32[]', space=smem, size = 0x4, offset = 0x4, fixed_abs, tag = 'smem constant byte address 0x4 - core index']
  #allocation1 [shape = 'u32[144,128]{1,0:T(1,128)}', space=vmem, size = 0x12000, scoped, tag = 'internal scratch']
  %s0 = inlined_call_operand.vmem [shape: f32[2,16,16,4], index: 0, kind: input, shape index: {}, may-alias: {0,3}]
  %s1 = inlined_call_operand.vmem [shape: f32[1,4], index: 1, kind: input, shape index: {}]
  %s2 = inlined_call_operand.vmem [shape: f32[1,4], index: 2, kind: input, shape index: {}]
  %s3 = inlined_call_operand.vmem [shape: f32[2,16,16,4], index: 3, kind: output, shape index: {}, may-alias: {0,3}]
  %s4 = sld [smem:[#allocation0]]
  $region45: #{mlp_forward.5} parent=0
    _
  %s6 = ssub.s32 1, %s4
  %s7 = scalar_select 0, %s6, %s4
  loop: start=0, step=1, limit=4
  $region2: #{mlp_forward.5} parent=0 // loop_pre_header
    _
  $region3: #{mlp_forward.5} parent=0 // loop_header
    %s9 = sphi 0, %s13
    %p10 = scmp.ge.s32.totalorder %s9, 4
    %s19 = sphi 0, %s21
    %s22 = sphi 0, %s19
    %s23 = sphi 0, %s22
    %s39 = sphi 0, %s23
    %s43 = sphi 0, %s43
    %s45 = sphi 0, %s43
    %s46 = sphi 0, %s45
    %s60 = sphi 0, %s46
    %s64 = sphi 0, %s64
    %s66 = sphi 0, %s64
    %s67 = sphi 0, %s66
    %s81 = sphi 0, %s67
    %s87 = sphi 0, %s89
    %s90 = sphi 0, %s87
    %s91 = sphi 0, %s90
    %s107 = sphi 0, %s91
  $region4: #{mlp_forward.5} parent=0 // loop_header_branch
    %12 = sbr.rel (%p10) target = $region8
  $region5: #{mlp_forward.5} parent=0 // loop_body
    %s14 = ssub.s32 %s9, 1
    %s15 = ssub.s32 %s9, 2
    %s16 = sadd.s32 %s9, 1
    %s17 = ssub.s32 %s9, %s16
    %p18 = scmp.eq.s32.totalorder %s17, 0
    %s20 = sadd.s32 %s19, 1
    %s21 = scalar_select %p18, %s19, %s20
    %p24 = pneg %p18
    %p25 = scmp.eq.s32.totalorder %s9, 1
    %p26 = por %p24, %p25
    %p27 = scmp.ne.s32.totalorder %s19, %s22
    %p28 = scmp.eq.s32.totalorder %s9, 0
    %p29 = por %p27, %p28
    %p30 = scmp.ne.s32.totalorder %s19, %s22
    %p31 = scmp.eq.s32.totalorder %s14, 1
    %p32 = por %p30, %p31
    %p33 = scmp.ne.s32.totalorder %s22, %s23
    %p34 = scmp.eq.s32.totalorder %s14, 0
    %p35 = por %p33, %p34
    %p36 = scmp.ne.s32.totalorder %s22, %s23
    %p37 = scmp.eq.s32.totalorder %s15, 1
    %p38 = por %p36, %p37
    %p40 = scmp.ne.s32.totalorder %s23, %s39
    %p41 = scmp.eq.s32.totalorder %s15, 0
    %p42 = por %p40, %p41
    %s44 = sadd.s32 %s43, 1
    %p47 = scmp.eq.s32.totalorder %s9, 1
    %p48 = scmp.ne.s32.totalorder %s43, %s45
    %p49 = scmp.eq.s32.totalorder %s9, 0
    %p50 = por %p48, %p49
    %p51 = scmp.ne.s32.totalorder %s43, %s45
    %p52 = scmp.eq.s32.totalorder %s14, 1
    %p53 = por %p51, %p52
    %p54 = scmp.ne.s32.totalorder %s45, %s46
    %p55 = scmp.eq.s32.totalorder %s14, 0
    %p56 = por %p54, %p55
    %p57 = scmp.ne.s32.totalorder %s45, %s46
    %p58 = scmp.eq.s32.totalorder %s15, 1
    %p59 = por %p57, %p58
    %p61 = scmp.ne.s32.totalorder %s46, %s60
    %p62 = scmp.eq.s32.totalorder %s15, 0
    %p63 = por %p61, %p62
    %s65 = sadd.s32 %s64, 1
    %p68 = scmp.eq.s32.totalorder %s9, 1
    %p69 = scmp.ne.s32.totalorder %s64, %s66
    %p70 = scmp.eq.s32.totalorder %s9, 0
    %p71 = por %p69, %p70
    %p72 = scmp.ne.s32.totalorder %s64, %s66
    %p73 = scmp.eq.s32.totalorder %s14, 1
    %p74 = por %p72, %p73
    %p75 = scmp.ne.s32.totalorder %s66, %s67
    %p76 = scmp.eq.s32.totalorder %s14, 0
    %p77 = por %p75, %p76
    %p78 = scmp.ne.s32.totalorder %s66, %s67
    %p79 = scmp.eq.s32.totalorder %s15, 1
    %p80 = por %p78, %p79
    %p82 = scmp.ne.s32.totalorder %s67, %s81
    %p83 = scmp.eq.s32.totalorder %s15, 0
    %p84 = por %p82, %p83
    %s85 = ssub.s32 %s9, %s16
    %p86 = scmp.eq.s32.totalorder %s85, 0
    %s88 = sadd.s32 %s87, 1
    %s89 = scalar_select %p86, %s87, %s88
    %p92 = pneg %p86
    %p93 = scmp.eq.s32.totalorder %s9, 1
    %p94 = por %p92, %p93
    %p95 = scmp.ne.s32.totalorder %s87, %s90
    %p96 = scmp.eq.s32.totalorder %s9, 0
    %p97 = por %p95, %p96
    %p98 = scmp.ne.s32.totalorder %s87, %s90
    %p99 = scmp.eq.s32.totalorder %s14, 1
    %p100 = por %p98, %p99
    %p101 = scmp.ne.s32.totalorder %s90, %s91
    %p102 = scmp.eq.s32.totalorder %s14, 0
    %p103 = por %p101, %p102
    %p104 = scmp.ne.s32.totalorder %s90, %s91
    %p105 = scmp.eq.s32.totalorder %s15, 1
    %p106 = por %p104, %p105
    %p108 = scmp.ne.s32.totalorder %s91, %s107
    %p109 = scmp.eq.s32.totalorder %s15, 0
    %p110 = por %p108, %p109
    %p111 = scmp.le.s32.totalorder 1, %s9
    %p112 = scmp.lt.s32.totalorder %s9, 3
    %p113 = pnand %p111, %p112
    %p114 = pneg %p113
    // Predicated region
    $region9: #{mlp_forward.5} parent=5 // pred_check
      _
    $region10: #{mlp_forward.5} parent=5 // pred_check_branch
      %116 = sbr.rel (%p113) target = $region12
    $region11: #{mlp_forward.5} parent=5 // pred_region
      %s117 = ssub.s32 %s9, 1
      // Predicated region
      $region13: #{mlp_forward.5} parent=11 // pred_check
        %p118 = pneg %p56
      $region14: #{mlp_forward.5} parent=11 // pred_check_branch
        %120 = sbr.rel (%p118) target = $region16
      $region15: #{mlp_forward.5} parent=11 // pred_region
        _
      $region16: #{mlp_forward.5} parent=11 // pred_fallthru
        _
      // Predicated region
      $region17: #{mlp_forward.5} parent=11 // pred_check
        %p121 = pneg %p77
      $region18: #{mlp_forward.5} parent=11 // pred_check_branch
        %123 = sbr.rel (%p121) target = $region20
      $region19: #{mlp_forward.5} parent=11 // pred_region
        _
      $region20: #{mlp_forward.5} parent=11 // pred_fallthru
        _
    $region12: #{mlp_forward.5} parent=5 // pred_fallthru
      _
    %p124 = scmp.lt.s32.totalorder %s9, 2
    // Predicated region
    $region21: #{mlp_forward.5} parent=5 // pred_check
      %p125 = pneg %p124
    $region22: #{mlp_forward.5} parent=5 // pred_check_branch
      %127 = sbr.rel (%p125) target = $region24
    $region23: #{mlp_forward.5} parent=5 // pred_region
      // Predicated region
      $region25: #{mlp_forward.5} parent=23 // pred_check
        %p128 = pneg %p29
      $region26: #{mlp_forward.5} parent=23 // pred_check_branch
        %130 = sbr.rel (%p128) target = $region28
      $region27: #{mlp_forward.5} parent=23 // pred_region
        %p131 = scmp.lt.s32.totalorder %s9, 1
        %s132 = scalar_select %p131, %s9, 1
        %s133 = smul.addr %s132, 32
        %s134 = smul.addr %s133, 8
        %s135 = scalar_lea.vmem %s0, %s134
      $region28: #{mlp_forward.5} parent=23 // pred_fallthru
        _
    $region24: #{mlp_forward.5} parent=5 // pred_fallthru
      _
    %p136 = scmp.le.s32.totalorder 1, %s9
    %p137 = scmp.lt.s32.totalorder %s9, 3
    %p138 = pnand %p136, %p137
    %p139 = pneg %p138
    // Predicated region
    $region29: #{mlp_forward.5} parent=5 // pred_check
      _
    $region30: #{mlp_forward.5} parent=5 // pred_check_branch
      %141 = sbr.rel (%p138) target = $region32
    $region31: #{mlp_forward.5} parent=5 // pred_region
      %s142 = ssub.s32 %s9, 1
      %p143 = scmp.lt.s32.totalorder %s14, 1
      %s144 = scalar_select %p143, %s14, 1
      %s145 = smul.addr %s144, 32
      %s146 = smul.addr %s145, 8
      %s147 = scalar_lea.vmem %s0, %s146
      %p148 = pneg %p35
      %p149 = pneg %p32
      %p150 = pneg %p56
      %p151 = pneg %p53
      %p152 = pneg %p77
      %p153 = pneg %p74
      %p154 = pneg %p103
      %p155 = pneg %p100
      %p156 = scmp.lt.s32.totalorder %s14, 1
      %s157 = scalar_select %p156, %s14, 1
      %s158 = smul.addr %s157, 32
      %s159 = smul.addr %s158, 8
      %s160 = scalar_lea.vmem %s3, %s159
      %p161 = scmp.lt.s32.totalorder %s14, 1
      %s162 = scalar_select %p161, %s14, 1
      %s163 = smul.addr %s162, 32
      %s164 = smul.addr %s163, 8
      %s165 = scalar_lea.vmem %s0, %s164
      %p166 = scmp.lt.s32.totalorder %s14, 1
      %s167 = scalar_select %p166, %s14, 1
      %s168 = smul.addr %s167, 32
      %s169 = smul.addr %s168, 8
      %s170 = scalar_lea.vmem %s3, %s169
      %v171 = vld [vmem:[%s165] sm:$0xff]
      %v172 = vld [vmem:[%s165 + $0x8] sm:$0xff]
      %v173 = vld [vmem:[%s165 + $0x10] sm:$0xff]
      %v174 = vld [vmem:[%s165 + $0x18] sm:$0xff]
      %v175 = vld [vmem:[%s165 + $0x20] sm:$0xff]
      %v176 = vld [vmem:[%s165 + $0x28] sm:$0xff]
      %v177 = vld [vmem:[%s165 + $0x30] sm:$0xff]
      %v178 = vld [vmem:[%s165 + $0x38] sm:$0xff]
      %v179 = vld [vmem:[%s165 + $0x40] sm:$0xff]
      %v180 = vld [vmem:[%s165 + $0x48] sm:$0xff]
      %v181 = vld [vmem:[%s165 + $0x50] sm:$0xff]
      %v182 = vld [vmem:[%s165 + $0x58] sm:$0xff]
      %v183 = vld [vmem:[%s165 + $0x60] sm:$0xff]
      %v184 = vld [vmem:[%s165 + $0x68] sm:$0xff]
      %v185 = vld [vmem:[%s165 + $0x70] sm:$0xff]
      %v186 = vld [vmem:[%s165 + $0x78] sm:$0xff]
      %v187 = vld [vmem:[%s165 + $0x80] sm:$0xff]
      %v188 = vld [vmem:[%s165 + $0x88] sm:$0xff]
      %v189 = vld [vmem:[%s165 + $0x90] sm:$0xff]
      %v190 = vld [vmem:[%s165 + $0x98] sm:$0xff]
      %v191 = vld [vmem:[%s165 + $0xa0] sm:$0xff]
      %v192 = vld [vmem:[%s165 + $0xa8] sm:$0xff]
      %v193 = vld [vmem:[%s165 + $0xb0] sm:$0xff]
      %v194 = vld [vmem:[%s165 + $0xb8] sm:$0xff]
      %v195 = vld [vmem:[%s165 + $0xc0] sm:$0xff]
      %v196 = vld [vmem:[%s165 + $0xc8] sm:$0xff]
      %v197 = vld [vmem:[%s165 + $0xd0] sm:$0xff]
      %v198 = vld [vmem:[%s165 + $0xd8] sm:$0xff]
      %v199 = vld [vmem:[%s165 + $0xe0] sm:$0xff]
      %v200 = vld [vmem:[%s165 + $0xe8] sm:$0xff]
      %v201 = vld [vmem:[%s165 + $0xf0] sm:$0xff]
      %v202 = vld [vmem:[%s165 + $0xf8] sm:$0xff]
      %v203 = vld [vmem:[%s1] sm:$0x1]
      %v205 = vlaneseq
      %v206 = vshrl.u32 %v205, 7
      %v207 = vsub.s32 0, %v206
      %v208 = vrot.slane %v203, %v207
      %v210 = vmul.f32 %v171, %v208
      %v211 = vmul.f32 %v172, %v208
      %v212 = vmul.f32 %v173, %v208
      %v213 = vmul.f32 %v174, %v208
      %v214 = vmul.f32 %v175, %v208
      %v215 = vmul.f32 %v176, %v208
      %v216 = vmul.f32 %v177, %v208
      %v217 = vmul.f32 %v178, %v208
      %v218 = vmul.f32 %v179, %v208
      %v219 = vmul.f32 %v180, %v208
      %v220 = vmul.f32 %v181, %v208
      %v221 = vmul.f32 %v182, %v208
      %v222 = vmul.f32 %v183, %v208
      %v223 = vmul.f32 %v184, %v208
      %v224 = vmul.f32 %v185, %v208
      %v225 = vmul.f32 %v186, %v208
      %v226 = vmul.f32 %v187, %v208
      %v227 = vmul.f32 %v188, %v208
      %v228 = vmul.f32 %v189, %v208
      %v229 = vmul.f32 %v190, %v208
      %v230 = vmul.f32 %v191, %v208
      %v231 = vmul.f32 %v192, %v208
      %v232 = vmul.f32 %v193, %v208
      %v233 = vmul.f32 %v194, %v208
      %v234 = vmul.f32 %v195, %v208
      %v235 = vmul.f32 %v196, %v208
      %v236 = vmul.f32 %v197, %v208
      %v237 = vmul.f32 %v198, %v208
      %v238 = vmul.f32 %v199, %v208
      %v239 = vmul.f32 %v200, %v208
      %v240 = vmul.f32 %v201, %v208
      %v241 = vmul.f32 %v202, %v208
      %v242 = vld [vmem:[%s2] sm:$0x1]
      %v244 = vlaneseq
      %v245 = vshrl.u32 %v244, 7
      %v246 = vsub.s32 0, %v245
      %v247 = vrot.slane %v242, %v246
      %v249 = vadd.f32 %v210, %v247
      %v250 = vadd.f32 %v211, %v247
      %v251 = vadd.f32 %v212, %v247
      %v252 = vadd.f32 %v213, %v247
      %v253 = vadd.f32 %v214, %v247
      %v254 = vadd.f32 %v215, %v247
      %v255 = vadd.f32 %v216, %v247
      %v256 = vadd.f32 %v217, %v247
      %v257 = vadd.f32 %v218, %v247
      %v258 = vadd.f32 %v219, %v247
      %v259 = vadd.f32 %v220, %v247
      %v260 = vadd.f32 %v221, %v247
      %v261 = vadd.f32 %v222, %v247
      %v262 = vadd.f32 %v223, %v247
      %v263 = vadd.f32 %v224, %v247
      %v264 = vadd.f32 %v225, %v247
      %v265 = vadd.f32 %v226, %v247
      %v266 = vadd.f32 %v227, %v247
      %v267 = vadd.f32 %v228, %v247
      %v268 = vadd.f32 %v229, %v247
      %v269 = vadd.f32 %v230, %v247
      %v270 = vadd.f32 %v231, %v247
      %v271 = vadd.f32 %v232, %v247
      %v272 = vadd.f32 %v233, %v247
      %v273 = vadd.f32 %v234, %v247
      %v274 = vadd.f32 %v235, %v247
      %v275 = vadd.f32 %v236, %v247
      %v276 = vadd.f32 %v237, %v247
      %v277 = vadd.f32 %v238, %v247
      %v278 = vadd.f32 %v239, %v247
      %v279 = vadd.f32 %v240, %v247
      %v280 = vadd.f32 %v241, %v247
      %vm281 = vcmask 31744
      %282 = vst.msk [vmem:[%s170] sm:$0xff] %vm281, %v249
      %283 = vst.msk [vmem:[%s170 + $0x8] sm:$0xff] %vm281, %v250
      %284 = vst.msk [vmem:[%s170 + $0x10] sm:$0xff] %vm281, %v251
      %285 = vst.msk [vmem:[%s170 + $0x18] sm:$0xff] %vm281, %v252
      %286 = vst.msk [vmem:[%s170 + $0x20] sm:$0xff] %vm281, %v253
      %287 = vst.msk [vmem:[%s170 + $0x28] sm:$0xff] %vm281, %v254
      %288 = vst.msk [vmem:[%s170 + $0x30] sm:$0xff] %vm281, %v255
      %289 = vst.msk [vmem:[%s170 + $0x38] sm:$0xff] %vm281, %v256
      %290 = vst.msk [vmem:[%s170 + $0x40] sm:$0xff] %vm281, %v257
      %291 = vst.msk [vmem:[%s170 + $0x48] sm:$0xff] %vm281, %v258
      %292 = vst.msk [vmem:[%s170 + $0x50] sm:$0xff] %vm281, %v259
      %293 = vst.msk [vmem:[%s170 + $0x58] sm:$0xff] %vm281, %v260
      %294 = vst.msk [vmem:[%s170 + $0x60] sm:$0xff] %vm281, %v261
      %295 = vst.msk [vmem:[%s170 + $0x68] sm:$0xff] %vm281, %v262
      %296 = vst.msk [vmem:[%s170 + $0x70] sm:$0xff] %vm281, %v263
      %297 = vst.msk [vmem:[%s170 + $0x78] sm:$0xff] %vm281, %v264
      %298 = vst.msk [vmem:[%s170 + $0x80] sm:$0xff] %vm281, %v265
      %299 = vst.msk [vmem:[%s170 + $0x88] sm:$0xff] %vm281, %v266
      %300 = vst.msk [vmem:[%s170 + $0x90] sm:$0xff] %vm281, %v267
      %301 = vst.msk [vmem:[%s170 + $0x98] sm:$0xff] %vm281, %v268
      %302 = vst.msk [vmem:[%s170 + $0xa0] sm:$0xff] %vm281, %v269
      %303 = vst.msk [vmem:[%s170 + $0xa8] sm:$0xff] %vm281, %v270
      %304 = vst.msk [vmem:[%s170 + $0xb0] sm:$0xff] %vm281, %v271
      %305 = vst.msk [vmem:[%s170 + $0xb8] sm:$0xff] %vm281, %v272
      %306 = vst.msk [vmem:[%s170 + $0xc0] sm:$0xff] %vm281, %v273
      %307 = vst.msk [vmem:[%s170 + $0xc8] sm:$0xff] %vm281, %v274
      %308 = vst.msk [vmem:[%s170 + $0xd0] sm:$0xff] %vm281, %v275
      %309 = vst.msk [vmem:[%s170 + $0xd8] sm:$0xff] %vm281, %v276
      %310 = vst.msk [vmem:[%s170 + $0xe0] sm:$0xff] %vm281, %v277
      %311 = vst.msk [vmem:[%s170 + $0xe8] sm:$0xff] %vm281, %v278
      %312 = vst.msk [vmem:[%s170 + $0xf0] sm:$0xff] %vm281, %v279
      %313 = vst.msk [vmem:[%s170 + $0xf8] sm:$0xff] %vm281, %v280
      %p314 = scmp.lt.s32.totalorder %s14, 1
      %s315 = scalar_select %p314, %s14, 1
      %s316 = smul.addr %s315, 32
      %s317 = smul.addr %s316, 8
      %s318 = scalar_lea.vmem %s3, %s317
      // Predicated region
      $region33: #{mlp_forward.5} parent=31 // pred_check
        %p319 = pneg %p100
      $region34: #{mlp_forward.5} parent=31 // pred_check_branch
        %321 = sbr.rel (%p319) target = $region36
      $region35: #{mlp_forward.5} parent=31 // pred_region
        _
      $region36: #{mlp_forward.5} parent=31 // pred_fallthru
        _
    $region32: #{mlp_forward.5} parent=5 // pred_fallthru
      _
    %p322 = scmp.le.s32.totalorder 2, %s9
    // Predicated region
    $region37: #{mlp_forward.5} parent=5 // pred_check
      %p323 = pneg %p322
    $region38: #{mlp_forward.5} parent=5 // pred_check_branch
      %325 = sbr.rel (%p323) target = $region40
    $region39: #{mlp_forward.5} parent=5 // pred_region
      %s326 = ssub.s32 %s9, 2
      // Predicated region
      $region41: #{mlp_forward.5} parent=39 // pred_check
        %p327 = pneg %p106
      $region42: #{mlp_forward.5} parent=39 // pred_check_branch
        %329 = sbr.rel (%p327) target = $region44
      $region43: #{mlp_forward.5} parent=39 // pred_region
        %p330 = scmp.lt.s32.totalorder %s15, 1
        %s331 = scalar_select %p330, %s15, 1
        %s332 = smul.addr %s331, 32
        %s333 = smul.addr %s332, 8
        %s334 = scalar_lea.vmem %s3, %s333
      $region44: #{mlp_forward.5} parent=39 // pred_fallthru
        _
    $region40: #{mlp_forward.5} parent=5 // pred_fallthru
      _
  $region6: #{mlp_forward.5} parent=0 // loop_footer
    %s13 = sadd.s32 1, %s9
  $region7: #{mlp_forward.5} parent=0 // loop_footer_branch
    %8 = sbr.rel target = $region3
  $region8: #{mlp_forward.5} parent=0 // loop_exit
    _

// kernel: mlp_forward.3
$region0: #{mlp_forward.3}
  #allocation0 [shape = 'u32[]', space=smem, size = 0x4, offset = 0x4, fixed_abs, tag = 'smem constant byte address 0x4 - core index']
  #allocation1 [shape = 'u32[144,128]{1,0:T(1,128)}', space=vmem, size = 0x12000, scoped, tag = 'internal scratch']
  %s0 = inlined_call_operand.vmem [shape: f32[2,16,16,4], index: 0, kind: input, shape index: {}]
  %s1 = inlined_call_operand.vmem [shape: f32[4,32], index: 1, kind: input, shape index: {}]
  %s2 = inlined_call_operand.vmem [shape: f32[2,16,16,32], index: 2, kind: output, shape index: {0}]
  %s3 = inlined_call_operand.vmem [shape: f32[2,1,32], index: 3, kind: output, shape index: {1}]
  %s4 = inlined_call_operand.vmem [shape: f32[2,1,32], index: 4, kind: output, shape index: {2}]
  %5 = xla_tuple %s2, %s3, %s4
  %s6 = sld [smem:[#allocation0]]
  $region57: #{mlp_forward.3} parent=0
    _
  %s8 = ssub.s32 1, %s6
  %s9 = scalar_select 0, %s8, %s6
  loop: start=0, step=1, limit=4
  $region2: #{mlp_forward.3} parent=0 // loop_pre_header
    _
  $region3: #{mlp_forward.3} parent=0 // loop_header
    %s11 = sphi 0, %s15
    %p12 = scmp.ge.s32.totalorder %s11, 4
    %s21 = sphi 0, %s23
    %s24 = sphi 0, %s21
    %s25 = sphi 0, %s24
    %s41 = sphi 0, %s25
    %s45 = sphi 0, %s45
    %s47 = sphi 0, %s45
    %s48 = sphi 0, %s47
    %s62 = sphi 0, %s48
    %s68 = sphi 0, %s70
    %s71 = sphi 0, %s68
    %s72 = sphi 0, %s71
    %s88 = sphi 0, %s72
    %s94 = sphi 0, %s96
    %s97 = sphi 0, %s94
    %s98 = sphi 0, %s97
    %s114 = sphi 0, %s98
    %s120 = sphi 0, %s122
    %s123 = sphi 0, %s120
    %s124 = sphi 0, %s123
    %s140 = sphi 0, %s124
  $region4: #{mlp_forward.3} parent=0 // loop_header_branch
    %14 = sbr.rel (%p12) target = $region8
  $region5: #{mlp_forward.3} parent=0 // loop_body
    %s16 = ssub.s32 %s11, 1
    %s17 = ssub.s32 %s11, 2
    %s18 = sadd.s32 %s11, 1
    %s19 = ssub.s32 %s11, %s18
    %p20 = scmp.eq.s32.totalorder %s19, 0
    %s22 = sadd.s32 %s21, 1
    %s23 = scalar_select %p20, %s21, %s22
    %p26 = pneg %p20
    %p27 = scmp.eq.s32.totalorder %s11, 1
    %p28 = por %p26, %p27
    %p29 = scmp.ne.s32.totalorder %s21, %s24
    %p30 = scmp.eq.s32.totalorder %s11, 0
    %p31 = por %p29, %p30
    %p32 = scmp.ne.s32.totalorder %s21, %s24
    %p33 = scmp.eq.s32.totalorder %s16, 1
    %p34 = por %p32, %p33
    %p35 = scmp.ne.s32.totalorder %s24, %s25
    %p36 = scmp.eq.s32.totalorder %s16, 0
    %p37 = por %p35, %p36
    %p38 = scmp.ne.s32.totalorder %s24, %s25
    %p39 = scmp.eq.s32.totalorder %s17, 1
    %p40 = por %p38, %p39
    %p42 = scmp.ne.s32.totalorder %s25, %s41
    %p43 = scmp.eq.s32.totalorder %s17, 0
    %p44 = por %p42, %p43
    %s46 = sadd.s32 %s45, 1
    %p49 = scmp.eq.s32.totalorder %s11, 1
    %p50 = scmp.ne.s32.totalorder %s45, %s47
    %p51 = scmp.eq.s32.totalorder %s11, 0
    %p52 = por %p50, %p51
    %p53 = scmp.ne.s32.totalorder %s45, %s47
    %p54 = scmp.eq.s32.totalorder %s16, 1
    %p55 = por %p53, %p54
    %p56 = scmp.ne.s32.totalorder %s47, %s48
    %p57 = scmp.eq.s32.totalorder %s16, 0
    %p58 = por %p56, %p57
    %p59 = scmp.ne.s32.totalorder %s47, %s48
    %p60 = scmp.eq.s32.totalorder %s17, 1
    %p61 = por %p59, %p60
    %p63 = scmp.ne.s32.totalorder %s48, %s62
    %p64 = scmp.eq.s32.totalorder %s17, 0
    %p65 = por %p63, %p64
    %s66 = ssub.s32 %s11, %s18
    %p67 = scmp.eq.s32.totalorder %s66, 0
    %s69 = sadd.s32 %s68, 1
    %s70 = scalar_select %p67, %s68, %s69
    %p73 = pneg %p67
    %p74 = scmp.eq.s32.totalorder %s11, 1
    %p75 = por %p73, %p74
    %p76 = scmp.ne.s32.totalorder %s68, %s71
    %p77 = scmp.eq.s32.totalorder %s11, 0
    %p78 = por %p76, %p77
    %p79 = scmp.ne.s32.totalorder %s68, %s71
    %p80 = scmp.eq.s32.totalorder %s16, 1
    %p81 = por %p79, %p80
    %p82 = scmp.ne.s32.totalorder %s71, %s72
    %p83 = scmp.eq.s32.totalorder %s16, 0
    %p84 = por %p82, %p83
    %p85 = scmp.ne.s32.totalorder %s71, %s72
    %p86 = scmp.eq.s32.totalorder %s17, 1
    %p87 = por %p85, %p86
    %p89 = scmp.ne.s32.totalorder %s72, %s88
    %p90 = scmp.eq.s32.totalorder %s17, 0
    %p91 = por %p89, %p90
    %s92 = ssub.s32 %s11, %s18
    %p93 = scmp.eq.s32.totalorder %s92, 0
    %s95 = sadd.s32 %s94, 1
    %s96 = scalar_select %p93, %s94, %s95
    %p99 = pneg %p93
    %p100 = scmp.eq.s32.totalorder %s11, 1
    %p101 = por %p99, %p100
    %p102 = scmp.ne.s32.totalorder %s94, %s97
    %p103 = scmp.eq.s32.totalorder %s11, 0
    %p104 = por %p102, %p103
    %p105 = scmp.ne.s32.totalorder %s94, %s97
    %p106 = scmp.eq.s32.totalorder %s16, 1
    %p107 = por %p105, %p106
    %p108 = scmp.ne.s32.totalorder %s97, %s98
    %p109 = scmp.eq.s32.totalorder %s16, 0
    %p110 = por %p108, %p109
    %p111 = scmp.ne.s32.totalorder %s97, %s98
    %p112 = scmp.eq.s32.totalorder %s17, 1
    %p113 = por %p111, %p112
    %p115 = scmp.ne.s32.totalorder %s98, %s114
    %p116 = scmp.eq.s32.totalorder %s17, 0
    %p117 = por %p115, %p116
    %s118 = ssub.s32 %s11, %s18
    %p119 = scmp.eq.s32.totalorder %s118, 0
    %s121 = sadd.s32 %s120, 1
    %s122 = scalar_select %p119, %s120, %s121
    %p125 = pneg %p119
    %p126 = scmp.eq.s32.totalorder %s11, 1
    %p127 = por %p125, %p126
    %p128 = scmp.ne.s32.totalorder %s120, %s123
    %p129 = scmp.eq.s32.totalorder %s11, 0
    %p130 = por %p128, %p129
    %p131 = scmp.ne.s32.totalorder %s120, %s123
    %p132 = scmp.eq.s32.totalorder %s16, 1
    %p133 = por %p131, %p132
    %p134 = scmp.ne.s32.totalorder %s123, %s124
    %p135 = scmp.eq.s32.totalorder %s16, 0
    %p136 = por %p134, %p135
    %p137 = scmp.ne.s32.totalorder %s123, %s124
    %p138 = scmp.eq.s32.totalorder %s17, 1
    %p139 = por %p137, %p138
    %p141 = scmp.ne.s32.totalorder %s124, %s140
    %p142 = scmp.eq.s32.totalorder %s17, 0
    %p143 = por %p141, %p142
    %p144 = scmp.le.s32.totalorder 1, %s11
    %p145 = scmp.lt.s32.totalorder %s11, 3
    %p146 = pnand %p144, %p145
    %p147 = pneg %p146
    // Predicated region
    $region9: #{mlp_forward.3} parent=5 // pred_check
      _
    $region10: #{mlp_forward.3} parent=5 // pred_check_branch
      %149 = sbr.rel (%p146) target = $region12
    $region11: #{mlp_forward.3} parent=5 // pred_region
      %s150 = ssub.s32 %s11, 1
      // Predicated region
      $region13: #{mlp_forward.3} parent=11 // pred_check
        %p151 = pneg %p58
      $region14: #{mlp_forward.3} parent=11 // pred_check_branch
        %153 = sbr.rel (%p151) target = $region16
      $region15: #{mlp_forward.3} parent=11 // pred_region
        _
      $region16: #{mlp_forward.3} parent=11 // pred_fallthru
        _
    $region12: #{mlp_forward.3} parent=5 // pred_fallthru
      _
    %p154 = scmp.lt.s32.totalorder %s11, 2
    // Predicated region
    $region17: #{mlp_forward.3} parent=5 // pred_check
      %p155 = pneg %p154
    $region18: #{mlp_forward.3} parent=5 // pred_check_branch
      %157 = sbr.rel (%p155) target = $region20
    $region19: #{mlp_forward.3} parent=5 // pred_region
      // Predicated region
      $region21: #{mlp_forward.3} parent=19 // pred_check
        %p158 = pneg %p31
      $region22: #{mlp_forward.3} parent=19 // pred_check_branch
        %160 = sbr.rel (%p158) target = $region24
      $region23: #{mlp_forward.3} parent=19 // pred_region
        %p161 = scmp.lt.s32.totalorder %s11, 1
        %s162 = scalar_select %p161, %s11, 1
        %s163 = smul.addr %s162, 32
        %s164 = smul.addr %s163, 8
        %s165 = scalar_lea.vmem %s0, %s164
      $region24: #{mlp_forward.3} parent=19 // pred_fallthru
        _
    $region20: #{mlp_forward.3} parent=5 // pred_fallthru
      _
    %p166 = scmp.le.s32.totalorder 1, %s11
    %p167 = scmp.lt.s32.totalorder %s11, 3
    %p168 = pnand %p166, %p167
    %p169 = pneg %p168
    // Predicated region
    $region25: #{mlp_forward.3} parent=5 // pred_check
      _
    $region26: #{mlp_forward.3} parent=5 // pred_check_branch
      %171 = sbr.rel (%p168) target = $region28
    $region27: #{mlp_forward.3} parent=5 // pred_region
      %s172 = ssub.s32 %s11, 1
      %p173 = scmp.lt.s32.totalorder %s16, 1
      %s174 = scalar_select %p173, %s16, 1
      %s175 = smul.addr %s174, 32
      %s176 = smul.addr %s175, 8
      %s177 = scalar_lea.vmem %s0, %s176
      %p178 = pneg %p37
      %p179 = pneg %p34
      %p180 = pneg %p58
      %p181 = pneg %p55
      %p182 = pneg %p84
      %p183 = pneg %p81
      %p184 = scmp.lt.s32.totalorder %s16, 1
      %s185 = scalar_select %p184, %s16, 1
      %s186 = smul.addr %s185, 32
      %s187 = smul.addr %s186, 8
      %s188 = scalar_lea.vmem %s2, %s187
      %p189 = pneg %p110
      %p190 = pneg %p107
      %p191 = scmp.lt.s32.totalorder %s16, 1
      %s192 = scalar_select %p191, %s16, 1
      %s193 = scalar_lea.vmem %s3, %s192
      %p194 = pneg %p136
      %p195 = pneg %p133
      %p196 = scmp.lt.s32.totalorder %s16, 1
      %s197 = scalar_select %p196, %s16, 1
      %s198 = scalar_lea.vmem %s4, %s197
      %p199 = scmp.lt.s32.totalorder %s16, 1
      %s200 = scalar_select %p199, %s16, 1
      %s201 = smul.addr %s200, 32
      %s202 = smul.addr %s201, 8
      %s203 = scalar_lea.vmem %s0, %s202
      %p204 = scmp.lt.s32.totalorder %s16, 1
      %s205 = scalar_select %p204, %s16, 1
      %s206 = smul.addr %s205, 32
      %s207 = smul.addr %s206, 8
      %s208 = scalar_lea.vmem %s2, %s207
      %p209 = scmp.lt.s32.totalorder %s16, 1
      %s210 = scalar_select %p209, %s16, 1
      %s211 = scalar_lea.vmem %s3, %s210
      %p212 = scmp.lt.s32.totalorder %s16, 1
      %s213 = scalar_select %p212, %s16, 1
      %s214 = scalar_lea.vmem %s4, %s213
      %v215 = vld [vmem:[%s203] sm:$0xff]
      %v216 = vld [vmem:[%s203 + $0x8] sm:$0xff]
      %v217 = vld [vmem:[%s203 + $0x10] sm:$0xff]
      %v218 = vld [vmem:[%s203 + $0x18] sm:$0xff]
      %v219 = vld [vmem:[%s203 + $0x20] sm:$0xff]
      %v220 = vld [vmem:[%s203 + $0x28] sm:$0xff]
      %v221 = vld [vmem:[%s203 + $0x30] sm:$0xff]
      %v222 = vld [vmem:[%s203 + $0x38] sm:$0xff]
      %v223 = vld [vmem:[%s203 + $0x40] sm:$0xff]
      %v224 = vld [vmem:[%s203 + $0x48] sm:$0xff]
      %v225 = vld [vmem:[%s203 + $0x50] sm:$0xff]
      %v226 = vld [vmem:[%s203 + $0x58] sm:$0xff]
      %v227 = vld [vmem:[%s203 + $0x60] sm:$0xff]
      %v228 = vld [vmem:[%s203 + $0x68] sm:$0xff]
      %v229 = vld [vmem:[%s203 + $0x70] sm:$0xff]
      %v230 = vld [vmem:[%s203 + $0x78] sm:$0xff]
      %v231 = vld [vmem:[%s203 + $0x80] sm:$0xff]
      %v232 = vld [vmem:[%s203 + $0x88] sm:$0xff]
      %v233 = vld [vmem:[%s203 + $0x90] sm:$0xff]
      %v234 = vld [vmem:[%s203 + $0x98] sm:$0xff]
      %v235 = vld [vmem:[%s203 + $0xa0] sm:$0xff]
      %v236 = vld [vmem:[%s203 + $0xa8] sm:$0xff]
      %v237 = vld [vmem:[%s203 + $0xb0] sm:$0xff]
      %v238 = vld [vmem:[%s203 + $0xb8] sm:$0xff]
      %v239 = vld [vmem:[%s203 + $0xc0] sm:$0xff]
      %v240 = vld [vmem:[%s203 + $0xc8] sm:$0xff]
      %v241 = vld [vmem:[%s203 + $0xd0] sm:$0xff]
      %v242 = vld [vmem:[%s203 + $0xd8] sm:$0xff]
      %v243 = vld [vmem:[%s203 + $0xe0] sm:$0xff]
      %v244 = vld [vmem:[%s203 + $0xe8] sm:$0xff]
      %v245 = vld [vmem:[%s203 + $0xf0] sm:$0xff]
      %v246 = vld [vmem:[%s203 + $0xf8] sm:$0xff]
      %v247 = vld [vmem:[%s1] sm:$0xf]
      %vm248 = vcmask 31744
      %v250 = vsel %vm248, %v215, 0
      %v253 = vsel %vm248, %v216, 0
      %v256 = vsel %vm248, %v217, 0
      %v259 = vsel %vm248, %v218, 0
      %v262 = vsel %vm248, %v219, 0
      %v265 = vsel %vm248, %v220, 0
      %v268 = vsel %vm248, %v221, 0
      %v271 = vsel %vm248, %v222, 0
      %v274 = vsel %vm248, %v223, 0
      %v277 = vsel %vm248, %v224, 0
      %v280 = vsel %vm248, %v225, 0
      %v283 = vsel %vm248, %v226, 0
      %v286 = vsel %vm248, %v227, 0
      %v289 = vsel %vm248, %v228, 0
      %v292 = vsel %vm248, %v229, 0
      %v295 = vsel %vm248, %v230, 0
      %v298 = vsel %vm248, %v231, 0
      %v301 = vsel %vm248, %v232, 0
      %v304 = vsel %vm248, %v233, 0
      %v307 = vsel %vm248, %v234, 0
      %v310 = vsel %vm248, %v235, 0
      %v313 = vsel %vm248, %v236, 0
      %v316 = vsel %vm248, %v237, 0
      %v319 = vsel %vm248, %v238, 0
      %v322 = vsel %vm248, %v239, 0
      %v325 = vsel %vm248, %v240, 0
      %v328 = vsel %vm248, %v241, 0
      %v331 = vsel %vm248, %v242, 0
      %v334 = vsel %vm248, %v243, 0
      %v337 = vsel %vm248, %v244, 0
      %v340 = vsel %vm248, %v245, 0
      %v343 = vsel %vm248, %v246, 0
      %vm345 = vcmask 1043456
      %v347 = vsel %vm345, %v247, 0
      %349 = vmatprep.subr.mxu0 0.0
      %350 = vmatpush1.msra.mxu0 %v347
      %351 = vmatprep.subr.mxu0 0.0
      %352 = vmatpush1.msra.mxu0 0.0
      %353 = vmatprep.subr.mxu0 0.0
      %354 = vmatpush1.msra.mxu0 0.0
      %355 = vmatprep.subr.mxu0 0.0
      %356 = vmatpush1.msra.mxu0 0.0
      %357 = vmatprep.subr.mxu0 0.0
      %358 = vmatpush1.msra.mxu0 0.0
      %359 = vmatprep.subr.mxu0 0.0
      %360 = vmatpush1.msra.mxu0 0.0
      %361 = vmatprep.subr.mxu0 0.0
      %362 = vmatpush1.msra.mxu0 0.0
      %363 = vmatprep.subr.mxu0 0.0
      %364 = vmatpush1.msra.mxu0 0.0
      %365 = vmatprep.subr.mxu0 0.0
      %366 = vmatpush1.msra.mxu0 0.0
      %367 = vmatprep.subr.mxu0 0.0
      %368 = vmatpush1.msra.mxu0 0.0
      %369 = vmatprep.subr.mxu0 0.0
      %370 = vmatpush1.msra.mxu0 0.0
      %371 = vmatprep.subr.mxu0 0.0
      %372 = vmatpush1.msra.mxu0 0.0
      %373 = vmatprep.subr.mxu0 0.0
      %374 = vmatpush1.msra.mxu0 0.0
      %375 = vmatprep.subr.mxu0 0.0
      %376 = vmatpush1.msra.mxu0 0.0
      %377 = vmatprep.subr.mxu0 0.0
      %378 = vmatpush1.msra.mxu0 0.0
      %379 = vmatprep.subr.mxu0 0.0
      %380 = vmatpush1.msra.mxu0 0.0
      %381 = vmatprep.subr.mxu0 0.0
      %382 = vmatpush1.msra.mxu0 0.0
      %383 = vmatprep.subr.mxu0 0.0
      %384 = vmatpush1.msra.mxu0 0.0
      %385 = vmatprep.subr.mxu0 0.0
      %386 = vmatpush1.msra.mxu0 0.0
      %387 = vmatprep.subr.mxu0 0.0
      %388 = vmatpush1.msra.mxu0 0.0
      %389 = vmatprep.subr.mxu0 0.0
      %390 = vmatpush1.msra.mxu0 0.0
      %391 = vmatprep.subr.mxu0 0.0
      %392 = vmatpush1.msra.mxu0 0.0
      %393 = vmatprep.subr.mxu0 0.0
      %394 = vmatpush1.msra.mxu0 0.0
      %395 = vmatprep.subr.mxu0 0.0
      %396 = vmatpush1.msra.mxu0 0.0
      %397 = vmatprep.subr.mxu0 0.0
      %398 = vmatpush1.msra.mxu0 0.0
      %399 = vmatprep.subr.mxu0 0.0
      %400 = vmatpush1.msra.mxu0 0.0
      %401 = vmatprep.subr.mxu0 0.0
      %402 = vmatpush1.msra.mxu0 0.0
      %403 = vmatprep.subr.mxu0 0.0
      %404 = vmatpush1.msra.mxu0 0.0
      %405 = vmatprep.subr.mxu0 0.0
      %406 = vmatpush1.msra.mxu0 0.0
      %407 = vmatprep.subr.mxu0 0.0
      %408 = vmatpush1.msra.mxu0 0.0
      %409 = vmatprep.subr.mxu0 0.0
      %410 = vmatpush1.msra.mxu0 0.0
      %411 = vmatprep.subr.mxu0 0.0
      %412 = vmatpush1.msra.mxu0 0.0
      %413 = vmatprep.mubr.f32.mxu0 0.0
      %414 = vmatmul.mubr.f32.gmra.mrb[0].mxu0 %v250
      %v415 = vpop.f32.mrb[0].mxu0
      %v416 = vadd.f32 0.0, %v415
      %v417 = vpop.f32.mrb[0].mxu0
      %418 = vmatprep.mubr.f32.mxu0 0.0
      %419 = vmatmul.mubr.f32.gmra.mrb[0].mxu0 %v253
      %v420 = vpop.f32.mrb[0].mxu0
      %v421 = vadd.f32 0.0, %v420
      %v422 = vpop.f32.mrb[0].mxu0
      %423 = vmatprep.mubr.f32.mxu0 0.0
      %424 = vmatmul.mubr.f32.gmra.mrb[0].mxu0 %v256
      %v425 = vpop.f32.mrb[0].mxu0
      %v426 = vadd.f32 0.0, %v425
      %v427 = vpop.f32.mrb[0].mxu0
      %428 = vmatprep.mubr.f32.mxu0 0.0
      %429 = vmatmul.mubr.f32.gmra.mrb[0].mxu0 %v259
      %v430 = vpop.f32.mrb[0].mxu0
      %v431 = vadd.f32 0.0, %v430
      %v432 = vpop.f32.mrb[0].mxu0
      %433 = vmatprep.mubr.f32.mxu0 0.0
      %434 = vmatmul.mubr.f32.gmra.mrb[0].mxu0 %v262
      %v435 = vpop.f32.mrb[0].mxu0
      %v436 = vadd.f32 0.0, %v435
      %v437 = vpop.f32.mrb[0].mxu0
      %438 = vmatprep.mubr.f32.mxu0 0.0
      %439 = vmatmul.mubr.f32.gmra.mrb[0].mxu0 %v265
      %v440 = vpop.f32.mrb[0].mxu0
      %v441 = vadd.f32 0.0, %v440
      %v442 = vpop.f32.mrb[0].mxu0
      %443 = vmatprep.mubr.f32.mxu0 0.0
      %444 = vmatmul.mubr.f32.gmra.mrb[0].mxu0 %v268
      %v445 = vpop.f32.mrb[0].mxu0
      %v446 = vadd.f32 0.0, %v445
      %v447 = vpop.f32.mrb[0].mxu0
      %448 = vmatprep.mubr.f32.mxu0 0.0
      %449 = vmatmul.mubr.f32.gmra.mrb[0].mxu0 %v271
      %v450 = vpop.f32.mrb[0].mxu0
      %v451 = vadd.f32 0.0, %v450
      %v452 = vpop.f32.mrb[0].mxu0
      %453 = vmatprep.mubr.f32.mxu0 0.0
      %454 = vmatmul.mubr.f32.gmra.mrb[0].mxu0 %v274
      %v455 = vpop.f32.mrb[0].mxu0
      %v456 = vadd.f32 0.0, %v455
      %v457 = vpop.f32.mrb[0].mxu0
      %458 = vmatprep.mubr.f32.mxu0 0.0
      %459 = vmatmul.mubr.f32.gmra.mrb[0].mxu0 %v277
      %v460 = vpop.f32.mrb[0].mxu0
      %v461 = vadd.f32 0.0, %v460
      %v462 = vpop.f32.mrb[0].mxu0
      %463 = vmatprep.mubr.f32.mxu0 0.0
      %464 = vmatmul.mubr.f32.gmra.mrb[0].mxu0 %v280
      %v465 = vpop.f32.mrb[0].mxu0
      %v466 = vadd.f32 0.0, %v465
      %v467 = vpop.f32.mrb[0].mxu0
      %468 = vmatprep.mubr.f32.mxu0 0.0
      %469 = vmatmul.mubr.f32.gmra.mrb[0].mxu0 %v283
      %v470 = vpop.f32.mrb[0].mxu0
      %v471 = vadd.f32 0.0, %v470
      %v472 = vpop.f32.mrb[0].mxu0
      %473 = vmatprep.mubr.f32.mxu0 0.0
      %474 = vmatmul.mubr.f32.gmra.mrb[0].mxu0 %v286
      %v475 = vpop.f32.mrb[0].mxu0
      %v476 = vadd.f32 0.0, %v475
      %v477 = vpop.f32.mrb[0].mxu0
      %478 = vmatprep.mubr.f32.mxu0 0.0
      %479 = vmatmul.mubr.f32.gmra.mrb[0].mxu0 %v289
      %v480 = vpop.f32.mrb[0].mxu0
      %v481 = vadd.f32 0.0, %v480
      %v482 = vpop.f32.mrb[0].mxu0
      %483 = vmatprep.mubr.f32.mxu0 0.0
      %484 = vmatmul.mubr.f32.gmra.mrb[0].mxu0 %v292
      %v485 = vpop.f32.mrb[0].mxu0
      %v486 = vadd.f32 0.0, %v485
      %v487 = vpop.f32.mrb[0].mxu0
      %488 = vmatprep.mubr.f32.mxu0 0.0
      %489 = vmatmul.mubr.f32.gmra.mrb[0].mxu0 %v295
      %v490 = vpop.f32.mrb[0].mxu0
      %v491 = vadd.f32 0.0, %v490
      %v492 = vpop.f32.mrb[0].mxu0
      %493 = vmatprep.mubr.f32.mxu0 0.0
      %494 = vmatmul.mubr.f32.gmra.mrb[0].mxu0 %v298
      %v495 = vpop.f32.mrb[0].mxu0
      %v496 = vadd.f32 0.0, %v495
      %v497 = vpop.f32.mrb[0].mxu0
      %498 = vmatprep.mubr.f32.mxu0 0.0
      %499 = vmatmul.mubr.f32.gmra.mrb[0].mxu0 %v301
      %v500 = vpop.f32.mrb[0].mxu0
      %v501 = vadd.f32 0.0, %v500
      %v502 = vpop.f32.mrb[0].mxu0
      %503 = vmatprep.mubr.f32.mxu0 0.0
      %504 = vmatmul.mubr.f32.gmra.mrb[0].mxu0 %v304
      %v505 = vpop.f32.mrb[0].mxu0
      %v506 = vadd.f32 0.0, %v505
      %v507 = vpop.f32.mrb[0].mxu0
      %508 = vmatprep.mubr.f32.mxu0 0.0
      %509 = vmatmul.mubr.f32.gmra.mrb[0].mxu0 %v307
      %v510 = vpop.f32.mrb[0].mxu0
      %v511 = vadd.f32 0.0, %v510
      %v512 = vpop.f32.mrb[0].mxu0
      %513 = vmatprep.mubr.f32.mxu0 0.0
      %514 = vmatmul.mubr.f32.gmra.mrb[0].mxu0 %v310
      %v515 = vpop.f32.mrb[0].mxu0
      %v516 = vadd.f32 0.0, %v515
      %v517 = vpop.f32.mrb[0].mxu0
      %518 = vmatprep.mubr.f32.mxu0 0.0
      %519 = vmatmul.mubr.f32.gmra.mrb[0].mxu0 %v313
      %v520 = vpop.f32.mrb[0].mxu0
      %v521 = vadd.f32 0.0, %v520
      %v522 = vpop.f32.mrb[0].mxu0
      %523 = vmatprep.mubr.f32.mxu0 0.0
      %524 = vmatmul.mubr.f32.gmra.mrb[0].mxu0 %v316
      %v525 = vpop.f32.mrb[0].mxu0
      %v526 = vadd.f32 0.0, %v525
      %v527 = vpop.f32.mrb[0].mxu0
      %528 = vmatprep.mubr.f32.mxu0 0.0
      %529 = vmatmul.mubr.f32.gmra.mrb[0].mxu0 %v319
      %v530 = vpop.f32.mrb[0].mxu0
      %v531 = vadd.f32 0.0, %v530
      %v532 = vpop.f32.mrb[0].mxu0
      %533 = vmatprep.mubr.f32.mxu0 0.0
      %534 = vmatmul.mubr.f32.gmra.mrb[0].mxu0 %v322
      %v535 = vpop.f32.mrb[0].mxu0
      %v536 = vadd.f32 0.0, %v535
      %v537 = vpop.f32.mrb[0].mxu0
      %538 = vmatprep.mubr.f32.mxu0 0.0
      %539 = vmatmul.mubr.f32.gmra.mrb[0].mxu0 %v325
      %v540 = vpop.f32.mrb[0].mxu0
      %v541 = vadd.f32 0.0, %v540
      %v542 = vpop.f32.mrb[0].mxu0
      %543 = vmatprep.mubr.f32.mxu0 0.0
      %544 = vmatmul.mubr.f32.gmra.mrb[0].mxu0 %v328
      %v545 = vpop.f32.mrb[0].mxu0
      %v546 = vadd.f32 0.0, %v545
      %v547 = vpop.f32.mrb[0].mxu0
      %548 = vmatprep.mubr.f32.mxu0 0.0
      %549 = vmatmul.mubr.f32.gmra.mrb[0].mxu0 %v331
      %v550 = vpop.f32.mrb[0].mxu0
      %v551 = vadd.f32 0.0, %v550
      %v552 = vpop.f32.mrb[0].mxu0
      %553 = vmatprep.mubr.f32.mxu0 0.0
      %554 = vmatmul.mubr.f32.gmra.mrb[0].mxu0 %v334
      %v555 = vpop.f32.mrb[0].mxu0
      %v556 = vadd.f32 0.0, %v555
      %v557 = vpop.f32.mrb[0].mxu0
      %558 = vmatprep.mubr.f32.mxu0 0.0
      %559 = vmatmul.mubr.f32.gmra.mrb[0].mxu0 %v337
      %v560 = vpop.f32.mrb[0].mxu0
      %v561 = vadd.f32 0.0, %v560
      %v562 = vpop.f32.mrb[0].mxu0
      %563 = vmatprep.mubr.f32.mxu0 0.0
      %564 = vmatmul.mubr.f32.gmra.mrb[0].mxu0 %v340
      %v565 = vpop.f32.mrb[0].mxu0
      %v566 = vadd.f32 0.0, %v565
      %v567 = vpop.f32.mrb[0].mxu0
      %568 = vmatprep.mubr.f32.mxu0 0.0
      %569 = vmatmul.mubr.f32.gmra.mrb[0].mxu0 %v343
      %v570 = vpop.f32.mrb[0].mxu0
      %v571 = vadd.f32 0.0, %v570
      %v572 = vpop.f32.mrb[0].mxu0
      %573 = vdwg.mxu0
      %vm574 = vcmask 261120
      %575 = vst.msk [vmem:[%s208] sm:$0xff] %vm574, %v416
      %576 = vst.msk [vmem:[%s208 + $0x8] sm:$0xff] %vm574, %v421
      %577 = vst.msk [vmem:[%s208 + $0x10] sm:$0xff] %vm574, %v426
      %578 = vst.msk [vmem:[%s208 + $0x18] sm:$0xff] %vm574, %v431
      %579 = vst.msk [vmem:[%s208 + $0x20] sm:$0xff] %vm574, %v436
      %580 = vst.msk [vmem:[%s208 + $0x28] sm:$0xff] %vm574, %v441
      %581 = vst.msk [vmem:[%s208 + $0x30] sm:$0xff] %vm574, %v446
      %582 = vst.msk [vmem:[%s208 + $0x38] sm:$0xff] %vm574, %v451
      %583 = vst.msk [vmem:[%s208 + $0x40] sm:$0xff] %vm574, %v456
      %584 = vst.msk [vmem:[%s208 + $0x48] sm:$0xff] %vm574, %v461
      %585 = vst.msk [vmem:[%s208 + $0x50] sm:$0xff] %vm574, %v466
      %586 = vst.msk [vmem:[%s208 + $0x58] sm:$0xff] %vm574, %v471
      %587 = vst.msk [vmem:[%s208 + $0x60] sm:$0xff] %vm574, %v476
      %588 = vst.msk [vmem:[%s208 + $0x68] sm:$0xff] %vm574, %v481
      %589 = vst.msk [vmem:[%s208 + $0x70] sm:$0xff] %vm574, %v486
      %590 = vst.msk [vmem:[%s208 + $0x78] sm:$0xff] %vm574, %v491
      %591 = vst.msk [vmem:[%s208 + $0x80] sm:$0xff] %vm574, %v496
      %592 = vst.msk [vmem:[%s208 + $0x88] sm:$0xff] %vm574, %v501
      %593 = vst.msk [vmem:[%s208 + $0x90] sm:$0xff] %vm574, %v506
      %594 = vst.msk [vmem:[%s208 + $0x98] sm:$0xff] %vm574, %v511
      %595 = vst.msk [vmem:[%s208 + $0xa0] sm:$0xff] %vm574, %v516
      %596 = vst.msk [vmem:[%s208 + $0xa8] sm:$0xff] %vm574, %v521
      %597 = vst.msk [vmem:[%s208 + $0xb0] sm:$0xff] %vm574, %v526
      %598 = vst.msk [vmem:[%s208 + $0xb8] sm:$0xff] %vm574, %v531
      %599 = vst.msk [vmem:[%s208 + $0xc0] sm:$0xff] %vm574, %v536
      %600 = vst.msk [vmem:[%s208 + $0xc8] sm:$0xff] %vm574, %v541
      %601 = vst.msk [vmem:[%s208 + $0xd0] sm:$0xff] %vm574, %v546
      %602 = vst.msk [vmem:[%s208 + $0xd8] sm:$0xff] %vm574, %v551
      %603 = vst.msk [vmem:[%s208 + $0xe0] sm:$0xff] %vm574, %v556
      %604 = vst.msk [vmem:[%s208 + $0xe8] sm:$0xff] %vm574, %v561
      %605 = vst.msk [vmem:[%s208 + $0xf0] sm:$0xff] %vm574, %v566
      %606 = vst.msk [vmem:[%s208 + $0xf8] sm:$0xff] %vm574, %v571
      %v607 = vsel %vm574, %v416, 0.0
      %v608 = vsel %vm574, %v421, 0.0
      %v609 = vadd.f32 %v607, %v608
      %v610 = vsel %vm574, %v426, 0.0
      %v611 = vadd.f32 %v609, %v610
      %v612 = vsel %vm574, %v431, 0.0
      %v613 = vadd.f32 %v611, %v612
      %v614 = vsel %vm574, %v436, 0.0
      %v615 = vadd.f32 %v613, %v614
      %v616 = vsel %vm574, %v441, 0.0
      %v617 = vadd.f32 %v615, %v616
      %v618 = vsel %vm574, %v446, 0.0
      %v619 = vadd.f32 %v617, %v618
      %v620 = vsel %vm574, %v451, 0.0
      %v621 = vadd.f32 %v619, %v620
      %v622 = vsel %vm574, %v456, 0.0
      %v623 = vadd.f32 %v621, %v622
      %v624 = vsel %vm574, %v461, 0.0
      %v625 = vadd.f32 %v623, %v624
      %v626 = vsel %vm574, %v466, 0.0
      %v627 = vadd.f32 %v625, %v626
      %v628 = vsel %vm574, %v471, 0.0
      %v629 = vadd.f32 %v627, %v628
      %v630 = vsel %vm574, %v476, 0.0
      %v631 = vadd.f32 %v629, %v630
      %v632 = vsel %vm574, %v481, 0.0
      %v633 = vadd.f32 %v631, %v632
      %v634 = vsel %vm574, %v486, 0.0
      %v635 = vadd.f32 %v633, %v634
      %v636 = vsel %vm574, %v491, 0.0
      %v637 = vadd.f32 %v635, %v636
      %v638 = vsel %vm574, %v496, 0.0
      %v639 = vadd.f32 %v637, %v638
      %v640 = vsel %vm574, %v501, 0.0
      %v641 = vadd.f32 %v639, %v640
      %v642 = vsel %vm574, %v506, 0.0
      %v643 = vadd.f32 %v641, %v642
      %v644 = vsel %vm574, %v511, 0.0
      %v645 = vadd.f32 %v643, %v644
      %v646 = vsel %vm574, %v516, 0.0
      %v647 = vadd.f32 %v645, %v646
      %v648 = vsel %vm574, %v521, 0.0
      %v649 = vadd.f32 %v647, %v648
      %v650 = vsel %vm574, %v526, 0.0
      %v651 = vadd.f32 %v649, %v650
      %v652 = vsel %vm574, %v531, 0.0
      %v653 = vadd.f32 %v651, %v652
      %v654 = vsel %vm574, %v536, 0.0
      %v655 = vadd.f32 %v653, %v654
      %v656 = vsel %vm574, %v541, 0.0
      %v657 = vadd.f32 %v655, %v656
      %v658 = vsel %vm574, %v546, 0.0
      %v659 = vadd.f32 %v657, %v658
      %v660 = vsel %vm574, %v551, 0.0
      %v661 = vadd.f32 %v659, %v660
      %v662 = vsel %vm574, %v556, 0.0
      %v663 = vadd.f32 %v661, %v662
      %v664 = vsel %vm574, %v561, 0.0
      %v665 = vadd.f32 %v663, %v664
      %v666 = vsel %vm574, %v566, 0.0
      %v667 = vadd.f32 %v665, %v666
      %v668 = vsel %vm574, %v571, 0.0
      %v669 = vadd.f32 %v667, %v668
      %v670 = vrot.slane %v669, 4
      %v671 = vadd.f32 %v669, %v670
      %v672 = vrot.slane %v671, 2
      %v673 = vadd.f32 %v671, %v672
      %v674 = vrot.slane %v673, 1
      %v675 = vadd.f32 %v673, %v674
      %vm676 = vcmask 253952
      %677 = vst.msk [vmem:[%s211] sm:$0x1] %vm676, %v675
      %v678 = vmul.f32 %v416, %v416
      %v679 = vmul.f32 %v421, %v421
      %v680 = vmul.f32 %v426, %v426
      %v681 = vmul.f32 %v431, %v431
      %v682 = vmul.f32 %v436, %v436
      %v683 = vmul.f32 %v441, %v441
      %v684 = vmul.f32 %v446, %v446
      %v685 = vmul.f32 %v451, %v451
      %v686 = vmul.f32 %v456, %v456
      %v687 = vmul.f32 %v461, %v461
      %v688 = vmul.f32 %v466, %v466
      %v689 = vmul.f32 %v471, %v471
      %v690 = vmul.f32 %v476, %v476
      %v691 = vmul.f32 %v481, %v481
      %v692 = vmul.f32 %v486, %v486
      %v693 = vmul.f32 %v491, %v491
      %v694 = vmul.f32 %v496, %v496
      %v695 = vmul.f32 %v501, %v501
      %v696 = vmul.f32 %v506, %v506
      %v697 = vmul.f32 %v511, %v511
      %v698 = vmul.f32 %v516, %v516
      %v699 = vmul.f32 %v521, %v521
      %v700 = vmul.f32 %v526, %v526
      %v701 = vmul.f32 %v531, %v531
      %v702 = vmul.f32 %v536, %v536
      %v703 = vmul.f32 %v541, %v541
      %v704 = vmul.f32 %v546, %v546
      %v705 = vmul.f32 %v551, %v551
      %v706 = vmul.f32 %v556, %v556
      %v707 = vmul.f32 %v561, %v561
      %v708 = vmul.f32 %v566, %v566
      %v709 = vmul.f32 %v571, %v571
      %v710 = vsel %vm574, %v678, 0.0
      %v711 = vsel %vm574, %v679, 0.0
      %v712 = vadd.f32 %v710, %v711
      %v713 = vsel %vm574, %v680, 0.0
      %v714 = vadd.f32 %v712, %v713
      %v715 = vsel %vm574, %v681, 0.0
      %v716 = vadd.f32 %v714, %v715
      %v717 = vsel %vm574, %v682, 0.0
      %v718 = vadd.f32 %v716, %v717
      %v719 = vsel %vm574, %v683, 0.0
      %v720 = vadd.f32 %v718, %v719
      %v721 = vsel %vm574, %v684, 0.0
      %v722 = vadd.f32 %v720, %v721
      %v723 = vsel %vm574, %v685, 0.0
      %v724 = vadd.f32 %v722, %v723
      %v725 = vsel %vm574, %v686, 0.0
      %v726 = vadd.f32 %v724, %v725
      %v727 = vsel %vm574, %v687, 0.0
      %v728 = vadd.f32 %v726, %v727
      %v729 = vsel %vm574, %v688, 0.0
      %v730 = vadd.f32 %v728, %v729
      %v731 = vsel %vm574, %v689, 0.0
      %v732 = vadd.f32 %v730, %v731
      %v733 = vsel %vm574, %v690, 0.0
      %v734 = vadd.f32 %v732, %v733
      %v735 = vsel %vm574, %v691, 0.0
      %v736 = vadd.f32 %v734, %v735
      %v737 = vsel %vm574, %v692, 0.0
      %v738 = vadd.f32 %v736, %v737
      %v739 = vsel %vm574, %v693, 0.0
      %v740 = vadd.f32 %v738, %v739
      %v741 = vsel %vm574, %v694, 0.0
      %v742 = vadd.f32 %v740, %v741
      %v743 = vsel %vm574, %v695, 0.0
      %v744 = vadd.f32 %v742, %v743
      %v745 = vsel %vm574, %v696, 0.0
      %v746 = vadd.f32 %v744, %v745
      %v747 = vsel %vm574, %v697, 0.0
      %v748 = vadd.f32 %v746, %v747
      %v749 = vsel %vm574, %v698, 0.0
      %v750 = vadd.f32 %v748, %v749
      %v751 = vsel %vm574, %v699, 0.0
      %v752 = vadd.f32 %v750, %v751
      %v753 = vsel %vm574, %v700, 0.0
      %v754 = vadd.f32 %v752, %v753
      %v755 = vsel %vm574, %v701, 0.0
      %v756 = vadd.f32 %v754, %v755
      %v757 = vsel %vm574, %v702, 0.0
      %v758 = vadd.f32 %v756, %v757
      %v759 = vsel %vm574, %v703, 0.0
      %v760 = vadd.f32 %v758, %v759
      %v761 = vsel %vm574, %v704, 0.0
      %v762 = vadd.f32 %v760, %v761
      %v763 = vsel %vm574, %v705, 0.0
      %v764 = vadd.f32 %v762, %v763
      %v765 = vsel %vm574, %v706, 0.0
      %v766 = vadd.f32 %v764, %v765
      %v767 = vsel %vm574, %v707, 0.0
      %v768 = vadd.f32 %v766, %v767
      %v769 = vsel %vm574, %v708, 0.0
      %v770 = vadd.f32 %v768, %v769
      %v771 = vsel %vm574, %v709, 0.0
      %v772 = vadd.f32 %v770, %v771
      %v773 = vrot.slane %v772, 4
      %v774 = vadd.f32 %v772, %v773
      %v775 = vrot.slane %v774, 2
      %v776 = vadd.f32 %v774, %v775
      %v777 = vrot.slane %v776, 1
      %v778 = vadd.f32 %v776, %v777
      %779 = vst.msk [vmem:[%s214] sm:$0x1] %vm676, %v778
      %p780 = scmp.lt.s32.totalorder %s16, 1
      %s781 = scalar_select %p780, %s16, 1
      %s782 = smul.addr %s781, 32
      %s783 = smul.addr %s782, 8
      %s784 = scalar_lea.vmem %s2, %s783
      %p785 = scmp.lt.s32.totalorder %s16, 1
      %s786 = scalar_select %p785, %s16, 1
      %s787 = scalar_lea.vmem %s3, %s786
      %p788 = scmp.lt.s32.totalorder %s16, 1
      %s789 = scalar_select %p788, %s16, 1
      %s790 = scalar_lea.vmem %s4, %s789
      // Predicated region
      $region29: #{mlp_forward.3} parent=27 // pred_check
        %p791 = pneg %p81
      $region30: #{mlp_forward.3} parent=27 // pred_check_branch
        %793 = sbr.rel (%p791) target = $region32
      $region31: #{mlp_forward.3} parent=27 // pred_region
        _
      $region32: #{mlp_forward.3} parent=27 // pred_fallthru
        _
      // Predicated region
      $region33: #{mlp_forward.3} parent=27 // pred_check
        %p794 = pneg %p107
      $region34: #{mlp_forward.3} parent=27 // pred_check_branch
        %796 = sbr.rel (%p794) target = $region36
      $region35: #{mlp_forward.3} parent=27 // pred_region
        _
      $region36: #{mlp_forward.3} parent=27 // pred_fallthru
        _
      // Predicated region
      $region37: #{mlp_forward.3} parent=27 // pred_check
        %p797 = pneg %p133
      $region38: #{mlp_forward.3} parent=27 // pred_check_branch
        %799 = sbr.rel (%p797) target = $region40
      $region39: #{mlp_forward.3} parent=27 // pred_region
        _
      $region40: #{mlp_forward.3} parent=27 // pred_fallthru
        _
    $region28: #{mlp_forward.3} parent=5 // pred_fallthru
      _
    %p800 = scmp.le.s32.totalorder 2, %s11
    // Predicated region
    $region41: #{mlp_forward.3} parent=5 // pred_check
      %p801 = pneg %p800
    $region42: #{mlp_forward.3} parent=5 // pred_check_branch
      %803 = sbr.rel (%p801) target = $region44
    $region43: #{mlp_forward.3} parent=5 // pred_region
      %s804 = ssub.s32 %s11, 2
      // Predicated region
      $region45: #{mlp_forward.3} parent=43 // pred_check
        %p805 = pneg %p87
      $region46: #{mlp_forward.3} parent=43 // pred_check_branch
        %807 = sbr.rel (%p805) target = $region48
      $region47: #{mlp_forward.3} parent=43 // pred_region
        %p808 = scmp.lt.s32.totalorder %s17, 1
        %s809 = scalar_select %p808, %s17, 1
        %s810 = smul.addr %s809, 32
        %s811 = smul.addr %s810, 8
        %s812 = scalar_lea.vmem %s2, %s811
      $region48: #{mlp_forward.3} parent=43 // pred_fallthru
        _
      // Predicated region
      $region49: #{mlp_forward.3} parent=43 // pred_check
        %p813 = pneg %p113
      $region50: #{mlp_forward.3} parent=43 // pred_check_branch
        %815 = sbr.rel (%p813) target = $region52
      $region51: #{mlp_forward.3} parent=43 // pred_region
        %p816 = scmp.lt.s32.totalorder %s17, 1
        %s817 = scalar_select %p816, %s17, 1
        %s818 = scalar_lea.vmem %s3, %s817
      $region52: #{mlp_forward.3} parent=43 // pred_fallthru
        _
      // Predicated region
      $region53: #{mlp_forward.3} parent=43 // pred_check
        %p819 = pneg %p139
      $region54: #{mlp_forward.3} parent=43 // pred_check_branch
        %821 = sbr.rel (%p819) target = $region56
      $region55: #{mlp_forward.3} parent=43 // pred_region
        %p822 = scmp.lt.s32.totalorder %s17, 1
        %s823 = scalar_select %p822, %s17, 1
        %s824 = scalar_lea.vmem %s4, %s823
      $region56: #{mlp_forward.3} parent=43 // pred_fallthru
        _
    $region44: #{mlp_forward.3} parent=5 // pred_fallthru
      _
  $region6: #{mlp_forward.3} parent=0 // loop_footer
    %s15 = sadd.s32 1, %s11
  $region7: #{mlp_forward.3} parent=0 // loop_footer_branch
    %10 = sbr.rel target = $region3
  $region8: #{mlp_forward.3} parent=0 // loop_exit
    _

// kernel: mlp_forward.4
$region0: #{mlp_forward.4}
  #allocation0 [shape = 'u32[]', space=smem, size = 0x4, offset = 0x4, fixed_abs, tag = 'smem constant byte address 0x4 - core index']
  #allocation1 [shape = 'u32[144,128]{1,0:T(1,128)}', space=vmem, size = 0x12000, scoped, tag = 'internal scratch']
  #allocation2 [shape = 'f32[18,32,32]{2,1,0:T(8,128)}', space=vmem, size = 0x48000, scoped, tag = 'scratch operand']
  %s0 = inlined_call_operand.vmem [shape: f32[2,16,16,32], index: 0, kind: input, shape index: {}]
  %s1 = inlined_call_operand.vmem [shape: f32[1,32], index: 1, kind: input, shape index: {}]
  %s2 = inlined_call_operand.vmem [shape: f32[1,32], index: 2, kind: input, shape index: {}]
  %s3 = inlined_call_operand.vmem [shape: f32[9,32], index: 3, kind: input, shape index: {}]
  %s4 = inlined_call_operand.vmem [shape: f32[1,32], index: 4, kind: input, shape index: {}]
  %s5 = inlined_call_operand.vmem [shape: f32[32,4], index: 5, kind: input, shape index: {}]
  %s6 = inlined_call_operand.vmem [shape: f32[2,16,16,4], index: 6, kind: output, shape index: {0}]
  %s7 = inlined_call_operand.vmem [shape: f32[2,1,4], index: 7, kind: output, shape index: {1}]
  %s8 = inlined_call_operand.vmem [shape: f32[2,1,4], index: 8, kind: output, shape index: {2}]
  %9 = xla_tuple %s6, %s7, %s8
  %s10 = sld [smem:[#allocation0]]
  $region73: #{mlp_forward.4} parent=0
    _
  %s12 = ssub.s32 1, %s10
  %s13 = scalar_select 0, %s12, %s10
  loop: start=0, step=1, limit=4
  $region2: #{mlp_forward.4} parent=0 // loop_pre_header
    _
  $region3: #{mlp_forward.4} parent=0 // loop_header
    %s15 = sphi 0, %s19
    %p16 = scmp.ge.s32.totalorder %s15, 4
    %s25 = sphi 0, %s27
    %s28 = sphi 0, %s25
    %s29 = sphi 0, %s28
    %s45 = sphi 0, %s29
    %s49 = sphi 0, %s49
    %s51 = sphi 0, %s49
    %s52 = sphi 0, %s51
    %s66 = sphi 0, %s52
    %s70 = sphi 0, %s70
    %s72 = sphi 0, %s70
    %s73 = sphi 0, %s72
    %s87 = sphi 0, %s73
    %s91 = sphi 0, %s91
    %s93 = sphi 0, %s91
    %s94 = sphi 0, %s93
    %s108 = sphi 0, %s94
    %s112 = sphi 0, %s112
    %s114 = sphi 0, %s112
    %s115 = sphi 0, %s114
    %s129 = sphi 0, %s115
    %s133 = sphi 0, %s133
    %s135 = sphi 0, %s133
    %s136 = sphi 0, %s135
    %s150 = sphi 0, %s136
    %s156 = sphi 0, %s158
    %s159 = sphi 0, %s156
    %s160 = sphi 0, %s159
    %s176 = sphi 0, %s160
    %s182 = sphi 0, %s184
    %s185 = sphi 0, %s182
    %s186 = sphi 0, %s185
    %s202 = sphi 0, %s186
    %s208 = sphi 0, %s210
    %s211 = sphi 0, %s208
    %s212 = sphi 0, %s211
    %s228 = sphi 0, %s212
  $region4: #{mlp_forward.4} parent=0 // loop_header_branch
    %18 = sbr.rel (%p16) target = $region8
  $region5: #{mlp_forward.4} parent=0 // loop_body
    %s20 = ssub.s32 %s15, 1
    %s21 = ssub.s32 %s15, 2
    %s22 = sadd.s32 %s15, 1
    %s23 = ssub.s32 %s15, %s22
    %p24 = scmp.eq.s32.totalorder %s23, 0
    %s26 = sadd.s32 %s25, 1
    %s27 = scalar_select %p24, %s25, %s26
    %p30 = pneg %p24
    %p31 = scmp.eq.s32.totalorder %s15, 1
    %p32 = por %p30, %p31
    %p33 = scmp.ne.s32.totalorder %s25, %s28
    %p34 = scmp.eq.s32.totalorder %s15, 0
    %p35 = por %p33, %p34
    %p36 = scmp.ne.s32.totalorder %s25, %s28
    %p37 = scmp.eq.s32.totalorder %s20, 1
    %p38 = por %p36, %p37
    %p39 = scmp.ne.s32.totalorder %s28, %s29
    %p40 = scmp.eq.s32.totalorder %s20, 0
    %p41 = por %p39, %p40
    %p42 = scmp.ne.s32.totalorder %s28, %s29
    %p43 = scmp.eq.s32.totalorder %s21, 1
    %p44 = por %p42, %p43
    %p46 = scmp.ne.s32.totalorder %s29, %s45
    %p47 = scmp.eq.s32.totalorder %s21, 0
    %p48 = por %p46, %p47
    %s50 = sadd.s32 %s49, 1
    %p53 = scmp.eq.s32.totalorder %s15, 1
    %p54 = scmp.ne.s32.totalorder %s49, %s51
    %p55 = scmp.eq.s32.totalorder %s15, 0
    %p56 = por %p54, %p55
    %p57 = scmp.ne.s32.totalorder %s49, %s51
    %p58 = scmp.eq.s32.totalorder %s20, 1
    %p59 = por %p57, %p58
    %p60 = scmp.ne.s32.totalorder %s51, %s52
    %p61 = scmp.eq.s32.totalorder %s20, 0
    %p62 = por %p60, %p61
    %p63 = scmp.ne.s32.totalorder %s51, %s52
    %p64 = scmp.eq.s32.totalorder %s21, 1
    %p65 = por %p63, %p64
    %p67 = scmp.ne.s32.totalorder %s52, %s66
    %p68 = scmp.eq.s32.totalorder %s21, 0
    %p69 = por %p67, %p68
    %s71 = sadd.s32 %s70, 1
    %p74 = scmp.eq.s32.totalorder %s15, 1
    %p75 = scmp.ne.s32.totalorder %s70, %s72
    %p76 = scmp.eq.s32.totalorder %s15, 0
    %p77 = por %p75, %p76
    %p78 = scmp.ne.s32.totalorder %s70, %s72
    %p79 = scmp.eq.s32.totalorder %s20, 1
    %p80 = por %p78, %p79
    %p81 = scmp.ne.s32.totalorder %s72, %s73
    %p82 = scmp.eq.s32.totalorder %s20, 0
    %p83 = por %p81, %p82
    %p84 = scmp.ne.s32.totalorder %s72, %s73
    %p85 = scmp.eq.s32.totalorder %s21, 1
    %p86 = por %p84, %p85
    %p88 = scmp.ne.s32.totalorder %s73, %s87
    %p89 = scmp.eq.s32.totalorder %s21, 0
    %p90 = por %p88, %p89
    %s92 = sadd.s32 %s91, 1
    %p95 = scmp.eq.s32.totalorder %s15, 1
    %p96 = scmp.ne.s32.totalorder %s91, %s93
    %p97 = scmp.eq.s32.totalorder %s15, 0
    %p98 = por %p96, %p97
    %p99 = scmp.ne.s32.totalorder %s91, %s93
    %p100 = scmp.eq.s32.totalorder %s20, 1
    %p101 = por %p99, %p100
    %p102 = scmp.ne.s32.totalorder %s93, %s94
    %p103 = scmp.eq.s32.totalorder %s20, 0
    %p104 = por %p102, %p103
    %p105 = scmp.ne.s32.totalorder %s93, %s94
    %p106 = scmp.eq.s32.totalorder %s21, 1
    %p107 = por %p105, %p106
    %p109 = scmp.ne.s32.totalorder %s94, %s108
    %p110 = scmp.eq.s32.totalorder %s21, 0
    %p111 = por %p109, %p110
    %s113 = sadd.s32 %s112, 1
    %p116 = scmp.eq.s32.totalorder %s15, 1
    %p117 = scmp.ne.s32.totalorder %s112, %s114
    %p118 = scmp.eq.s32.totalorder %s15, 0
    %p119 = por %p117, %p118
    %p120 = scmp.ne.s32.totalorder %s112, %s114
    %p121 = scmp.eq.s32.totalorder %s20, 1
    %p122 = por %p120, %p121
    %p123 = scmp.ne.s32.totalorder %s114, %s115
    %p124 = scmp.eq.s32.totalorder %s20, 0
    %p125 = por %p123, %p124
    %p126 = scmp.ne.s32.totalorder %s114, %s115
    %p127 = scmp.eq.s32.totalorder %s21, 1
    %p128 = por %p126, %p127
    %p130 = scmp.ne.s32.totalorder %s115, %s129
    %p131 = scmp.eq.s32.totalorder %s21, 0
    %p132 = por %p130, %p131
    %s134 = sadd.s32 %s133, 1
    %p137 = scmp.eq.s32.totalorder %s15, 1
    %p138 = scmp.ne.s32.totalorder %s133, %s135
    %p139 = scmp.eq.s32.totalorder %s15, 0
    %p140 = por %p138, %p139
    %p141 = scmp.ne.s32.totalorder %s133, %s135
    %p142 = scmp.eq.s32.totalorder %s20, 1
    %p143 = por %p141, %p142
    %p144 = scmp.ne.s32.totalorder %s135, %s136
    %p145 = scmp.eq.s32.totalorder %s20, 0
    %p146 = por %p144, %p145
    %p147 = scmp.ne.s32.totalorder %s135, %s136
    %p148 = scmp.eq.s32.totalorder %s21, 1
    %p149 = por %p147, %p148
    %p151 = scmp.ne.s32.totalorder %s136, %s150
    %p152 = scmp.eq.s32.totalorder %s21, 0
    %p153 = por %p151, %p152
    %s154 = ssub.s32 %s15, %s22
    %p155 = scmp.eq.s32.totalorder %s154, 0
    %s157 = sadd.s32 %s156, 1
    %s158 = scalar_select %p155, %s156, %s157
    %p161 = pneg %p155
    %p162 = scmp.eq.s32.totalorder %s15, 1
    %p163 = por %p161, %p162
    %p164 = scmp.ne.s32.totalorder %s156, %s159
    %p165 = scmp.eq.s32.totalorder %s15, 0
    %p166 = por %p164, %p165
    %p167 = scmp.ne.s32.totalorder %s156, %s159
    %p168 = scmp.eq.s32.totalorder %s20, 1
    %p169 = por %p167, %p168
    %p170 = scmp.ne.s32.totalorder %s159, %s160
    %p171 = scmp.eq.s32.totalorder %s20, 0
    %p172 = por %p170, %p171
    %p173 = scmp.ne.s32.totalorder %s159, %s160
    %p174 = scmp.eq.s32.totalorder %s21, 1
    %p175 = por %p173, %p174
    %p177 = scmp.ne.s32.totalorder %s160, %s176
    %p178 = scmp.eq.s32.totalorder %s21, 0
    %p179 = por %p177, %p178
    %s180 = ssub.s32 %s15, %s22
    %p181 = scmp.eq.s32.totalorder %s180, 0
    %s183 = sadd.s32 %s182, 1
    %s184 = scalar_select %p181, %s182, %s183
    %p187 = pneg %p181
    %p188 = scmp.eq.s32.totalorder %s15, 1
    %p189 = por %p187, %p188
    %p190 = scmp.ne.s32.totalorder %s182, %s185
    %p191 = scmp.eq.s32.totalorder %s15, 0
    %p192 = por %p190, %p191
    %p193 = scmp.ne.s32.totalorder %s182, %s185
    %p194 = scmp.eq.s32.totalorder %s20, 1
    %p195 = por %p193, %p194
    %p196 = scmp.ne.s32.totalorder %s185, %s186
    %p197 = scmp.eq.s32.totalorder %s20, 0
    %p198 = por %p196, %p197
    %p199 = scmp.ne.s32.totalorder %s185, %s186
    %p200 = scmp.eq.s32.totalorder %s21, 1
    %p201 = por %p199, %p200
    %p203 = scmp.ne.s32.totalorder %s186, %s202
    %p204 = scmp.eq.s32.totalorder %s21, 0
    %p205 = por %p203, %p204
    %s206 = ssub.s32 %s15, %s22
    %p207 = scmp.eq.s32.totalorder %s206, 0
    %s209 = sadd.s32 %s208, 1
    %s210 = scalar_select %p207, %s208, %s209
    %p213 = pneg %p207
    %p214 = scmp.eq.s32.totalorder %s15, 1
    %p215 = por %p213, %p214
    %p216 = scmp.ne.s32.totalorder %s208, %s211
    %p217 = scmp.eq.s32.totalorder %s15, 0
    %p218 = por %p216, %p217
    %p219 = scmp.ne.s32.totalorder %s208, %s211
    %p220 = scmp.eq.s32.totalorder %s20, 1
    %p221 = por %p219, %p220
    %p222 = scmp.ne.s32.totalorder %s211, %s212
    %p223 = scmp.eq.s32.totalorder %s20, 0
    %p224 = por %p222, %p223
    %p225 = scmp.ne.s32.totalorder %s211, %s212
    %p226 = scmp.eq.s32.totalorder %s21, 1
    %p227 = por %p225, %p226
    %p229 = scmp.ne.s32.totalorder %s212, %s228
    %p230 = scmp.eq.s32.totalorder %s21, 0
    %p231 = por %p229, %p230
    %p232 = scmp.le.s32.totalorder 1, %s15
    %p233 = scmp.lt.s32.totalorder %s15, 3
    %p234 = pnand %p232, %p233
    %p235 = pneg %p234
    // Predicated region
    $region9: #{mlp_forward.4} parent=5 // pred_check
      _
    $region10: #{mlp_forward.4} parent=5 // pred_check_branch
      %237 = sbr.rel (%p234) target = $region12
    $region11: #{mlp_forward.4} parent=5 // pred_region
      %s238 = ssub.s32 %s15, 1
      // Predicated region
      $region13: #{mlp_forward.4} parent=11 // pred_check
        %p239 = pneg %p62
      $region14: #{mlp_forward.4} parent=11 // pred_check_branch
        %241 = sbr.rel (%p239) target = $region16
      $region15: #{mlp_forward.4} parent=11 // pred_region
        _
      $region16: #{mlp_forward.4} parent=11 // pred_fallthru
        _
      // Predicated region
      $region17: #{mlp_forward.4} parent=11 // pred_check
        %p242 = pneg %p83
      $region18: #{mlp_forward.4} parent=11 // pred_check_branch
        %244 = sbr.rel (%p242) target = $region20
      $region19: #{mlp_forward.4} parent=11 // pred_region
        _
      $region20: #{mlp_forward.4} parent=11 // pred_fallthru
        _
      // Predicated region
      $region21: #{mlp_forward.4} parent=11 // pred_check
        %p245 = pneg %p104
      $region22: #{mlp_forward.4} parent=11 // pred_check_branch
        %247 = sbr.rel (%p245) target = $region24
      $region23: #{mlp_forward.4} parent=11 // pred_region
        _
      $region24: #{mlp_forward.4} parent=11 // pred_fallthru
        _
      // Predicated region
      $region25: #{mlp_forward.4} parent=11 // pred_check
        %p248 = pneg %p125
      $region26: #{mlp_forward.4} parent=11 // pred_check_branch
        %250 = sbr.rel (%p248) target = $region28
      $region27: #{mlp_forward.4} parent=11 // pred_region
        _
      $region28: #{mlp_forward.4} parent=11 // pred_fallthru
        _
      // Predicated region
      $region29: #{mlp_forward.4} parent=11 // pred_check
        %p251 = pneg %p146
      $region30: #{mlp_forward.4} parent=11 // pred_check_branch
        %253 = sbr.rel (%p251) target = $region32
      $region31: #{mlp_forward.4} parent=11 // pred_region
        _
      $region32: #{mlp_forward.4} parent=11 // pred_fallthru
        _
    $region12: #{mlp_forward.4} parent=5 // pred_fallthru
      _
    %p254 = scmp.lt.s32.totalorder %s15, 2
    // Predicated region
    $region33: #{mlp_forward.4} parent=5 // pred_check
      %p255 = pneg %p254
    $region34: #{mlp_forward.4} parent=5 // pred_check_branch
      %257 = sbr.rel (%p255) target = $region36
    $region35: #{mlp_forward.4} parent=5 // pred_region
      // Predicated region
      $region37: #{mlp_forward.4} parent=35 // pred_check
        %p258 = pneg %p35
      $region38: #{mlp_forward.4} parent=35 // pred_check_branch
        %260 = sbr.rel (%p258) target = $region40
      $region39: #{mlp_forward.4} parent=35 // pred_region
        %p261 = scmp.lt.s32.totalorder %s15, 1
        %s262 = scalar_select %p261, %s15, 1
        %s263 = smul.addr %s262, 32
        %s264 = smul.addr %s263, 8
        %s265 = scalar_lea.vmem %s0, %s264
      $region40: #{mlp_forward.4} parent=35 // pred_fallthru
        _
    $region36: #{mlp_forward.4} parent=5 // pred_fallthru
      _
    %p266 = scmp.le.s32.totalorder 1, %s15
    %p267 = scmp.lt.s32.totalorder %s15, 3
    %p268 = pnand %p266, %p267
    %p269 = pneg %p268
    // Predicated region
    $region41: #{mlp_forward.4} parent=5 // pred_check
      _
    $region42: #{mlp_forward.4} parent=5 // pred_check_branch
      %271 = sbr.rel (%p268) target = $region44
    $region43: #{mlp_forward.4} parent=5 // pred_region
      %s272 = ssub.s32 %s15, 1
      %p273 = scmp.lt.s32.totalorder %s20, 1
      %s274 = scalar_select %p273, %s20, 1
      %s275 = smul.addr %s274, 32
      %s276 = smul.addr %s275, 8
      %s277 = scalar_lea.vmem %s0, %s276
      %p278 = pneg %p41
      %p279 = pneg %p38
      %p280 = pneg %p62
      %p281 = pneg %p59
      %p282 = pneg %p83
      %p283 = pneg %p80
      %p284 = pneg %p104
      %p285 = pneg %p101
      %p286 = pneg %p125
      %p287 = pneg %p122
      %p288 = pneg %p146
      %p289 = pneg %p143
      %p290 = pneg %p172
      %p291 = pneg %p169
      %p292 = scmp.lt.s32.totalorder %s20, 1
      %s293 = scalar_select %p292, %s20, 1
      %s294 = smul.addr %s293, 32
      %s295 = smul.addr %s294, 8
      %s296 = scalar_lea.vmem %s6, %s295
      %p297 = pneg %p198
      %p298 = pneg %p195
      %p299 = scmp.lt.s32.totalorder %s20, 1
      %s300 = scalar_select %p299, %s20, 1
      %s301 = scalar_lea.vmem %s7, %s300
      %p302 = pneg %p224
      %p303 = pneg %p221
      %p304 = scmp.lt.s32.totalorder %s20, 1
      %s305 = scalar_select %p304, %s20, 1
      %s306 = scalar_lea.vmem %s8, %s305
      %p307 = scmp.lt.s32.totalorder %s20, 1
      %s308 = scalar_select %p307, %s20, 1
      %s309 = smul.addr %s308, 32
      %s310 = smul.addr %s309, 8
      %s311 = scalar_lea.vmem %s0, %s310
      %p312 = scmp.lt.s32.totalorder %s20, 1
      %s313 = scalar_select %p312, %s20, 1
      %s314 = smul.addr %s313, 32
      %s315 = smul.addr %s314, 8
      %s316 = scalar_lea.vmem %s6, %s315
      %p317 = scmp.lt.s32.totalorder %s20, 1
      %s318 = scalar_select %p317, %s20, 1
      %s319 = scalar_lea.vmem %s7, %s318
      %p320 = scmp.lt.s32.totalorder %s20, 1
      %s321 = scalar_select %p320, %s20, 1
      %s322 = scalar_lea.vmem %s8, %s321
      %v323 = vld [vmem:[%s311] sm:$0xff]
      %v324 = vld [vmem:[%s311 + $0x8] sm:$0xff]
      %v325 = vld [vmem:[%s311 + $0x10] sm:$0xff]
      %v326 = vld [vmem:[%s311 + $0x18] sm:$0xff]
      %v327 = vld [vmem:[%s311 + $0x20] sm:$0xff]
      %v328 = vld [vmem:[%s311 + $0x28] sm:$0xff]
      %v329 = vld [vmem:[%s311 + $0x30] sm:$0xff]
      %v330 = vld [vmem:[%s311 + $0x38] sm:$0xff]
      %v331 = vld [vmem:[%s311 + $0x40] sm:$0xff]
      %v332 = vld [vmem:[%s311 + $0x48] sm:$0xff]
      %v333 = vld [vmem:[%s311 + $0x50] sm:$0xff]
      %v334 = vld [vmem:[%s311 + $0x58] sm:$0xff]
      %v335 = vld [vmem:[%s311 + $0x60] sm:$0xff]
      %v336 = vld [vmem:[%s311 + $0x68] sm:$0xff]
      %v337 = vld [vmem:[%s311 + $0x70] sm:$0xff]
      %v338 = vld [vmem:[%s311 + $0x78] sm:$0xff]
      %v339 = vld [vmem:[%s311 + $0x80] sm:$0xff]
      %v340 = vld [vmem:[%s311 + $0x88] sm:$0xff]
      %v341 = vld [vmem:[%s311 + $0x90] sm:$0xff]
      %v342 = vld [vmem:[%s311 + $0x98] sm:$0xff]
      %v343 = vld [vmem:[%s311 + $0xa0] sm:$0xff]
      %v344 = vld [vmem:[%s311 + $0xa8] sm:$0xff]
      %v345 = vld [vmem:[%s311 + $0xb0] sm:$0xff]
      %v346 = vld [vmem:[%s311 + $0xb8] sm:$0xff]
      %v347 = vld [vmem:[%s311 + $0xc0] sm:$0xff]
      %v348 = vld [vmem:[%s311 + $0xc8] sm:$0xff]
      %v349 = vld [vmem:[%s311 + $0xd0] sm:$0xff]
      %v350 = vld [vmem:[%s311 + $0xd8] sm:$0xff]
      %v351 = vld [vmem:[%s311 + $0xe0] sm:$0xff]
      %v352 = vld [vmem:[%s311 + $0xe8] sm:$0xff]
      %v353 = vld [vmem:[%s311 + $0xf0] sm:$0xff]
      %v354 = vld [vmem:[%s311 + $0xf8] sm:$0xff]
      %v355 = vld [vmem:[%s1] sm:$0x1]
      %v357 = vlaneseq
      %v358 = vshrl.u32 %v357, 7
      %v359 = vsub.s32 0, %v358
      %v360 = vrot.slane %v355, %v359
      %v362 = vmul.f32 %v323, %v360
      %v363 = vmul.f32 %v324, %v360
      %v364 = vmul.f32 %v325, %v360
      %v365 = vmul.f32 %v326, %v360
      %v366 = vmul.f32 %v327, %v360
      %v367 = vmul.f32 %v328, %v360
      %v368 = vmul.f32 %v329, %v360
      %v369 = vmul.f32 %v330, %v360
      %v370 = vmul.f32 %v331, %v360
      %v371 = vmul.f32 %v332, %v360
      %v372 = vmul.f32 %v333, %v360
      %v373 = vmul.f32 %v334, %v360
      %v374 = vmul.f32 %v335, %v360
      %v375 = vmul.f32 %v336, %v360
      %v376 = vmul.f32 %v337, %v360
      %v377 = vmul.f32 %v338, %v360
      %v378 = vmul.f32 %v339, %v360
      %v379 = vmul.f32 %v340, %v360
      %v380 = vmul.f32 %v341, %v360
      %v381 = vmul.f32 %v342, %v360
      %v382 = vmul.f32 %v343, %v360
      %v383 = vmul.f32 %v344, %v360
      %v384 = vmul.f32 %v345, %v360
      %v385 = vmul.f32 %v346, %v360
      %v386 = vmul.f32 %v347, %v360
      %v387 = vmul.f32 %v348, %v360
      %v388 = vmul.f32 %v349, %v360
      %v389 = vmul.f32 %v350, %v360
      %v390 = vmul.f32 %v351, %v360
      %v391 = vmul.f32 %v352, %v360
      %v392 = vmul.f32 %v353, %v360
      %v393 = vmul.f32 %v354, %v360
      %v394 = vld [vmem:[%s2] sm:$0x1]
      %v396 = vlaneseq
      %v397 = vshrl.u32 %v396, 7
      %v398 = vsub.s32 0, %v397
      %v399 = vrot.slane %v394, %v398
      %v401 = vadd.f32 %v362, %v399
      %v402 = vadd.f32 %v363, %v399
      %v403 = vadd.f32 %v364, %v399
      %v404 = vadd.f32 %v365, %v399
      %v405 = vadd.f32 %v366, %v399
      %v406 = vadd.f32 %v367, %v399
      %v407 = vadd.f32 %v368, %v399
      %v408 = vadd.f32 %v369, %v399
      %v409 = vadd.f32 %v370, %v399
      %v410 = vadd.f32 %v371, %v399
      %v411 = vadd.f32 %v372, %v399
      %v412 = vadd.f32 %v373, %v399
      %v413 = vadd.f32 %v374, %v399
      %v414 = vadd.f32 %v375, %v399
      %v415 = vadd.f32 %v376, %v399
      %v416 = vadd.f32 %v377, %v399
      %v417 = vadd.f32 %v378, %v399
      %v418 = vadd.f32 %v379, %v399
      %v419 = vadd.f32 %v380, %v399
      %v420 = vadd.f32 %v381, %v399
      %v421 = vadd.f32 %v382, %v399
      %v422 = vadd.f32 %v383, %v399
      %v423 = vadd.f32 %v384, %v399
      %v424 = vadd.f32 %v385, %v399
      %v425 = vadd.f32 %v386, %v399
      %v426 = vadd.f32 %v387, %v399
      %v427 = vadd.f32 %v388, %v399
      %v428 = vadd.f32 %v389, %v399
      %v429 = vadd.f32 %v390, %v399
      %v430 = vadd.f32 %v391, %v399
      %v431 = vadd.f32 %v392, %v399
      %v432 = vadd.f32 %v393, %v399
      %vm433 = vcmask 261120
      %434 = vst.msk [vmem:[#allocation2] sm:$0xff] %vm433, 0.0
      %435 = vst.msk [vmem:[#allocation2 + $0x8] sm:$0xff] %vm433, 0.0
      %436 = vst.msk [vmem:[#allocation2 + $0x10] sm:$0xff] %vm433, 0.0
      %437 = vst.msk [vmem:[#allocation2 + $0x18] sm:$0xff] %vm433, 0.0
      %438 = vst.msk [vmem:[#allocation2 + $0x20] sm:$0xff] %vm433, 0.0
      %439 = vst.msk [vmem:[#allocation2 + $0x28] sm:$0xff] %vm433, 0.0
      %440 = vst.msk [vmem:[#allocation2 + $0x30] sm:$0xff] %vm433, 0.0
      %441 = vst.msk [vmem:[#allocation2 + $0x38] sm:$0xff] %vm433, 0.0
      %442 = vst.msk [vmem:[#allocation2 + $0x40] sm:$0xff] %vm433, 0.0
      %443 = vst.msk [vmem:[#allocation2 + $0x48] sm:$0xff] %vm433, 0.0
      %444 = vst.msk [vmem:[#allocation2 + $0x50] sm:$0xff] %vm433, 0.0
      %445 = vst.msk [vmem:[#allocation2 + $0x58] sm:$0xff] %vm433, 0.0
      %446 = vst.msk [vmem:[#allocation2 + $0x60] sm:$0xff] %vm433, 0.0
      %447 = vst.msk [vmem:[#allocation2 + $0x68] sm:$0xff] %vm433, 0.0
      %448 = vst.msk [vmem:[#allocation2 + $0x70] sm:$0xff] %vm433, 0.0
      %449 = vst.msk [vmem:[#allocation2 + $0x78] sm:$0xff] %vm433, 0.0
      %450 = vst.msk [vmem:[#allocation2 + $0x80] sm:$0xff] %vm433, 0.0
      %451 = vst.msk [vmem:[#allocation2 + $0x88] sm:$0xff] %vm433, 0.0
      %452 = vst.msk [vmem:[#allocation2 + $0x90] sm:$0xff] %vm433, 0.0
      %453 = vst.msk [vmem:[#allocation2 + $0x98] sm:$0xff] %vm433, 0.0
      %454 = vst.msk [vmem:[#allocation2 + $0xa0] sm:$0xff] %vm433, 0.0
      %455 = vst.msk [vmem:[#allocation2 + $0xa8] sm:$0xff] %vm433, 0.0
      %456 = vst.msk [vmem:[#allocation2 + $0xb0] sm:$0xff] %vm433, 0.0
      %457 = vst.msk [vmem:[#allocation2 + $0xb8] sm:$0xff] %vm433, 0.0
      %458 = vst.msk [vmem:[#allocation2 + $0xc0] sm:$0xff] %vm433, 0.0
      %459 = vst.msk [vmem:[#allocation2 + $0xc8] sm:$0xff] %vm433, 0.0
      %460 = vst.msk [vmem:[#allocation2 + $0xd0] sm:$0xff] %vm433, 0.0
      %461 = vst.msk [vmem:[#allocation2 + $0xd8] sm:$0xff] %vm433, 0.0
      %462 = vst.msk [vmem:[#allocation2 + $0xe0] sm:$0xff] %vm433, 0.0
      %463 = vst.msk [vmem:[#allocation2 + $0xe8] sm:$0xff] %vm433, 0.0
      %464 = vst.msk [vmem:[#allocation2 + $0xf0] sm:$0xff] %vm433, 0.0
      %465 = vst.msk [vmem:[#allocation2 + $0xf8] sm:$0xff] %vm433, 0.0
      %466 = vst.msk [vmem:[#allocation2 + $0x100] sm:$0xff] %vm433, 0.0
      %467 = vst.msk [vmem:[#allocation2 + $0x108] sm:$0xff] %vm433, 0.0
      %468 = vst.msk [vmem:[#allocation2 + $0x110] sm:$0xff] %vm433, 0.0
      %469 = vst.msk [vmem:[#allocation2 + $0x118] sm:$0xff] %vm433, 0.0
      %470 = vst.msk [vmem:[#allocation2 + $0x120] sm:$0xff] %vm433, 0.0
      %471 = vst.msk [vmem:[#allocation2 + $0x128] sm:$0xff] %vm433, 0.0
      %472 = vst.msk [vmem:[#allocation2 + $0x130] sm:$0xff] %vm433, 0.0
      %473 = vst.msk [vmem:[#allocation2 + $0x138] sm:$0xff] %vm433, 0.0
      %474 = vst.msk [vmem:[#allocation2 + $0x140] sm:$0xff] %vm433, 0.0
      %475 = vst.msk [vmem:[#allocation2 + $0x148] sm:$0xff] %vm433, 0.0
      %476 = vst.msk [vmem:[#allocation2 + $0x150] sm:$0xff] %vm433, 0.0
      %477 = vst.msk [vmem:[#allocation2 + $0x158] sm:$0xff] %vm433, 0.0
      %478 = vst.msk [vmem:[#allocation2 + $0x160] sm:$0xff] %vm433, 0.0
      %479 = vst.msk [vmem:[#allocation2 + $0x168] sm:$0xff] %vm433, 0.0
      %480 = vst.msk [vmem:[#allocation2 + $0x170] sm:$0xff] %vm433, 0.0
      %481 = vst.msk [vmem:[#allocation2 + $0x178] sm:$0xff] %vm433, 0.0
      %482 = vst.msk [vmem:[#allocation2 + $0x180] sm:$0xff] %vm433, 0.0
      %483 = vst.msk [vmem:[#allocation2 + $0x188] sm:$0xff] %vm433, 0.0
      %484 = vst.msk [vmem:[#allocation2 + $0x190] sm:$0xff] %vm433, 0.0
      %485 = vst.msk [vmem:[#allocation2 + $0x198] sm:$0xff] %vm433, 0.0
      %486 = vst.msk [vmem:[#allocation2 + $0x1a0] sm:$0xff] %vm433, 0.0
      %487 = vst.msk [vmem:[#allocation2 + $0x1a8] sm:$0xff] %vm433, 0.0
      %488 = vst.msk [vmem:[#allocation2 + $0x1b0] sm:$0xff] %vm433, 0.0
      %489 = vst.msk [vmem:[#allocation2 + $0x1b8] sm:$0xff] %vm433, 0.0
      %490 = vst.msk [vmem:[#allocation2 + $0x1c0] sm:$0xff] %vm433, 0.0
      %491 = vst.msk [vmem:[#allocation2 + $0x1c8] sm:$0xff] %vm433, 0.0
      %492 = vst.msk [vmem:[#allocation2 + $0x1d0] sm:$0xff] %vm433, 0.0
      %493 = vst.msk [vmem:[#allocation2 + $0x1d8] sm:$0xff] %vm433, 0.0
      %494 = vst.msk [vmem:[#allocation2 + $0x1e0] sm:$0xff] %vm433, 0.0
      %495 = vst.msk [vmem:[#allocation2 + $0x1e8] sm:$0xff] %vm433, 0.0
      %496 = vst.msk [vmem:[#allocation2 + $0x1f0] sm:$0xff] %vm433, 0.0
      %497 = vst.msk [vmem:[#allocation2 + $0x1f8] sm:$0xff] %vm433, 0.0
      %498 = vst.msk [vmem:[#allocation2 + $0x200] sm:$0xff] %vm433, 0.0
      %499 = vst.msk [vmem:[#allocation2 + $0x208] sm:$0xff] %vm433, 0.0
      %500 = vst.msk [vmem:[#allocation2 + $0x210] sm:$0xff] %vm433, 0.0
      %501 = vst.msk [vmem:[#allocation2 + $0x218] sm:$0xff] %vm433, 0.0
      %502 = vst.msk [vmem:[#allocation2 + $0x220] sm:$0xff] %vm433, 0.0
      %503 = vst.msk [vmem:[#allocation2 + $0x228] sm:$0xff] %vm433, 0.0
      %504 = vst.msk [vmem:[#allocation2 + $0x230] sm:$0xff] %vm433, 0.0
      %505 = vst.msk [vmem:[#allocation2 + $0x238] sm:$0xff] %vm433, 0.0
      %s506 = scalar_lea.vmem [#allocation2], 32
      %507 = vst.msk [vmem:[%s506 + $0x8] sm:$0xff] %vm433, %v401
      %508 = vst.msk [vmem:[%s506 + $0x10] sm:$0xff] %vm433, %v402
      %509 = vst.msk [vmem:[%s506 + $0x28] sm:$0xff] %vm433, %v403
      %510 = vst.msk [vmem:[%s506 + $0x30] sm:$0xff] %vm433, %v404
      %511 = vst.msk [vmem:[%s506 + $0x48] sm:$0xff] %vm433, %v405
      %512 = vst.msk [vmem:[%s506 + $0x50] sm:$0xff] %vm433, %v406
      %513 = vst.msk [vmem:[%s506 + $0x68] sm:$0xff] %vm433, %v407
      %514 = vst.msk [vmem:[%s506 + $0x70] sm:$0xff] %vm433, %v408
      %515 = vst.msk [vmem:[%s506 + $0x88] sm:$0xff] %vm433, %v409
      %516 = vst.msk [vmem:[%s506 + $0x90] sm:$0xff] %vm433, %v410
      %517 = vst.msk [vmem:[%s506 + $0xa8] sm:$0xff] %vm433, %v411
      %518 = vst.msk [vmem:[%s506 + $0xb0] sm:$0xff] %vm433, %v412
      %519 = vst.msk [vmem:[%s506 + $0xc8] sm:$0xff] %vm433, %v413
      %520 = vst.msk [vmem:[%s506 + $0xd0] sm:$0xff] %vm433, %v414
      %521 = vst.msk [vmem:[%s506 + $0xe8] sm:$0xff] %vm433, %v415
      %522 = vst.msk [vmem:[%s506 + $0xf0] sm:$0xff] %vm433, %v416
      %523 = vst.msk [vmem:[%s506 + $0x108] sm:$0xff] %vm433, %v417
      %524 = vst.msk [vmem:[%s506 + $0x110] sm:$0xff] %vm433, %v418
      %525 = vst.msk [vmem:[%s506 + $0x128] sm:$0xff] %vm433, %v419
      %526 = vst.msk [vmem:[%s506 + $0x130] sm:$0xff] %vm433, %v420
      %527 = vst.msk [vmem:[%s506 + $0x148] sm:$0xff] %vm433, %v421
      %528 = vst.msk [vmem:[%s506 + $0x150] sm:$0xff] %vm433, %v422
      %529 = vst.msk [vmem:[%s506 + $0x168] sm:$0xff] %vm433, %v423
      %530 = vst.msk [vmem:[%s506 + $0x170] sm:$0xff] %vm433, %v424
      %531 = vst.msk [vmem:[%s506 + $0x188] sm:$0xff] %vm433, %v425
      %532 = vst.msk [vmem:[%s506 + $0x190] sm:$0xff] %vm433, %v426
      %533 = vst.msk [vmem:[%s506 + $0x1a8] sm:$0xff] %vm433, %v427
      %534 = vst.msk [vmem:[%s506 + $0x1b0] sm:$0xff] %vm433, %v428
      %535 = vst.msk [vmem:[%s506 + $0x1c8] sm:$0xff] %vm433, %v429
      %536 = vst.msk [vmem:[%s506 + $0x1d0] sm:$0xff] %vm433, %v430
      %537 = vst.msk [vmem:[%s506 + $0x1e8] sm:$0xff] %vm433, %v431
      %538 = vst.msk [vmem:[%s506 + $0x1f0] sm:$0xff] %vm433, %v432
      %v539 = vld [vmem:[#allocation2] sm:$0xff]
      %v540 = vld [vmem:[#allocation2 + $0x8] sm:$0xff]
      %v541 = vld [vmem:[#allocation2 + $0x10] sm:$0xff]
      %v542 = vld [vmem:[#allocation2 + $0x18] sm:$0xff]
      %v543 = vld [vmem:[#allocation2 + $0x20] sm:$0xff]
      %v544 = vld [vmem:[#allocation2 + $0x28] sm:$0xff]
      %v545 = vld [vmem:[#allocation2 + $0x30] sm:$0xff]
      %v546 = vld [vmem:[#allocation2 + $0x38] sm:$0xff]
      %v547 = vld [vmem:[#allocation2 + $0x40] sm:$0xff]
      %v548 = vld [vmem:[#allocation2 + $0x48] sm:$0xff]
      %v549 = vld [vmem:[#allocation2 + $0x50] sm:$0xff]
      %v550 = vld [vmem:[#allocation2 + $0x58] sm:$0xff]
      %v551 = vld [vmem:[#allocation2 + $0x60] sm:$0xff]
      %v552 = vld [vmem:[#allocation2 + $0x68] sm:$0xff]
      %v553 = vld [vmem:[#allocation2 + $0x70] sm:$0xff]
      %v554 = vld [vmem:[#allocation2 + $0x78] sm:$0xff]
      %v555 = vld [vmem:[#allocation2 + $0x80] sm:$0xff]
      %v556 = vld [vmem:[#allocation2 + $0x88] sm:$0xff]
      %v557 = vld [vmem:[#allocation2 + $0x90] sm:$0xff]
      %v558 = vld [vmem:[#allocation2 + $0x98] sm:$0xff]
      %v559 = vld [vmem:[#allocation2 + $0xa0] sm:$0xff]
      %v560 = vld [vmem:[#allocation2 + $0xa8] sm:$0xff]
      %v561 = vld [vmem:[#allocation2 + $0xb0] sm:$0xff]
      %v562 = vld [vmem:[#allocation2 + $0xb8] sm:$0xff]
      %v563 = vld [vmem:[#allocation2 + $0xc0] sm:$0xff]
      %v564 = vld [vmem:[#allocation2 + $0xc8] sm:$0xff]
      %v565 = vld [vmem:[#allocation2 + $0xd0] sm:$0xff]
      %v566 = vld [vmem:[#allocation2 + $0xd8] sm:$0xff]
      %v567 = vld [vmem:[#allocation2 + $0xe0] sm:$0xff]
      %v568 = vld [vmem:[#allocation2 + $0xe8] sm:$0xff]
      %v569 = vld [vmem:[#allocation2 + $0xf0] sm:$0xff]
      %v570 = vld [vmem:[#allocation2 + $0xf8] sm:$0xff]
      %v571 = vld [vmem:[#allocation2 + $0x100] sm:$0xff]
      %v572 = vld [vmem:[#allocation2 + $0x108] sm:$0xff]
      %v573 = vld [vmem:[#allocation2 + $0x110] sm:$0xff]
      %v574 = vld [vmem:[#allocation2 + $0x118] sm:$0xff]
      %v575 = vld [vmem:[#allocation2 + $0x120] sm:$0xff]
      %v576 = vld [vmem:[#allocation2 + $0x128] sm:$0xff]
      %v577 = vld [vmem:[#allocation2 + $0x130] sm:$0xff]
      %v578 = vld [vmem:[#allocation2 + $0x138] sm:$0xff]
      %v579 = vld [vmem:[#allocation2 + $0x140] sm:$0xff]
      %v580 = vld [vmem:[#allocation2 + $0x148] sm:$0xff]
      %v581 = vld [vmem:[#allocation2 + $0x150] sm:$0xff]
      %v582 = vld [vmem:[#allocation2 + $0x158] sm:$0xff]
      %v583 = vld [vmem:[#allocation2 + $0x160] sm:$0xff]
      %v584 = vld [vmem:[#allocation2 + $0x168] sm:$0xff]
      %v585 = vld [vmem:[#allocation2 + $0x170] sm:$0xff]
      %v586 = vld [vmem:[#allocation2 + $0x178] sm:$0xff]
      %v587 = vld [vmem:[#allocation2 + $0x180] sm:$0xff]
      %v588 = vld [vmem:[#allocation2 + $0x188] sm:$0xff]
      %v589 = vld [vmem:[#allocation2 + $0x190] sm:$0xff]
      %v590 = vld [vmem:[#allocation2 + $0x198] sm:$0xff]
      %v591 = vld [vmem:[#allocation2 + $0x1a0] sm:$0xff]
      %v592 = vld [vmem:[#allocation2 + $0x1a8] sm:$0xff]
      %v593 = vld [vmem:[#allocation2 + $0x1b0] sm:$0xff]
      %v594 = vld [vmem:[#allocation2 + $0x1b8] sm:$0xff]
      %v595 = vld [vmem:[#allocation2 + $0x1c0] sm:$0xff]
      %v596 = vld [vmem:[#allocation2 + $0x1c8] sm:$0xff]
      %v597 = vld [vmem:[#allocation2 + $0x1d0] sm:$0xff]
      %v598 = vld [vmem:[#allocation2 + $0x1d8] sm:$0xff]
      %v599 = vld [vmem:[#allocation2 + $0x1e0] sm:$0xff]
      %v600 = vld [vmem:[#allocation2 + $0x1e8] sm:$0xff]
      %v601 = vld [vmem:[#allocation2 + $0x1f0] sm:$0xff]
      %v602 = vld [vmem:[#allocation2 + $0x1f8] sm:$0xff]
      %v603 = vld [vmem:[#allocation2 + $0x200] sm:$0xff]
      %v604 = vld [vmem:[#allocation2 + $0x208] sm:$0xff]
      %v605 = vld [vmem:[#allocation2 + $0x210] sm:$0xff]
      %v606 = vld [vmem:[#allocation2 + $0x218] sm:$0xff]
      %v607 = vld [vmem:[#allocation2 + $0x220] sm:$0xff]
      %v608 = vld [vmem:[#allocation2 + $0x228] sm:$0xff]
      %v609 = vld [vmem:[#allocation2 + $0x230] sm:$0xff]
      %v610 = vld [vmem:[#allocation2 + $0x238] sm:$0xff]
      %v611 = vld [vmem:[%s3] sm:$0xff]
      %v612 = vld [vmem:[%s3 + $0x8] sm:$0x1]
      %v613 = vlaneseq
      %v614 = vshrl.u32 %v613, 7
      %v615 = vsub.s32 0, %v614
      %v616 = vrot.slane %v611, %v615
      %v617 = vmul.f32 %v539, %v616
      %v618 = vmul.f32 %v540, %v616
      %v619 = vmul.f32 %v541, %v616
      %v620 = vmul.f32 %v543, %v616
      %v621 = vmul.f32 %v544, %v616
      %v622 = vmul.f32 %v545, %v616
      %v623 = vmul.f32 %v547, %v616
      %v624 = vmul.f32 %v548, %v616
      %v625 = vmul.f32 %v549, %v616
      %v626 = vmul.f32 %v551, %v616
      %v627 = vmul.f32 %v552, %v616
      %v628 = vmul.f32 %v553, %v616
      %v629 = vmul.f32 %v555, %v616
      %v630 = vmul.f32 %v556, %v616
      %v631 = vmul.f32 %v557, %v616
      %v632 = vmul.f32 %v559, %v616
      %v633 = vmul.f32 %v560, %v616
      %v634 = vmul.f32 %v561, %v616
      %v635 = vmul.f32 %v563, %v616
      %v636 = vmul.f32 %v564, %v616
      %v637 = vmul.f32 %v565, %v616
      %v638 = vmul.f32 %v567, %v616
      %v639 = vmul.f32 %v568, %v616
      %v640 = vmul.f32 %v569, %v616
      %v641 = vmul.f32 %v571, %v616
      %v642 = vmul.f32 %v572, %v616
      %v643 = vmul.f32 %v573, %v616
      %v644 = vmul.f32 %v575, %v616
      %v645 = vmul.f32 %v576, %v616
      %v646 = vmul.f32 %v577, %v616
      %v647 = vmul.f32 %v579, %v616
      %v648 = vmul.f32 %v580, %v616
      %v649 = vmul.f32 %v581, %v616
      %v650 = vmul.f32 %v583, %v616
      %v651 = vmul.f32 %v584, %v616
      %v652 = vmul.f32 %v585, %v616
      %v653 = vmul.f32 %v587, %v616
      %v654 = vmul.f32 %v588, %v616
      %v655 = vmul.f32 %v589, %v616
      %v656 = vmul.f32 %v591, %v616
      %v657 = vmul.f32 %v592, %v616
      %v658 = vmul.f32 %v593, %v616
      %v659 = vmul.f32 %v595, %v616
      %v660 = vmul.f32 %v596, %v616
      %v661 = vmul.f32 %v597, %v616
      %v662 = vmul.f32 %v599, %v616
      %v663 = vmul.f32 %v600, %v616
      %v664 = vmul.f32 %v601, %v616
      %v665 = vadd.f32 %v617, 0.0
      %v666 = vadd.f32 %v618, 0.0
      %v667 = vadd.f32 %v619, 0.0
      %v668 = vadd.f32 %v620, 0.0
      %v669 = vadd.f32 %v621, 0.0
      %v670 = vadd.f32 %v622, 0.0
      %v671 = vadd.f32 %v623, 0.0
      %v672 = vadd.f32 %v624, 0.0
      %v673 = vadd.f32 %v625, 0.0
      %v674 = vadd.f32 %v626, 0.0
      %v675 = vadd.f32 %v627, 0.0
      %v676 = vadd.f32 %v628, 0.0
      %v677 = vadd.f32 %v629, 0.0
      %v678 = vadd.f32 %v630, 0.0
      %v679 = vadd.f32 %v631, 0.0
      %v680 = vadd.f32 %v632, 0.0
      %v681 = vadd.f32 %v633, 0.0
      %v682 = vadd.f32 %v634, 0.0
      %v683 = vadd.f32 %v635, 0.0
      %v684 = vadd.f32 %v636, 0.0
      %v685 = vadd.f32 %v637, 0.0
      %v686 = vadd.f32 %v638, 0.0
      %v687 = vadd.f32 %v639, 0.0
      %v688 = vadd.f32 %v640, 0.0
      %v689 = vadd.f32 %v641, 0.0
      %v690 = vadd.f32 %v642, 0.0
      %v691 = vadd.f32 %v643, 0.0
      %v692 = vadd.f32 %v644, 0.0
      %v693 = vadd.f32 %v645, 0.0
      %v694 = vadd.f32 %v646, 0.0
      %v695 = vadd.f32 %v647, 0.0
      %v696 = vadd.f32 %v648, 0.0
      %v697 = vadd.f32 %v649, 0.0
      %v698 = vadd.f32 %v650, 0.0
      %v699 = vadd.f32 %v651, 0.0
      %v700 = vadd.f32 %v652, 0.0
      %v701 = vadd.f32 %v653, 0.0
      %v702 = vadd.f32 %v654, 0.0
      %v703 = vadd.f32 %v655, 0.0
      %v704 = vadd.f32 %v656, 0.0
      %v705 = vadd.f32 %v657, 0.0
      %v706 = vadd.f32 %v658, 0.0
      %v707 = vadd.f32 %v659, 0.0
      %v708 = vadd.f32 %v660, 0.0
      %v709 = vadd.f32 %v661, 0.0
      %v710 = vadd.f32 %v662, 0.0
      %v711 = vadd.f32 %v663, 0.0
      %v712 = vadd.f32 %v664, 0.0
      %v713 = vlaneseq
      %v714 = vshrl.u32 %v713, 7
      %v715 = vsub.s32 1, %v714
      %v716 = vrot.slane %v611, %v715
      %v717 = vmul.f32 %v540, %v716
      %v718 = vmul.f32 %v541, %v716
      %v719 = vmul.f32 %v544, %v716
      %v720 = vmul.f32 %v545, %v716
      %v721 = vmul.f32 %v548, %v716
      %v722 = vmul.f32 %v549, %v716
      %v723 = vmul.f32 %v552, %v716
      %v724 = vmul.f32 %v553, %v716
      %v725 = vmul.f32 %v556, %v716
      %v726 = vmul.f32 %v557, %v716
      %v727 = vmul.f32 %v560, %v716
      %v728 = vmul.f32 %v561, %v716
      %v729 = vmul.f32 %v564, %v716
      %v730 = vmul.f32 %v565, %v716
      %v731 = vmul.f32 %v568, %v716
      %v732 = vmul.f32 %v569, %v716
      %v733 = vmul.f32 %v572, %v716
      %v734 = vmul.f32 %v573, %v716
      %v735 = vmul.f32 %v576, %v716
      %v736 = vmul.f32 %v577, %v716
      %v737 = vmul.f32 %v580, %v716
      %v738 = vmul.f32 %v581, %v716
      %v739 = vmul.f32 %v584, %v716
      %v740 = vmul.f32 %v585, %v716
      %v741 = vmul.f32 %v588, %v716
      %v742 = vmul.f32 %v589, %v716
      %v743 = vmul.f32 %v592, %v716
      %v744 = vmul.f32 %v593, %v716
      %v745 = vmul.f32 %v596, %v716
      %v746 = vmul.f32 %v597, %v716
      %v747 = vmul.f32 %v600, %v716
      %v748 = vmul.f32 %v601, %v716
      %vm781 = vcmask 1046528
      %v782 = vrot.slane %v717, 1
      %v783 = vrot.slane %v718, 1
      %v784 = vsel %vm781, %v782, %v783
      %v785 = vrot.slane %v719, 1
      %v786 = vrot.slane %v720, 1
      %v787 = vsel %vm781, %v785, %v786
      %v788 = vrot.slane %v721, 1
      %v789 = vrot.slane %v722, 1
      %v790 = vsel %vm781, %v788, %v789
      %v791 = vrot.slane %v723, 1
      %v792 = vrot.slane %v724, 1
      %v793 = vsel %vm781, %v791, %v792
      %v794 = vrot.slane %v725, 1
      %v795 = vrot.slane %v726, 1
      %v796 = vsel %vm781, %v794, %v795
      %v797 = vrot.slane %v727, 1
      %v798 = vrot.slane %v728, 1
      %v799 = vsel %vm781, %v797, %v798
      %v800 = vrot.slane %v729, 1
      %v801 = vrot.slane %v730, 1
      %v802 = vsel %vm781, %v800, %v801
      %v803 = vrot.slane %v731, 1
      %v804 = vrot.slane %v732, 1
      %v805 = vsel %vm781, %v803, %v804
      %v806 = vrot.slane %v733, 1
      %v807 = vrot.slane %v734, 1
      %v808 = vsel %vm781, %v806, %v807
      %v809 = vrot.slane %v735, 1
      %v810 = vrot.slane %v736, 1
      %v811 = vsel %vm781, %v809, %v810
      %v812 = vrot.slane %v737, 1
      %v813 = vrot.slane %v738, 1
      %v814 = vsel %vm781, %v812, %v813
      %v815 = vrot.slane %v739, 1
      %v816 = vrot.slane %v740, 1
      %v817 = vsel %vm781, %v815, %v816
      %v818 = vrot.slane %v741, 1
      %v819 = vrot.slane %v742, 1
      %v820 = vsel %vm781, %v818, %v819
      %v821 = vrot.slane %v743, 1
      %v822 = vrot.slane %v744, 1
      %v823 = vsel %vm781, %v821, %v822
      %v824 = vrot.slane %v745, 1
      %v825 = vrot.slane %v746, 1
      %v826 = vsel %vm781, %v824, %v825
      %v827 = vrot.slane %v747, 1
      %v828 = vrot.slane %v748, 1
      %v829 = vsel %vm781, %v827, %v828
      %v878 = vadd.f32 %v665, %v782
      %v879 = vadd.f32 %v666, %v784
      %v880 = vadd.f32 %v667, %v783
      %v881 = vadd.f32 %v668, %v785
      %v882 = vadd.f32 %v669, %v787
      %v883 = vadd.f32 %v670, %v786
      %v884 = vadd.f32 %v671, %v788
      %v885 = vadd.f32 %v672, %v790
      %v886 = vadd.f32 %v673, %v789
      %v887 = vadd.f32 %v674, %v791
      %v888 = vadd.f32 %v675, %v793
      %v889 = vadd.f32 %v676, %v792
      %v890 = vadd.f32 %v677, %v794
      %v891 = vadd.f32 %v678, %v796
      %v892 = vadd.f32 %v679, %v795
      %v893 = vadd.f32 %v680, %v797
      %v894 = vadd.f32 %v681, %v799
      %v895 = vadd.f32 %v682, %v798
      %v896 = vadd.f32 %v683, %v800
      %v897 = vadd.f32 %v684, %v802
      %v898 = vadd.f32 %v685, %v801
      %v899 = vadd.f32 %v686, %v803
      %v900 = vadd.f32 %v687, %v805
      %v901 = vadd.f32 %v688, %v804
      %v902 = vadd.f32 %v689, %v806
      %v903 = vadd.f32 %v690, %v808
      %v904 = vadd.f32 %v691, %v807
      %v905 = vadd.f32 %v692, %v809
      %v906 = vadd.f32 %v693, %v811
      %v907 = vadd.f32 %v694, %v810
      %v908 = vadd.f32 %v695, %v812
      %v909 = vadd.f32 %v696, %v814
      %v910 = vadd.f32 %v697, %v813
      %v911 = vadd.f32 %v698, %v815
      %v912 = vadd.f32 %v699, %v817
      %v913 = vadd.f32 %v700, %v816
      %v914 = vadd.f32 %v701, %v818
      %v915 = vadd.f32 %v702, %v820
      %v916 = vadd.f32 %v703, %v819
      %v917 = vadd.f32 %v704, %v821
      %v918 = vadd.f32 %v705, %v823
      %v919 = vadd.f32 %v706, %v822
      %v920 = vadd.f32 %v707, %v824
      %v921 = vadd.f32 %v708, %v826
      %v922 = vadd.f32 %v709, %v825
      %v923 = vadd.f32 %v710, %v827
      %v924 = vadd.f32 %v711, %v829
      %v925 = vadd.f32 %v712, %v828
      %v926 = vlaneseq
      %v927 = vshrl.u32 %v926, 7
      %v928 = vsub.s32 2, %v927
      %v929 = vrot.slane %v611, %v928
      %v930 = vmul.f32 %v540, %v929
      %v931 = vmul.f32 %v541, %v929
      %v932 = vmul.f32 %v542, %v929
      %v933 = vmul.f32 %v544, %v929
      %v934 = vmul.f32 %v545, %v929
      %v935 = vmul.f32 %v546, %v929
      %v936 = vmul.f32 %v548, %v929
      %v937 = vmul.f32 %v549, %v929
      %v938 = vmul.f32 %v550, %v929
      %v939 = vmul.f32 %v552, %v929
      %v940 = vmul.f32 %v553, %v929
      %v941 = vmul.f32 %v554, %v929
      %v942 = vmul.f32 %v556, %v929
      %v943 = vmul.f32 %v557, %v929
      %v944 = vmul.f32 %v558, %v929
      %v945 = vmul.f32 %v560, %v929
      %v946 = vmul.f32 %v561, %v929
      %v947 = vmul.f32 %v562, %v929
      %v948 = vmul.f32 %v564, %v929
      %v949 = vmul.f32 %v565, %v929
      %v950 = vmul.f32 %v566, %v929
      %v951 = vmul.f32 %v568, %v929
      %v952 = vmul.f32 %v569, %v929
      %v953 = vmul.f32 %v570, %v929
      %v954 = vmul.f32 %v572, %v929
      %v955 = vmul.f32 %v573, %v929
      %v956 = vmul.f32 %v574, %v929
      %v957 = vmul.f32 %v576, %v929
      %v958 = vmul.f32 %v577, %v929
      %v959 = vmul.f32 %v578, %v929
      %v960 = vmul.f32 %v580, %v929
      %v961 = vmul.f32 %v581, %v929
      %v962 = vmul.f32 %v582, %v929
      %v963 = vmul.f32 %v584, %v929
      %v964 = vmul.f32 %v585, %v929
      %v965 = vmul.f32 %v586, %v929
      %v966 = vmul.f32 %v588, %v929
      %v967 = vmul.f32 %v589, %v929
      %v968 = vmul.f32 %v590, %v929
      %v969 = vmul.f32 %v592, %v929
      %v970 = vmul.f32 %v593, %v929
      %v971 = vmul.f32 %v594, %v929
      %v972 = vmul.f32 %v596, %v929
      %v973 = vmul.f32 %v597, %v929
      %v974 = vmul.f32 %v598, %v929
      %v975 = vmul.f32 %v600, %v929
      %v976 = vmul.f32 %v601, %v929
      %v977 = vmul.f32 %v602, %v929
      %vm1026 = vcmask 1045504
      %v1027 = vrot.slane %v930, 2
      %v1028 = vrot.slane %v931, 2
      %v1029 = vsel %vm1026, %v1027, %v1028
      %v1030 = vrot.slane %v932, 2
      %v1031 = vsel %vm1026, %v1028, %v1030
      %v1032 = vrot.slane %v933, 2
      %v1033 = vrot.slane %v934, 2
      %v1034 = vsel %vm1026, %v1032, %v1033
      %v1035 = vrot.slane %v935, 2
      %v1036 = vsel %vm1026, %v1033, %v1035
      %v1037 = vrot.slane %v936, 2
      %v1038 = vrot.slane %v937, 2
      %v1039 = vsel %vm1026, %v1037, %v1038
      %v1040 = vrot.slane %v938, 2
      %v1041 = vsel %vm1026, %v1038, %v1040
      %v1042 = vrot.slane %v939, 2
      %v1043 = vrot.slane %v940, 2
      %v1044 = vsel %vm1026, %v1042, %v1043
      %v1045 = vrot.slane %v941, 2
      %v1046 = vsel %vm1026, %v1043, %v1045
      %v1047 = vrot.slane %v942, 2
      %v1048 = vrot.slane %v943, 2
      %v1049 = vsel %vm1026, %v1047, %v1048
      %v1050 = vrot.slane %v944, 2
      %v1051 = vsel %vm1026, %v1048, %v1050
      %v1052 = vrot.slane %v945, 2
      %v1053 = vrot.slane %v946, 2
      %v1054 = vsel %vm1026, %v1052, %v1053
      %v1055 = vrot.slane %v947, 2
      %v1056 = vsel %vm1026, %v1053, %v1055
      %v1057 = vrot.slane %v948, 2
      %v1058 = vrot.slane %v949, 2
      %v1059 = vsel %vm1026, %v1057, %v1058
      %v1060 = vrot.slane %v950, 2
      %v1061 = vsel %vm1026, %v1058, %v1060
      %v1062 = vrot.slane %v951, 2
      %v1063 = vrot.slane %v952, 2
      %v1064 = vsel %vm1026, %v1062, %v1063
      %v1065 = vrot.slane %v953, 2
      %v1066 = vsel %vm1026, %v1063, %v1065
      %v1067 = vrot.slane %v954, 2
      %v1068 = vrot.slane %v955, 2
      %v1069 = vsel %vm1026, %v1067, %v1068
      %v1070 = vrot.slane %v956, 2
      %v1071 = vsel %vm1026, %v1068, %v1070
      %v1072 = vrot.slane %v957, 2
      %v1073 = vrot.slane %v958, 2
      %v1074 = vsel %vm1026, %v1072, %v1073
      %v1075 = vrot.slane %v959, 2
      %v1076 = vsel %vm1026, %v1073, %v1075
      %v1077 = vrot.slane %v960, 2
      %v1078 = vrot.slane %v961, 2
      %v1079 = vsel %vm1026, %v1077, %v1078
      %v1080 = vrot.slane %v962, 2
      %v1081 = vsel %vm1026, %v1078, %v1080
      %v1082 = vrot.slane %v963, 2
      %v1083 = vrot.slane %v964, 2
      %v1084 = vsel %vm1026, %v1082, %v1083
      %v1085 = vrot.slane %v965, 2
      %v1086 = vsel %vm1026, %v1083, %v1085
      %v1087 = vrot.slane %v966, 2
      %v1088 = vrot.slane %v967, 2
      %v1089 = vsel %vm1026, %v1087, %v1088
      %v1090 = vrot.slane %v968, 2
      %v1091 = vsel %vm1026, %v1088, %v1090
      %v1092 = vrot.slane %v969, 2
      %v1093 = vrot.slane %v970, 2
      %v1094 = vsel %vm1026, %v1092, %v1093
      %v1095 = vrot.slane %v971, 2
      %v1096 = vsel %vm1026, %v1093, %v1095
      %v1097 = vrot.slane %v972, 2
      %v1098 = vrot.slane %v973, 2
      %v1099 = vsel %vm1026, %v1097, %v1098
      %v1100 = vrot.slane %v974, 2
      %v1101 = vsel %vm1026, %v1098, %v1100
      %v1102 = vrot.slane %v975, 2
      %v1103 = vrot.slane %v976, 2
      %v1104 = vsel %vm1026, %v1102, %v1103
      %v1105 = vrot.slane %v977, 2
      %v1106 = vsel %vm1026, %v1103, %v1105
      %v1155 = vadd.f32 %v878, %v1027
      %v1156 = vadd.f32 %v879, %v1029
      %v1157 = vadd.f32 %v880, %v1031
      %v1158 = vadd.f32 %v881, %v1032
      %v1159 = vadd.f32 %v882, %v1034
      %v1160 = vadd.f32 %v883, %v1036
      %v1161 = vadd.f32 %v884, %v1037
      %v1162 = vadd.f32 %v885, %v1039
      %v1163 = vadd.f32 %v886, %v1041
      %v1164 = vadd.f32 %v887, %v1042
      %v1165 = vadd.f32 %v888, %v1044
      %v1166 = vadd.f32 %v889, %v1046
      %v1167 = vadd.f32 %v890, %v1047
      %v1168 = vadd.f32 %v891, %v1049
      %v1169 = vadd.f32 %v892, %v1051
      %v1170 = vadd.f32 %v893, %v1052
      %v1171 = vadd.f32 %v894, %v1054
      %v1172 = vadd.f32 %v895, %v1056
      %v1173 = vadd.f32 %v896, %v1057
      %v1174 = vadd.f32 %v897, %v1059
      %v1175 = vadd.f32 %v898, %v1061
      %v1176 = vadd.f32 %v899, %v1062
      %v1177 = vadd.f32 %v900, %v1064
      %v1178 = vadd.f32 %v901, %v1066
      %v1179 = vadd.f32 %v902, %v1067
      %v1180 = vadd.f32 %v903, %v1069
      %v1181 = vadd.f32 %v904, %v1071
      %v1182 = vadd.f32 %v905, %v1072
      %v1183 = vadd.f32 %v906, %v1074
      %v1184 = vadd.f32 %v907, %v1076
      %v1185 = vadd.f32 %v908, %v1077
      %v1186 = vadd.f32 %v909, %v1079
      %v1187 = vadd.f32 %v910, %v1081
      %v1188 = vadd.f32 %v911, %v1082
      %v1189 = vadd.f32 %v912, %v1084
      %v1190 = vadd.f32 %v913, %v1086
      %v1191 = vadd.f32 %v914, %v1087
      %v1192 = vadd.f32 %v915, %v1089
      %v1193 = vadd.f32 %v916, %v1091
      %v1194 = vadd.f32 %v917, %v1092
      %v1195 = vadd.f32 %v918, %v1094
      %v1196 = vadd.f32 %v919, %v1096
      %v1197 = vadd.f32 %v920, %v1097
      %v1198 = vadd.f32 %v921, %v1099
      %v1199 = vadd.f32 %v922, %v1101
      %v1200 = vadd.f32 %v923, %v1102
      %v1201 = vadd.f32 %v924, %v1104
      %v1202 = vadd.f32 %v925, %v1106
      %v1203 = vlaneseq
      %v1204 = vshrl.u32 %v1203, 7
      %v1205 = vsub.s32 3, %v1204
      %v1206 = vrot.slane %v611, %v1205
      %v1207 = vmul.f32 %v543, %v1206
      %v1208 = vmul.f32 %v544, %v1206
      %v1209 = vmul.f32 %v545, %v1206
      %v1210 = vmul.f32 %v547, %v1206
      %v1211 = vmul.f32 %v548, %v1206
      %v1212 = vmul.f32 %v549, %v1206
      %v1213 = vmul.f32 %v551, %v1206
      %v1214 = vmul.f32 %v552, %v1206
      %v1215 = vmul.f32 %v553, %v1206
      %v1216 = vmul.f32 %v555, %v1206
      %v1217 = vmul.f32 %v556, %v1206
      %v1218 = vmul.f32 %v557, %v1206
      %v1219 = vmul.f32 %v559, %v1206
      %v1220 = vmul.f32 %v560, %v1206
      %v1221 = vmul.f32 %v561, %v1206
      %v1222 = vmul.f32 %v563, %v1206
      %v1223 = vmul.f32 %v564, %v1206
      %v1224 = vmul.f32 %v565, %v1206
      %v1225 = vmul.f32 %v567, %v1206
      %v1226 = vmul.f32 %v568, %v1206
      %v1227 = vmul.f32 %v569, %v1206
      %v1228 = vmul.f32 %v571, %v1206
      %v1229 = vmul.f32 %v572, %v1206
      %v1230 = vmul.f32 %v573, %v1206
      %v1231 = vmul.f32 %v575, %v1206
      %v1232 = vmul.f32 %v576, %v1206
      %v1233 = vmul.f32 %v577, %v1206
      %v1234 = vmul.f32 %v579, %v1206
      %v1235 = vmul.f32 %v580, %v1206
      %v1236 = vmul.f32 %v581, %v1206
      %v1237 = vmul.f32 %v583, %v1206
      %v1238 = vmul.f32 %v584, %v1206
      %v1239 = vmul.f32 %v585, %v1206
      %v1240 = vmul.f32 %v587, %v1206
      %v1241 = vmul.f32 %v588, %v1206
      %v1242 = vmul.f32 %v589, %v1206
      %v1243 = vmul.f32 %v591, %v1206
      %v1244 = vmul.f32 %v592, %v1206
      %v1245 = vmul.f32 %v593, %v1206
      %v1246 = vmul.f32 %v595, %v1206
      %v1247 = vmul.f32 %v596, %v1206
      %v1248 = vmul.f32 %v597, %v1206
      %v1249 = vmul.f32 %v599, %v1206
      %v1250 = vmul.f32 %v600, %v1206
      %v1251 = vmul.f32 %v601, %v1206
      %v1252 = vmul.f32 %v603, %v1206
      %v1253 = vmul.f32 %v604, %v1206
      %v1254 = vmul.f32 %v605, %v1206
      %v1255 = vadd.f32 %v1155, %v1207
      %v1256 = vadd.f32 %v1156, %v1208
      %v1257 = vadd.f32 %v1157, %v1209
      %v1258 = vadd.f32 %v1158, %v1210
      %v1259 = vadd.f32 %v1159, %v1211
      %v1260 = vadd.f32 %v1160, %v1212
      %v1261 = vadd.f32 %v1161, %v1213
      %v1262 = vadd.f32 %v1162, %v1214
      %v1263 = vadd.f32 %v1163, %v1215
      %v1264 = vadd.f32 %v1164, %v1216
      %v1265 = vadd.f32 %v1165, %v1217
      %v1266 = vadd.f32 %v1166, %v1218
      %v1267 = vadd.f32 %v1167, %v1219
      %v1268 = vadd.f32 %v1168, %v1220
      %v1269 = vadd.f32 %v1169, %v1221
      %v1270 = vadd.f32 %v1170, %v1222
      %v1271 = vadd.f32 %v1171, %v1223
      %v1272 = vadd.f32 %v1172, %v1224
      %v1273 = vadd.f32 %v1173, %v1225
      %v1274 = vadd.f32 %v1174, %v1226
      %v1275 = vadd.f32 %v1175, %v1227
      %v1276 = vadd.f32 %v1176, %v1228
      %v1277 = vadd.f32 %v1177, %v1229
      %v1278 = vadd.f32 %v1178, %v1230
      %v1279 = vadd.f32 %v1179, %v1231
      %v1280 = vadd.f32 %v1180, %v1232
      %v1281 = vadd.f32 %v1181, %v1233
      %v1282 = vadd.f32 %v1182, %v1234
      %v1283 = vadd.f32 %v1183, %v1235
      %v1284 = vadd.f32 %v1184, %v1236
      %v1285 = vadd.f32 %v1185, %v1237
      %v1286 = vadd.f32 %v1186, %v1238
      %v1287 = vadd.f32 %v1187, %v1239
      %v1288 = vadd.f32 %v1188, %v1240
      %v1289 = vadd.f32 %v1189, %v1241
      %v1290 = vadd.f32 %v1190, %v1242
      %v1291 = vadd.f32 %v1191, %v1243
      %v1292 = vadd.f32 %v1192, %v1244
      %v1293 = vadd.f32 %v1193, %v1245
      %v1294 = vadd.f32 %v1194, %v1246
      %v1295 = vadd.f32 %v1195, %v1247
      %v1296 = vadd.f32 %v1196, %v1248
      %v1297 = vadd.f32 %v1197, %v1249
      %v1298 = vadd.f32 %v1198, %v1250
      %v1299 = vadd.f32 %v1199, %v1251
      %v1300 = vadd.f32 %v1200, %v1252
      %v1301 = vadd.f32 %v1201, %v1253
      %v1302 = vadd.f32 %v1202, %v1254
      %v1303 = vlaneseq
      %v1304 = vshrl.u32 %v1303, 7
      %v1305 = vsub.s32 4, %v1304
      %v1306 = vrot.slane %v611, %v1305
      %v1307 = vmul.f32 %v544, %v1306
      %v1308 = vmul.f32 %v545, %v1306
      %v1309 = vmul.f32 %v548, %v1306
      %v1310 = vmul.f32 %v549, %v1306
      %v1311 = vmul.f32 %v552, %v1306
      %v1312 = vmul.f32 %v553, %v1306
      %v1313 = vmul.f32 %v556, %v1306
      %v1314 = vmul.f32 %v557, %v1306
      %v1315 = vmul.f32 %v560, %v1306
      %v1316 = vmul.f32 %v561, %v1306
      %v1317 = vmul.f32 %v564, %v1306
      %v1318 = vmul.f32 %v565, %v1306
      %v1319 = vmul.f32 %v568, %v1306
      %v1320 = vmul.f32 %v569, %v1306
      %v1321 = vmul.f32 %v572, %v1306
      %v1322 = vmul.f32 %v573, %v1306
      %v1323 = vmul.f32 %v576, %v1306
      %v1324 = vmul.f32 %v577, %v1306
      %v1325 = vmul.f32 %v580, %v1306
      %v1326 = vmul.f32 %v581, %v1306
      %v1327 = vmul.f32 %v584, %v1306
      %v1328 = vmul.f32 %v585, %v1306
      %v1329 = vmul.f32 %v588, %v1306
      %v1330 = vmul.f32 %v589, %v1306
      %v1331 = vmul.f32 %v592, %v1306
      %v1332 = vmul.f32 %v593, %v1306
      %v1333 = vmul.f32 %v596, %v1306
      %v1334 = vmul.f32 %v597, %v1306
      %v1335 = vmul.f32 %v600, %v1306
      %v1336 = vmul.f32 %v601, %v1306
      %v1337 = vmul.f32 %v604, %v1306
      %v1338 = vmul.f32 %v605, %v1306
      %v1371 = vrot.slane %v1307, 1
      %v1372 = vrot.slane %v1308, 1
      %v1373 = vsel %vm781, %v1371, %v1372
      %v1374 = vrot.slane %v1309, 1
      %v1375 = vrot.slane %v1310, 1
      %v1376 = vsel %vm781, %v1374, %v1375
      %v1377 = vrot.slane %v1311, 1
      %v1378 = vrot.slane %v1312, 1
      %v1379 = vsel %vm781, %v1377, %v1378
      %v1380 = vrot.slane %v1313, 1
      %v1381 = vrot.slane %v1314, 1
      %v1382 = vsel %vm781, %v1380, %v1381
      %v1383 = vrot.slane %v1315, 1
      %v1384 = vrot.slane %v1316, 1
      %v1385 = vsel %vm781, %v1383, %v1384
      %v1386 = vrot.slane %v1317, 1
      %v1387 = vrot.slane %v1318, 1
      %v1388 = vsel %vm781, %v1386, %v1387
      %v1389 = vrot.slane %v1319, 1
      %v1390 = vrot.slane %v1320, 1
      %v1391 = vsel %vm781, %v1389, %v1390
      %v1392 = vrot.slane %v1321, 1
      %v1393 = vrot.slane %v1322, 1
      %v1394 = vsel %vm781, %v1392, %v1393
      %v1395 = vrot.slane %v1323, 1
      %v1396 = vrot.slane %v1324, 1
      %v1397 = vsel %vm781, %v1395, %v1396
      %v1398 = vrot.slane %v1325, 1
      %v1399 = vrot.slane %v1326, 1
      %v1400 = vsel %vm781, %v1398, %v1399
      %v1401 = vrot.slane %v1327, 1
      %v1402 = vrot.slane %v1328, 1
      %v1403 = vsel %vm781, %v1401, %v1402
      %v1404 = vrot.slane %v1329, 1
      %v1405 = vrot.slane %v1330, 1
      %v1406 = vsel %vm781, %v1404, %v1405
      %v1407 = vrot.slane %v1331, 1
      %v1408 = vrot.slane %v1332, 1
      %v1409 = vsel %vm781, %v1407, %v1408
      %v1410 = vrot.slane %v1333, 1
      %v1411 = vrot.slane %v1334, 1
      %v1412 = vsel %vm781, %v1410, %v1411
      %v1413 = vrot.slane %v1335, 1
      %v1414 = vrot.slane %v1336, 1
      %v1415 = vsel %vm781, %v1413, %v1414
      %v1416 = vrot.slane %v1337, 1
      %v1417 = vrot.slane %v1338, 1
      %v1418 = vsel %vm781, %v1416, %v1417
      %v1467 = vadd.f32 %v1255, %v1371
      %v1468 = vadd.f32 %v1256, %v1373
      %v1469 = vadd.f32 %v1257, %v1372
      %v1470 = vadd.f32 %v1258, %v1374
      %v1471 = vadd.f32 %v1259, %v1376
      %v1472 = vadd.f32 %v1260, %v1375
      %v1473 = vadd.f32 %v1261, %v1377
      %v1474 = vadd.f32 %v1262, %v1379
      %v1475 = vadd.f32 %v1263, %v1378
      %v1476 = vadd.f32 %v1264, %v1380
      %v1477 = vadd.f32 %v1265, %v1382
      %v1478 = vadd.f32 %v1266, %v1381
      %v1479 = vadd.f32 %v1267, %v1383
      %v1480 = vadd.f32 %v1268, %v1385
      %v1481 = vadd.f32 %v1269, %v1384
      %v1482 = vadd.f32 %v1270, %v1386
      %v1483 = vadd.f32 %v1271, %v1388
      %v1484 = vadd.f32 %v1272, %v1387
      %v1485 = vadd.f32 %v1273, %v1389
      %v1486 = vadd.f32 %v1274, %v1391
      %v1487 = vadd.f32 %v1275, %v1390
      %v1488 = vadd.f32 %v1276, %v1392
      %v1489 = vadd.f32 %v1277, %v1394
      %v1490 = vadd.f32 %v1278, %v1393
      %v1491 = vadd.f32 %v1279, %v1395
      %v1492 = vadd.f32 %v1280, %v1397
      %v1493 = vadd.f32 %v1281, %v1396
      %v1494 = vadd.f32 %v1282, %v1398
      %v1495 = vadd.f32 %v1283, %v1400
      %v1496 = vadd.f32 %v1284, %v1399
      %v1497 = vadd.f32 %v1285, %v1401
      %v1498 = vadd.f32 %v1286, %v1403
      %v1499 = vadd.f32 %v1287, %v1402
      %v1500 = vadd.f32 %v1288, %v1404
      %v1501 = vadd.f32 %v1289, %v1406
      %v1502 = vadd.f32 %v1290, %v1405
      %v1503 = vadd.f32 %v1291, %v1407
      %v1504 = vadd.f32 %v1292, %v1409
      %v1505 = vadd.f32 %v1293, %v1408
      %v1506 = vadd.f32 %v1294, %v1410
      %v1507 = vadd.f32 %v1295, %v1412
      %v1508 = vadd.f32 %v1296, %v1411
      %v1509 = vadd.f32 %v1297, %v1413
      %v1510 = vadd.f32 %v1298, %v1415
      %v1511 = vadd.f32 %v1299, %v1414
      %v1512 = vadd.f32 %v1300, %v1416
      %v1513 = vadd.f32 %v1301, %v1418
      %v1514 = vadd.f32 %v1302, %v1417
      %v1515 = vlaneseq
      %v1516 = vshrl.u32 %v1515, 7
      %v1517 = vsub.s32 5, %v1516
      %v1518 = vrot.slane %v611, %v1517
      %v1519 = vmul.f32 %v544, %v1518
      %v1520 = vmul.f32 %v545, %v1518
      %v1521 = vmul.f32 %v546, %v1518
      %v1522 = vmul.f32 %v548, %v1518
      %v1523 = vmul.f32 %v549, %v1518
      %v1524 = vmul.f32 %v550, %v1518
      %v1525 = vmul.f32 %v552, %v1518
      %v1526 = vmul.f32 %v553, %v1518
      %v1527 = vmul.f32 %v554, %v1518
      %v1528 = vmul.f32 %v556, %v1518
      %v1529 = vmul.f32 %v557, %v1518
      %v1530 = vmul.f32 %v558, %v1518
      %v1531 = vmul.f32 %v560, %v1518
      %v1532 = vmul.f32 %v561, %v1518
      %v1533 = vmul.f32 %v562, %v1518
      %v1534 = vmul.f32 %v564, %v1518
      %v1535 = vmul.f32 %v565, %v1518
      %v1536 = vmul.f32 %v566, %v1518
      %v1537 = vmul.f32 %v568, %v1518
      %v1538 = vmul.f32 %v569, %v1518
      %v1539 = vmul.f32 %v570, %v1518
      %v1540 = vmul.f32 %v572, %v1518
      %v1541 = vmul.f32 %v573, %v1518
      %v1542 = vmul.f32 %v574, %v1518
      %v1543 = vmul.f32 %v576, %v1518
      %v1544 = vmul.f32 %v577, %v1518
      %v1545 = vmul.f32 %v578, %v1518
      %v1546 = vmul.f32 %v580, %v1518
      %v1547 = vmul.f32 %v581, %v1518
      %v1548 = vmul.f32 %v582, %v1518
      %v1549 = vmul.f32 %v584, %v1518
      %v1550 = vmul.f32 %v585, %v1518
      %v1551 = vmul.f32 %v586, %v1518
      %v1552 = vmul.f32 %v588, %v1518
      %v1553 = vmul.f32 %v589, %v1518
      %v1554 = vmul.f32 %v590, %v1518
      %v1555 = vmul.f32 %v592, %v1518
      %v1556 = vmul.f32 %v593, %v1518
      %v1557 = vmul.f32 %v594, %v1518
      %v1558 = vmul.f32 %v596, %v1518
      %v1559 = vmul.f32 %v597, %v1518
      %v1560 = vmul.f32 %v598, %v1518
      %v1561 = vmul.f32 %v600, %v1518
      %v1562 = vmul.f32 %v601, %v1518
      %v1563 = vmul.f32 %v602, %v1518
      %v1564 = vmul.f32 %v604, %v1518
      %v1565 = vmul.f32 %v605, %v1518
      %v1566 = vmul.f32 %v606, %v1518
      %v1615 = vrot.slane %v1519, 2
      %v1616 = vrot.slane %v1520, 2
      %v1617 = vsel %vm1026, %v1615, %v1616
      %v1618 = vrot.slane %v1521, 2
      %v1619 = vsel %vm1026, %v1616, %v1618
      %v1620 = vrot.slane %v1522, 2
      %v1621 = vrot.slane %v1523, 2
      %v1622 = vsel %vm1026, %v1620, %v1621
      %v1623 = vrot.slane %v1524, 2
      %v1624 = vsel %vm1026, %v1621, %v1623
      %v1625 = vrot.slane %v1525, 2
      %v1626 = vrot.slane %v1526, 2
      %v1627 = vsel %vm1026, %v1625, %v1626
      %v1628 = vrot.slane %v1527, 2
      %v1629 = vsel %vm1026, %v1626, %v1628
      %v1630 = vrot.slane %v1528, 2
      %v1631 = vrot.slane %v1529, 2
      %v1632 = vsel %vm1026, %v1630, %v1631
      %v1633 = vrot.slane %v1530, 2
      %v1634 = vsel %vm1026, %v1631, %v1633
      %v1635 = vrot.slane %v1531, 2
      %v1636 = vrot.slane %v1532, 2
      %v1637 = vsel %vm1026, %v1635, %v1636
      %v1638 = vrot.slane %v1533, 2
      %v1639 = vsel %vm1026, %v1636, %v1638
      %v1640 = vrot.slane %v1534, 2
      %v1641 = vrot.slane %v1535, 2
      %v1642 = vsel %vm1026, %v1640, %v1641
      %v1643 = vrot.slane %v1536, 2
      %v1644 = vsel %vm1026, %v1641, %v1643
      %v1645 = vrot.slane %v1537, 2
      %v1646 = vrot.slane %v1538, 2
      %v1647 = vsel %vm1026, %v1645, %v1646
      %v1648 = vrot.slane %v1539, 2
      %v1649 = vsel %vm1026, %v1646, %v1648
      %v1650 = vrot.slane %v1540, 2
      %v1651 = vrot.slane %v1541, 2
      %v1652 = vsel %vm1026, %v1650, %v1651
      %v1653 = vrot.slane %v1542, 2
      %v1654 = vsel %vm1026, %v1651, %v1653
      %v1655 = vrot.slane %v1543, 2
      %v1656 = vrot.slane %v1544, 2
      %v1657 = vsel %vm1026, %v1655, %v1656
      %v1658 = vrot.slane %v1545, 2
      %v1659 = vsel %vm1026, %v1656, %v1658
      %v1660 = vrot.slane %v1546, 2
      %v1661 = vrot.slane %v1547, 2
      %v1662 = vsel %vm1026, %v1660, %v1661
      %v1663 = vrot.slane %v1548, 2
      %v1664 = vsel %vm1026, %v1661, %v1663
      %v1665 = vrot.slane %v1549, 2
      %v1666 = vrot.slane %v1550, 2
      %v1667 = vsel %vm1026, %v1665, %v1666
      %v1668 = vrot.slane %v1551, 2
      %v1669 = vsel %vm1026, %v1666, %v1668
      %v1670 = vrot.slane %v1552, 2
      %v1671 = vrot.slane %v1553, 2
      %v1672 = vsel %vm1026, %v1670, %v1671
      %v1673 = vrot.slane %v1554, 2
      %v1674 = vsel %vm1026, %v1671, %v1673
      %v1675 = vrot.slane %v1555, 2
      %v1676 = vrot.slane %v1556, 2
      %v1677 = vsel %vm1026, %v1675, %v1676
      %v1678 = vrot.slane %v1557, 2
      %v1679 = vsel %vm1026, %v1676, %v1678
      %v1680 = vrot.slane %v1558, 2
      %v1681 = vrot.slane %v1559, 2
      %v1682 = vsel %vm1026, %v1680, %v1681
      %v1683 = vrot.slane %v1560, 2
      %v1684 = vsel %vm1026, %v1681, %v1683
      %v1685 = vrot.slane %v1561, 2
      %v1686 = vrot.slane %v1562, 2
      %v1687 = vsel %vm1026, %v1685, %v1686
      %v1688 = vrot.slane %v1563, 2
      %v1689 = vsel %vm1026, %v1686, %v1688
      %v1690 = vrot.slane %v1564, 2
      %v1691 = vrot.slane %v1565, 2
      %v1692 = vsel %vm1026, %v1690, %v1691
      %v1693 = vrot.slane %v1566, 2
      %v1694 = vsel %vm1026, %v1691, %v1693
      %v1743 = vadd.f32 %v1467, %v1615
      %v1744 = vadd.f32 %v1468, %v1617
      %v1745 = vadd.f32 %v1469, %v1619
      %v1746 = vadd.f32 %v1470, %v1620
      %v1747 = vadd.f32 %v1471, %v1622
      %v1748 = vadd.f32 %v1472, %v1624
      %v1749 = vadd.f32 %v1473, %v1625
      %v1750 = vadd.f32 %v1474, %v1627
      %v1751 = vadd.f32 %v1475, %v1629
      %v1752 = vadd.f32 %v1476, %v1630
      %v1753 = vadd.f32 %v1477, %v1632
      %v1754 = vadd.f32 %v1478, %v1634
      %v1755 = vadd.f32 %v1479, %v1635
      %v1756 = vadd.f32 %v1480, %v1637
      %v1757 = vadd.f32 %v1481, %v1639
      %v1758 = vadd.f32 %v1482, %v1640
      %v1759 = vadd.f32 %v1483, %v1642
      %v1760 = vadd.f32 %v1484, %v1644
      %v1761 = vadd.f32 %v1485, %v1645
      %v1762 = vadd.f32 %v1486, %v1647
      %v1763 = vadd.f32 %v1487, %v1649
      %v1764 = vadd.f32 %v1488, %v1650
      %v1765 = vadd.f32 %v1489, %v1652
      %v1766 = vadd.f32 %v1490, %v1654
      %v1767 = vadd.f32 %v1491, %v1655
      %v1768 = vadd.f32 %v1492, %v1657
      %v1769 = vadd.f32 %v1493, %v1659
      %v1770 = vadd.f32 %v1494, %v1660
      %v1771 = vadd.f32 %v1495, %v1662
      %v1772 = vadd.f32 %v1496, %v1664
      %v1773 = vadd.f32 %v1497, %v1665
      %v1774 = vadd.f32 %v1498, %v1667
      %v1775 = vadd.f32 %v1499, %v1669
      %v1776 = vadd.f32 %v1500, %v1670
      %v1777 = vadd.f32 %v1501, %v1672
      %v1778 = vadd.f32 %v1502, %v1674
      %v1779 = vadd.f32 %v1503, %v1675
      %v1780 = vadd.f32 %v1504, %v1677
      %v1781 = vadd.f32 %v1505, %v1679
      %v1782 = vadd.f32 %v1506, %v1680
      %v1783 = vadd.f32 %v1507, %v1682
      %v1784 = vadd.f32 %v1508, %v1684
      %v1785 = vadd.f32 %v1509, %v1685
      %v1786 = vadd.f32 %v1510, %v1687
      %v1787 = vadd.f32 %v1511, %v1689
      %v1788 = vadd.f32 %v1512, %v1690
      %v1789 = vadd.f32 %v1513, %v1692
      %v1790 = vadd.f32 %v1514, %v1694
      %v1791 = vlaneseq
      %v1792 = vshrl.u32 %v1791, 7
      %v1793 = vsub.s32 6, %v1792
      %v1794 = vrot.slane %v611, %v1793
      %v1795 = vmul.f32 %v547, %v1794
      %v1796 = vmul.f32 %v548, %v1794
      %v1797 = vmul.f32 %v549, %v1794
      %v1798 = vmul.f32 %v551, %v1794
      %v1799 = vmul.f32 %v552, %v1794
      %v1800 = vmul.f32 %v553, %v1794
      %v1801 = vmul.f32 %v555, %v1794
      %v1802 = vmul.f32 %v556, %v1794
      %v1803 = vmul.f32 %v557, %v1794
      %v1804 = vmul.f32 %v559, %v1794
      %v1805 = vmul.f32 %v560, %v1794
      %v1806 = vmul.f32 %v561, %v1794
      %v1807 = vmul.f32 %v563, %v1794
      %v1808 = vmul.f32 %v564, %v1794
      %v1809 = vmul.f32 %v565, %v1794
      %v1810 = vmul.f32 %v567, %v1794
      %v1811 = vmul.f32 %v568, %v1794
      %v1812 = vmul.f32 %v569, %v1794
      %v1813 = vmul.f32 %v571, %v1794
      %v1814 = vmul.f32 %v572, %v1794
      %v1815 = vmul.f32 %v573, %v1794
      %v1816 = vmul.f32 %v575, %v1794
      %v1817 = vmul.f32 %v576, %v1794
      %v1818 = vmul.f32 %v577, %v1794
      %v1819 = vmul.f32 %v579, %v1794
      %v1820 = vmul.f32 %v580, %v1794
      %v1821 = vmul.f32 %v581, %v1794
      %v1822 = vmul.f32 %v583, %v1794
      %v1823 = vmul.f32 %v584, %v1794
      %v1824 = vmul.f32 %v585, %v1794
      %v1825 = vmul.f32 %v587, %v1794
      %v1826 = vmul.f32 %v588, %v1794
      %v1827 = vmul.f32 %v589, %v1794
      %v1828 = vmul.f32 %v591, %v1794
      %v1829 = vmul.f32 %v592, %v1794
      %v1830 = vmul.f32 %v593, %v1794
      %v1831 = vmul.f32 %v595, %v1794
      %v1832 = vmul.f32 %v596, %v1794
      %v1833 = vmul.f32 %v597, %v1794
      %v1834 = vmul.f32 %v599, %v1794
      %v1835 = vmul.f32 %v600, %v1794
      %v1836 = vmul.f32 %v601, %v1794
      %v1837 = vmul.f32 %v603, %v1794
      %v1838 = vmul.f32 %v604, %v1794
      %v1839 = vmul.f32 %v605, %v1794
      %v1840 = vmul.f32 %v607, %v1794
      %v1841 = vmul.f32 %v608, %v1794
      %v1842 = vmul.f32 %v609, %v1794
      %v1843 = vadd.f32 %v1743, %v1795
      %v1844 = vadd.f32 %v1744, %v1796
      %v1845 = vadd.f32 %v1745, %v1797
      %v1846 = vadd.f32 %v1746, %v1798
      %v1847 = vadd.f32 %v1747, %v1799
      %v1848 = vadd.f32 %v1748, %v1800
      %v1849 = vadd.f32 %v1749, %v1801
      %v1850 = vadd.f32 %v1750, %v1802
      %v1851 = vadd.f32 %v1751, %v1803
      %v1852 = vadd.f32 %v1752, %v1804
      %v1853 = vadd.f32 %v1753, %v1805
      %v1854 = vadd.f32 %v1754, %v1806
      %v1855 = vadd.f32 %v1755, %v1807
      %v1856 = vadd.f32 %v1756, %v1808
      %v1857 = vadd.f32 %v1757, %v1809
      %v1858 = vadd.f32 %v1758, %v1810
      %v1859 = vadd.f32 %v1759, %v1811
      %v1860 = vadd.f32 %v1760, %v1812
      %v1861 = vadd.f32 %v1761, %v1813
      %v1862 = vadd.f32 %v1762, %v1814
      %v1863 = vadd.f32 %v1763, %v1815
      %v1864 = vadd.f32 %v1764, %v1816
      %v1865 = vadd.f32 %v1765, %v1817
      %v1866 = vadd.f32 %v1766, %v1818
      %v1867 = vadd.f32 %v1767, %v1819
      %v1868 = vadd.f32 %v1768, %v1820
      %v1869 = vadd.f32 %v1769, %v1821
      %v1870 = vadd.f32 %v1770, %v1822
      %v1871 = vadd.f32 %v1771, %v1823
      %v1872 = vadd.f32 %v1772, %v1824
      %v1873 = vadd.f32 %v1773, %v1825
      %v1874 = vadd.f32 %v1774, %v1826
      %v1875 = vadd.f32 %v1775, %v1827
      %v1876 = vadd.f32 %v1776, %v1828
      %v1877 = vadd.f32 %v1777, %v1829
      %v1878 = vadd.f32 %v1778, %v1830
      %v1879 = vadd.f32 %v1779, %v1831
      %v1880 = vadd.f32 %v1780, %v1832
      %v1881 = vadd.f32 %v1781, %v1833
      %v1882 = vadd.f32 %v1782, %v1834
      %v1883 = vadd.f32 %v1783, %v1835
      %v1884 = vadd.f32 %v1784, %v1836
      %v1885 = vadd.f32 %v1785, %v1837
      %v1886 = vadd.f32 %v1786, %v1838
      %v1887 = vadd.f32 %v1787, %v1839
      %v1888 = vadd.f32 %v1788, %v1840
      %v1889 = vadd.f32 %v1789, %v1841
      %v1890 = vadd.f32 %v1790, %v1842
      %v1891 = vlaneseq
      %v1892 = vshrl.u32 %v1891, 7
      %v1893 = vsub.s32 7, %v1892
      %v1894 = vrot.slane %v611, %v1893
      %v1895 = vmul.f32 %v548, %v1894
      %v1896 = vmul.f32 %v549, %v1894
      %v1897 = vmul.f32 %v552, %v1894
      %v1898 = vmul.f32 %v553, %v1894
      %v1899 = vmul.f32 %v556, %v1894
      %v1900 = vmul.f32 %v557, %v1894
      %v1901 = vmul.f32 %v560, %v1894
      %v1902 = vmul.f32 %v561, %v1894
      %v1903 = vmul.f32 %v564, %v1894
      %v1904 = vmul.f32 %v565, %v1894
      %v1905 = vmul.f32 %v568, %v1894
      %v1906 = vmul.f32 %v569, %v1894
      %v1907 = vmul.f32 %v572, %v1894
      %v1908 = vmul.f32 %v573, %v1894
      %v1909 = vmul.f32 %v576, %v1894
      %v1910 = vmul.f32 %v577, %v1894
      %v1911 = vmul.f32 %v580, %v1894
      %v1912 = vmul.f32 %v581, %v1894
      %v1913 = vmul.f32 %v584, %v1894
      %v1914 = vmul.f32 %v585, %v1894
      %v1915 = vmul.f32 %v588, %v1894
      %v1916 = vmul.f32 %v589, %v1894
      %v1917 = vmul.f32 %v592, %v1894
      %v1918 = vmul.f32 %v593, %v1894
      %v1919 = vmul.f32 %v596, %v1894
      %v1920 = vmul.f32 %v597, %v1894
      %v1921 = vmul.f32 %v600, %v1894
      %v1922 = vmul.f32 %v601, %v1894
      %v1923 = vmul.f32 %v604, %v1894
      %v1924 = vmul.f32 %v605, %v1894
      %v1925 = vmul.f32 %v608, %v1894
      %v1926 = vmul.f32 %v609, %v1894
      %v1959 = vrot.slane %v1895, 1
      %v1960 = vrot.slane %v1896, 1
      %v1961 = vsel %vm781, %v1959, %v1960
      %v1962 = vrot.slane %v1897, 1
      %v1963 = vrot.slane %v1898, 1
      %v1964 = vsel %vm781, %v1962, %v1963
      %v1965 = vrot.slane %v1899, 1
      %v1966 = vrot.slane %v1900, 1
      %v1967 = vsel %vm781, %v1965, %v1966
      %v1968 = vrot.slane %v1901, 1
      %v1969 = vrot.slane %v1902, 1
      %v1970 = vsel %vm781, %v1968, %v1969
      %v1971 = vrot.slane %v1903, 1
      %v1972 = vrot.slane %v1904, 1
      %v1973 = vsel %vm781, %v1971, %v1972
      %v1974 = vrot.slane %v1905, 1
      %v1975 = vrot.slane %v1906, 1
      %v1976 = vsel %vm781, %v1974, %v1975
      %v1977 = vrot.slane %v1907, 1
      %v1978 = vrot.slane %v1908, 1
      %v1979 = vsel %vm781, %v1977, %v1978
      %v1980 = vrot.slane %v1909, 1
      %v1981 = vrot.slane %v1910, 1
      %v1982 = vsel %vm781, %v1980, %v1981
      %v1983 = vrot.slane %v1911, 1
      %v1984 = vrot.slane %v1912, 1
      %v1985 = vsel %vm781, %v1983, %v1984
      %v1986 = vrot.slane %v1913, 1
      %v1987 = vrot.slane %v1914, 1
      %v1988 = vsel %vm781, %v1986, %v1987
      %v1989 = vrot.slane %v1915, 1
      %v1990 = vrot.slane %v1916, 1
      %v1991 = vsel %vm781, %v1989, %v1990
      %v1992 = vrot.slane %v1917, 1
      %v1993 = vrot.slane %v1918, 1
      %v1994 = vsel %vm781, %v1992, %v1993
      %v1995 = vrot.slane %v1919, 1
      %v1996 = vrot.slane %v1920, 1
      %v1997 = vsel %vm781, %v1995, %v1996
      %v1998 = vrot.slane %v1921, 1
      %v1999 = vrot.slane %v1922, 1
      %v2000 = vsel %vm781, %v1998, %v1999
      %v2001 = vrot.slane %v1923, 1
      %v2002 = vrot.slane %v1924, 1
      %v2003 = vsel %vm781, %v2001, %v2002
      %v2004 = vrot.slane %v1925, 1
      %v2005 = vrot.slane %v1926, 1
      %v2006 = vsel %vm781, %v2004, %v2005
      %v2055 = vadd.f32 %v1843, %v1959
      %v2056 = vadd.f32 %v1844, %v1961
      %v2057 = vadd.f32 %v1845, %v1960
      %v2058 = vadd.f32 %v1846, %v1962
      %v2059 = vadd.f32 %v1847, %v1964
      %v2060 = vadd.f32 %v1848, %v1963
      %v2061 = vadd.f32 %v1849, %v1965
      %v2062 = vadd.f32 %v1850, %v1967
      %v2063 = vadd.f32 %v1851, %v1966
      %v2064 = vadd.f32 %v1852, %v1968
      %v2065 = vadd.f32 %v1853, %v1970
      %v2066 = vadd.f32 %v1854, %v1969
      %v2067 = vadd.f32 %v1855, %v1971
      %v2068 = vadd.f32 %v1856, %v1973
      %v2069 = vadd.f32 %v1857, %v1972
      %v2070 = vadd.f32 %v1858, %v1974
      %v2071 = vadd.f32 %v1859, %v1976
      %v2072 = vadd.f32 %v1860, %v1975
      %v2073 = vadd.f32 %v1861, %v1977
      %v2074 = vadd.f32 %v1862, %v1979
      %v2075 = vadd.f32 %v1863, %v1978
      %v2076 = vadd.f32 %v1864, %v1980
      %v2077 = vadd.f32 %v1865, %v1982
      %v2078 = vadd.f32 %v1866, %v1981
      %v2079 = vadd.f32 %v1867, %v1983
      %v2080 = vadd.f32 %v1868, %v1985
      %v2081 = vadd.f32 %v1869, %v1984
      %v2082 = vadd.f32 %v1870, %v1986
      %v2083 = vadd.f32 %v1871, %v1988
      %v2084 = vadd.f32 %v1872, %v1987
      %v2085 = vadd.f32 %v1873, %v1989
      %v2086 = vadd.f32 %v1874, %v1991
      %v2087 = vadd.f32 %v1875, %v1990
      %v2088 = vadd.f32 %v1876, %v1992
      %v2089 = vadd.f32 %v1877, %v1994
      %v2090 = vadd.f32 %v1878, %v1993
      %v2091 = vadd.f32 %v1879, %v1995
      %v2092 = vadd.f32 %v1880, %v1997
      %v2093 = vadd.f32 %v1881, %v1996
      %v2094 = vadd.f32 %v1882, %v1998
      %v2095 = vadd.f32 %v1883, %v2000
      %v2096 = vadd.f32 %v1884, %v1999
      %v2097 = vadd.f32 %v1885, %v2001
      %v2098 = vadd.f32 %v1886, %v2003
      %v2099 = vadd.f32 %v1887, %v2002
      %v2100 = vadd.f32 %v1888, %v2004
      %v2101 = vadd.f32 %v1889, %v2006
      %v2102 = vadd.f32 %v1890, %v2005
      %v2103 = vlaneseq
      %v2104 = vshrl.u32 %v2103, 7
      %v2105 = vsub.s32 0, %v2104
      %v2106 = vrot.slane %v612, %v2105
      %v2107 = vmul.f32 %v548, %v2106
      %v2108 = vmul.f32 %v549, %v2106
      %v2109 = vmul.f32 %v550, %v2106
      %v2110 = vmul.f32 %v552, %v2106
      %v2111 = vmul.f32 %v553, %v2106
      %v2112 = vmul.f32 %v554, %v2106
      %v2113 = vmul.f32 %v556, %v2106
      %v2114 = vmul.f32 %v557, %v2106
      %v2115 = vmul.f32 %v558, %v2106
      %v2116 = vmul.f32 %v560, %v2106
      %v2117 = vmul.f32 %v561, %v2106
      %v2118 = vmul.f32 %v562, %v2106
      %v2119 = vmul.f32 %v564, %v2106
      %v2120 = vmul.f32 %v565, %v2106
      %v2121 = vmul.f32 %v566, %v2106
      %v2122 = vmul.f32 %v568, %v2106
      %v2123 = vmul.f32 %v569, %v2106
      %v2124 = vmul.f32 %v570, %v2106
      %v2125 = vmul.f32 %v572, %v2106
      %v2126 = vmul.f32 %v573, %v2106
      %v2127 = vmul.f32 %v574, %v2106
      %v2128 = vmul.f32 %v576, %v2106
      %v2129 = vmul.f32 %v577, %v2106
      %v2130 = vmul.f32 %v578, %v2106
      %v2131 = vmul.f32 %v580, %v2106
      %v2132 = vmul.f32 %v581, %v2106
      %v2133 = vmul.f32 %v582, %v2106
      %v2134 = vmul.f32 %v584, %v2106
      %v2135 = vmul.f32 %v585, %v2106
      %v2136 = vmul.f32 %v586, %v2106
      %v2137 = vmul.f32 %v588, %v2106
      %v2138 = vmul.f32 %v589, %v2106
      %v2139 = vmul.f32 %v590, %v2106
      %v2140 = vmul.f32 %v592, %v2106
      %v2141 = vmul.f32 %v593, %v2106
      %v2142 = vmul.f32 %v594, %v2106
      %v2143 = vmul.f32 %v596, %v2106
      %v2144 = vmul.f32 %v597, %v2106
      %v2145 = vmul.f32 %v598, %v2106
      %v2146 = vmul.f32 %v600, %v2106
      %v2147 = vmul.f32 %v601, %v2106
      %v2148 = vmul.f32 %v602, %v2106
      %v2149 = vmul.f32 %v604, %v2106
      %v2150 = vmul.f32 %v605, %v2106
      %v2151 = vmul.f32 %v606, %v2106
      %v2152 = vmul.f32 %v608, %v2106
      %v2153 = vmul.f32 %v609, %v2106
      %v2154 = vmul.f32 %v610, %v2106
      %v2203 = vrot.slane %v2107, 2
      %v2204 = vrot.slane %v2108, 2
      %v2205 = vsel %vm1026, %v2203, %v2204
      %v2206 = vrot.slane %v2109, 2
      %v2207 = vsel %vm1026, %v2204, %v2206
      %v2208 = vrot.slane %v2110, 2
      %v2209 = vrot.slane %v2111, 2
      %v2210 = vsel %vm1026, %v2208, %v2209
      %v2211 = vrot.slane %v2112, 2
      %v2212 = vsel %vm1026, %v2209, %v2211
      %v2213 = vrot.slane %v2113, 2
      %v2214 = vrot.slane %v2114, 2
      %v2215 = vsel %vm1026, %v2213, %v2214
      %v2216 = vrot.slane %v2115, 2
      %v2217 = vsel %vm1026, %v2214, %v2216
      %v2218 = vrot.slane %v2116, 2
      %v2219 = vrot.slane %v2117, 2
      %v2220 = vsel %vm1026, %v2218, %v2219
      %v2221 = vrot.slane %v2118, 2
      %v2222 = vsel %vm1026, %v2219, %v2221
      %v2223 = vrot.slane %v2119, 2
      %v2224 = vrot.slane %v2120, 2
      %v2225 = vsel %vm1026, %v2223, %v2224
      %v2226 = vrot.slane %v2121, 2
      %v2227 = vsel %vm1026, %v2224, %v2226
      %v2228 = vrot.slane %v2122, 2
      %v2229 = vrot.slane %v2123, 2
      %v2230 = vsel %vm1026, %v2228, %v2229
      %v2231 = vrot.slane %v2124, 2
      %v2232 = vsel %vm1026, %v2229, %v2231
      %v2233 = vrot.slane %v2125, 2
      %v2234 = vrot.slane %v2126, 2
      %v2235 = vsel %vm1026, %v2233, %v2234
      %v2236 = vrot.slane %v2127, 2
      %v2237 = vsel %vm1026, %v2234, %v2236
      %v2238 = vrot.slane %v2128, 2
      %v2239 = vrot.slane %v2129, 2
      %v2240 = vsel %vm1026, %v2238, %v2239
      %v2241 = vrot.slane %v2130, 2
      %v2242 = vsel %vm1026, %v2239, %v2241
      %v2243 = vrot.slane %v2131, 2
      %v2244 = vrot.slane %v2132, 2
      %v2245 = vsel %vm1026, %v2243, %v2244
      %v2246 = vrot.slane %v2133, 2
      %v2247 = vsel %vm1026, %v2244, %v2246
      %v2248 = vrot.slane %v2134, 2
      %v2249 = vrot.slane %v2135, 2
      %v2250 = vsel %vm1026, %v2248, %v2249
      %v2251 = vrot.slane %v2136, 2
      %v2252 = vsel %vm1026, %v2249, %v2251
      %v2253 = vrot.slane %v2137, 2
      %v2254 = vrot.slane %v2138, 2
      %v2255 = vsel %vm1026, %v2253, %v2254
      %v2256 = vrot.slane %v2139, 2
      %v2257 = vsel %vm1026, %v2254, %v2256
      %v2258 = vrot.slane %v2140, 2
      %v2259 = vrot.slane %v2141, 2
      %v2260 = vsel %vm1026, %v2258, %v2259
      %v2261 = vrot.slane %v2142, 2
      %v2262 = vsel %vm1026, %v2259, %v2261
      %v2263 = vrot.slane %v2143, 2
      %v2264 = vrot.slane %v2144, 2
      %v2265 = vsel %vm1026, %v2263, %v2264
      %v2266 = vrot.slane %v2145, 2
      %v2267 = vsel %vm1026, %v2264, %v2266
      %v2268 = vrot.slane %v2146, 2
      %v2269 = vrot.slane %v2147, 2
      %v2270 = vsel %vm1026, %v2268, %v2269
      %v2271 = vrot.slane %v2148, 2
      %v2272 = vsel %vm1026, %v2269, %v2271
      %v2273 = vrot.slane %v2149, 2
      %v2274 = vrot.slane %v2150, 2
      %v2275 = vsel %vm1026, %v2273, %v2274
      %v2276 = vrot.slane %v2151, 2
      %v2277 = vsel %vm1026, %v2274, %v2276
      %v2278 = vrot.slane %v2152, 2
      %v2279 = vrot.slane %v2153, 2
      %v2280 = vsel %vm1026, %v2278, %v2279
      %v2281 = vrot.slane %v2154, 2
      %v2282 = vsel %vm1026, %v2279, %v2281
      %v2331 = vadd.f32 %v2055, %v2203
      %v2332 = vadd.f32 %v2056, %v2205
      %v2333 = vadd.f32 %v2057, %v2207
      %v2334 = vadd.f32 %v2058, %v2208
      %v2335 = vadd.f32 %v2059, %v2210
      %v2336 = vadd.f32 %v2060, %v2212
      %v2337 = vadd.f32 %v2061, %v2213
      %v2338 = vadd.f32 %v2062, %v2215
      %v2339 = vadd.f32 %v2063, %v2217
      %v2340 = vadd.f32 %v2064, %v2218
      %v2341 = vadd.f32 %v2065, %v2220
      %v2342 = vadd.f32 %v2066, %v2222
      %v2343 = vadd.f32 %v2067, %v2223
      %v2344 = vadd.f32 %v2068, %v2225
      %v2345 = vadd.f32 %v2069, %v2227
      %v2346 = vadd.f32 %v2070, %v2228
      %v2347 = vadd.f32 %v2071, %v2230
      %v2348 = vadd.f32 %v2072, %v2232
      %v2349 = vadd.f32 %v2073, %v2233
      %v2350 = vadd.f32 %v2074, %v2235
      %v2351 = vadd.f32 %v2075, %v2237
      %v2352 = vadd.f32 %v2076, %v2238
      %v2353 = vadd.f32 %v2077, %v2240
      %v2354 = vadd.f32 %v2078, %v2242
      %v2355 = vadd.f32 %v2079, %v2243
      %v2356 = vadd.f32 %v2080, %v2245
      %v2357 = vadd.f32 %v2081, %v2247
      %v2358 = vadd.f32 %v2082, %v2248
      %v2359 = vadd.f32 %v2083, %v2250
      %v2360 = vadd.f32 %v2084, %v2252
      %v2361 = vadd.f32 %v2085, %v2253
      %v2362 = vadd.f32 %v2086, %v2255
      %v2363 = vadd.f32 %v2087, %v2257
      %v2364 = vadd.f32 %v2088, %v2258
      %v2365 = vadd.f32 %v2089, %v2260
      %v2366 = vadd.f32 %v2090, %v2262
      %v2367 = vadd.f32 %v2091, %v2263
      %v2368 = vadd.f32 %v2092, %v2265
      %v2369 = vadd.f32 %v2093, %v2267
      %v2370 = vadd.f32 %v2094, %v2268
      %v2371 = vadd.f32 %v2095, %v2270
      %v2372 = vadd.f32 %v2096, %v2272
      %v2373 = vadd.f32 %v2097, %v2273
      %v2374 = vadd.f32 %v2098, %v2275
      %v2375 = vadd.f32 %v2099, %v2277
      %v2376 = vadd.f32 %v2100, %v2278
      %v2377 = vadd.f32 %v2101, %v2280
      %v2378 = vadd.f32 %v2102, %v2282
      %v2379 = vld [vmem:[%s4] sm:$0x1]
      %v2381 = vlaneseq
      %v2382 = vshrl.u32 %v2381, 7
      %v2383 = vsub.s32 0, %v2382
      %v2384 = vrot.slane %v2379, %v2383
      %v2386 = vadd.f32 %v2331, %v2384
      %v2387 = vadd.f32 %v2332, %v2384
      %v2388 = vadd.f32 %v2333, %v2384
      %v2389 = vadd.f32 %v2334, %v2384
      %v2390 = vadd.f32 %v2335, %v2384
      %v2391 = vadd.f32 %v2336, %v2384
      %v2392 = vadd.f32 %v2337, %v2384
      %v2393 = vadd.f32 %v2338, %v2384
      %v2394 = vadd.f32 %v2339, %v2384
      %v2395 = vadd.f32 %v2340, %v2384
      %v2396 = vadd.f32 %v2341, %v2384
      %v2397 = vadd.f32 %v2342, %v2384
      %v2398 = vadd.f32 %v2343, %v2384
      %v2399 = vadd.f32 %v2344, %v2384
      %v2400 = vadd.f32 %v2345, %v2384
      %v2401 = vadd.f32 %v2346, %v2384
      %v2402 = vadd.f32 %v2347, %v2384
      %v2403 = vadd.f32 %v2348, %v2384
      %v2404 = vadd.f32 %v2349, %v2384
      %v2405 = vadd.f32 %v2350, %v2384
      %v2406 = vadd.f32 %v2351, %v2384
      %v2407 = vadd.f32 %v2352, %v2384
      %v2408 = vadd.f32 %v2353, %v2384
      %v2409 = vadd.f32 %v2354, %v2384
      %v2410 = vadd.f32 %v2355, %v2384
      %v2411 = vadd.f32 %v2356, %v2384
      %v2412 = vadd.f32 %v2357, %v2384
      %v2413 = vadd.f32 %v2358, %v2384
      %v2414 = vadd.f32 %v2359, %v2384
      %v2415 = vadd.f32 %v2360, %v2384
      %v2416 = vadd.f32 %v2361, %v2384
      %v2417 = vadd.f32 %v2362, %v2384
      %v2418 = vadd.f32 %v2363, %v2384
      %v2419 = vadd.f32 %v2364, %v2384
      %v2420 = vadd.f32 %v2365, %v2384
      %v2421 = vadd.f32 %v2366, %v2384
      %v2422 = vadd.f32 %v2367, %v2384
      %v2423 = vadd.f32 %v2368, %v2384
      %v2424 = vadd.f32 %v2369, %v2384
      %v2425 = vadd.f32 %v2370, %v2384
      %v2426 = vadd.f32 %v2371, %v2384
      %v2427 = vadd.f32 %v2372, %v2384
      %v2428 = vadd.f32 %v2373, %v2384
      %v2429 = vadd.f32 %v2374, %v2384
      %v2430 = vadd.f32 %v2375, %v2384
      %v2431 = vadd.f32 %v2376, %v2384
      %v2432 = vadd.f32 %v2377, %v2384
      %v2433 = vadd.f32 %v2378, %v2384
      %v2434 = vmax.f32 %v2386, 0.0
      %v2435 = vmax.f32 %v2387, 0.0
      %v2436 = vmax.f32 %v2388, 0.0
      %v2437 = vmax.f32 %v2389, 0.0
      %v2438 = vmax.f32 %v2390, 0.0
      %v2439 = vmax.f32 %v2391, 0.0
      %v2440 = vmax.f32 %v2392, 0.0
      %v2441 = vmax.f32 %v2393, 0.0
      %v2442 = vmax.f32 %v2394, 0.0
      %v2443 = vmax.f32 %v2395, 0.0
      %v2444 = vmax.f32 %v2396, 0.0
      %v2445 = vmax.f32 %v2397, 0.0
      %v2446 = vmax.f32 %v2398, 0.0
      %v2447 = vmax.f32 %v2399, 0.0
      %v2448 = vmax.f32 %v2400, 0.0
      %v2449 = vmax.f32 %v2401, 0.0
      %v2450 = vmax.f32 %v2402, 0.0
      %v2451 = vmax.f32 %v2403, 0.0
      %v2452 = vmax.f32 %v2404, 0.0
      %v2453 = vmax.f32 %v2405, 0.0
      %v2454 = vmax.f32 %v2406, 0.0
      %v2455 = vmax.f32 %v2407, 0.0
      %v2456 = vmax.f32 %v2408, 0.0
      %v2457 = vmax.f32 %v2409, 0.0
      %v2458 = vmax.f32 %v2410, 0.0
      %v2459 = vmax.f32 %v2411, 0.0
      %v2460 = vmax.f32 %v2412, 0.0
      %v2461 = vmax.f32 %v2413, 0.0
      %v2462 = vmax.f32 %v2414, 0.0
      %v2463 = vmax.f32 %v2415, 0.0
      %v2464 = vmax.f32 %v2416, 0.0
      %v2465 = vmax.f32 %v2417, 0.0
      %v2466 = vmax.f32 %v2418, 0.0
      %v2467 = vmax.f32 %v2419, 0.0
      %v2468 = vmax.f32 %v2420, 0.0
      %v2469 = vmax.f32 %v2421, 0.0
      %v2470 = vmax.f32 %v2422, 0.0
      %v2471 = vmax.f32 %v2423, 0.0
      %v2472 = vmax.f32 %v2424, 0.0
      %v2473 = vmax.f32 %v2425, 0.0
      %v2474 = vmax.f32 %v2426, 0.0
      %v2475 = vmax.f32 %v2427, 0.0
      %v2476 = vmax.f32 %v2428, 0.0
      %v2477 = vmax.f32 %v2429, 0.0
      %v2478 = vmax.f32 %v2430, 0.0
      %v2479 = vmax.f32 %v2431, 0.0
      %v2480 = vmax.f32 %v2432, 0.0
      %v2481 = vmax.f32 %v2433, 0.0
      %v2482 = vmin.f32 %v2434, 6.0
      %v2483 = vmin.f32 %v2435, 6.0
      %v2484 = vmin.f32 %v2436, 6.0
      %v2485 = vmin.f32 %v2437, 6.0
      %v2486 = vmin.f32 %v2438, 6.0
      %v2487 = vmin.f32 %v2439, 6.0
      %v2488 = vmin.f32 %v2440, 6.0
      %v2489 = vmin.f32 %v2441, 6.0
      %v2490 = vmin.f32 %v2442, 6.0
      %v2491 = vmin.f32 %v2443, 6.0
      %v2492 = vmin.f32 %v2444, 6.0
      %v2493 = vmin.f32 %v2445, 6.0
      %v2494 = vmin.f32 %v2446, 6.0
      %v2495 = vmin.f32 %v2447, 6.0
      %v2496 = vmin.f32 %v2448, 6.0
      %v2497 = vmin.f32 %v2449, 6.0
      %v2498 = vmin.f32 %v2450, 6.0
      %v2499 = vmin.f32 %v2451, 6.0
      %v2500 = vmin.f32 %v2452, 6.0
      %v2501 = vmin.f32 %v2453, 6.0
      %v2502 = vmin.f32 %v2454, 6.0
      %v2503 = vmin.f32 %v2455, 6.0
      %v2504 = vmin.f32 %v2456, 6.0
      %v2505 = vmin.f32 %v2457, 6.0
      %v2506 = vmin.f32 %v2458, 6.0
      %v2507 = vmin.f32 %v2459, 6.0
      %v2508 = vmin.f32 %v2460, 6.0
      %v2509 = vmin.f32 %v2461, 6.0
      %v2510 = vmin.f32 %v2462, 6.0
      %v2511 = vmin.f32 %v2463, 6.0
      %v2512 = vmin.f32 %v2464, 6.0
      %v2513 = vmin.f32 %v2465, 6.0
      %v2514 = vmin.f32 %v2466, 6.0
      %v2515 = vmin.f32 %v2467, 6.0
      %v2516 = vmin.f32 %v2468, 6.0
      %v2517 = vmin.f32 %v2469, 6.0
      %v2518 = vmin.f32 %v2470, 6.0
      %v2519 = vmin.f32 %v2471, 6.0
      %v2520 = vmin.f32 %v2472, 6.0
      %v2521 = vmin.f32 %v2473, 6.0
      %v2522 = vmin.f32 %v2474, 6.0
      %v2523 = vmin.f32 %v2475, 6.0
      %v2524 = vmin.f32 %v2476, 6.0
      %v2525 = vmin.f32 %v2477, 6.0
      %v2526 = vmin.f32 %v2478, 6.0
      %v2527 = vmin.f32 %v2479, 6.0
      %v2528 = vmin.f32 %v2480, 6.0
      %v2529 = vmin.f32 %v2481, 6.0
      %vm2578 = vcmask 1040384
      %v2579 = vrot.slane %v2482, 7
      %v2580 = vrot.slane %v2483, 7
      %v2581 = vsel %vm2578, %v2579, %v2580
      %v2582 = vrot.slane %v2484, 7
      %v2583 = vsel %vm2578, %v2580, %v2582
      %v2584 = vrot.slane %v2485, 7
      %v2585 = vrot.slane %v2486, 7
      %v2586 = vsel %vm2578, %v2584, %v2585
      %v2587 = vrot.slane %v2487, 7
      %v2588 = vsel %vm2578, %v2585, %v2587
      %v2589 = vrot.slane %v2488, 7
      %v2590 = vrot.slane %v2489, 7
      %v2591 = vsel %vm2578, %v2589, %v2590
      %v2592 = vrot.slane %v2490, 7
      %v2593 = vsel %vm2578, %v2590, %v2592
      %v2594 = vrot.slane %v2491, 7
      %v2595 = vrot.slane %v2492, 7
      %v2596 = vsel %vm2578, %v2594, %v2595
      %v2597 = vrot.slane %v2493, 7
      %v2598 = vsel %vm2578, %v2595, %v2597
      %v2599 = vrot.slane %v2494, 7
      %v2600 = vrot.slane %v2495, 7
      %v2601 = vsel %vm2578, %v2599, %v2600
      %v2602 = vrot.slane %v2496, 7
      %v2603 = vsel %vm2578, %v2600, %v2602
      %v2604 = vrot.slane %v2497, 7
      %v2605 = vrot.slane %v2498, 7
      %v2606 = vsel %vm2578, %v2604, %v2605
      %v2607 = vrot.slane %v2499, 7
      %v2608 = vsel %vm2578, %v2605, %v2607
      %v2609 = vrot.slane %v2500, 7
      %v2610 = vrot.slane %v2501, 7
      %v2611 = vsel %vm2578, %v2609, %v2610
      %v2612 = vrot.slane %v2502, 7
      %v2613 = vsel %vm2578, %v2610, %v2612
      %v2614 = vrot.slane %v2503, 7
      %v2615 = vrot.slane %v2504, 7
      %v2616 = vsel %vm2578, %v2614, %v2615
      %v2617 = vrot.slane %v2505, 7
      %v2618 = vsel %vm2578, %v2615, %v2617
      %v2619 = vrot.slane %v2506, 7
      %v2620 = vrot.slane %v2507, 7
      %v2621 = vsel %vm2578, %v2619, %v2620
      %v2622 = vrot.slane %v2508, 7
      %v2623 = vsel %vm2578, %v2620, %v2622
      %v2624 = vrot.slane %v2509, 7
      %v2625 = vrot.slane %v2510, 7
      %v2626 = vsel %vm2578, %v2624, %v2625
      %v2627 = vrot.slane %v2511, 7
      %v2628 = vsel %vm2578, %v2625, %v2627
      %v2629 = vrot.slane %v2512, 7
      %v2630 = vrot.slane %v2513, 7
      %v2631 = vsel %vm2578, %v2629, %v2630
      %v2632 = vrot.slane %v2514, 7
      %v2633 = vsel %vm2578, %v2630, %v2632
      %v2634 = vrot.slane %v2515, 7
      %v2635 = vrot.slane %v2516, 7
      %v2636 = vsel %vm2578, %v2634, %v2635
      %v2637 = vrot.slane %v2517, 7
      %v2638 = vsel %vm2578, %v2635, %v2637
      %v2639 = vrot.slane %v2518, 7
      %v2640 = vrot.slane %v2519, 7
      %v2641 = vsel %vm2578, %v2639, %v2640
      %v2642 = vrot.slane %v2520, 7
      %v2643 = vsel %vm2578, %v2640, %v2642
      %v2644 = vrot.slane %v2521, 7
      %v2645 = vrot.slane %v2522, 7
      %v2646 = vsel %vm2578, %v2644, %v2645
      %v2647 = vrot.slane %v2523, 7
      %v2648 = vsel %vm2578, %v2645, %v2647
      %v2649 = vrot.slane %v2524, 7
      %v2650 = vrot.slane %v2525, 7
      %v2651 = vsel %vm2578, %v2649, %v2650
      %v2652 = vrot.slane %v2526, 7
      %v2653 = vsel %vm2578, %v2650, %v2652
      %v2654 = vrot.slane %v2527, 7
      %v2655 = vrot.slane %v2528, 7
      %v2656 = vsel %vm2578, %v2654, %v2655
      %v2657 = vrot.slane %v2529, 7
      %v2658 = vsel %vm2578, %v2655, %v2657
      %v2659 = vld [vmem:[%s5] sm:$0xff]
      %v2660 = vld [vmem:[%s5 + $0x8] sm:$0xff]
      %v2661 = vld [vmem:[%s5 + $0x10] sm:$0xff]
      %v2662 = vld [vmem:[%s5 + $0x18] sm:$0xff]
      %v2663 = vsel %vm433, %v2581, 0
      %v2665 = vsel %vm433, %v2583, 0
      %v2667 = vsel %vm433, %v2586, 0
      %v2669 = vsel %vm433, %v2588, 0
      %v2671 = vsel %vm433, %v2591, 0
      %v2673 = vsel %vm433, %v2593, 0
      %v2675 = vsel %vm433, %v2596, 0
      %v2677 = vsel %vm433, %v2598, 0
      %v2679 = vsel %vm433, %v2601, 0
      %v2681 = vsel %vm433, %v2603, 0
      %v2683 = vsel %vm433, %v2606, 0
      %v2685 = vsel %vm433, %v2608, 0
      %v2687 = vsel %vm433, %v2611, 0
      %v2689 = vsel %vm433, %v2613, 0
      %v2691 = vsel %vm433, %v2616, 0
      %v2693 = vsel %vm433, %v2618, 0
      %v2695 = vsel %vm433, %v2621, 0
      %v2697 = vsel %vm433, %v2623, 0
      %v2699 = vsel %vm433, %v2626, 0
      %v2701 = vsel %vm433, %v2628, 0
      %v2703 = vsel %vm433, %v2631, 0
      %v2705 = vsel %vm433, %v2633, 0
      %v2707 = vsel %vm433, %v2636, 0
      %v2709 = vsel %vm433, %v2638, 0
      %v2711 = vsel %vm433, %v2641, 0
      %v2713 = vsel %vm433, %v2643, 0
      %v2715 = vsel %vm433, %v2646, 0
      %v2717 = vsel %vm433, %v2648, 0
      %v2719 = vsel %vm433, %v2651, 0
      %v2721 = vsel %vm433, %v2653, 0
      %v2723 = vsel %vm433, %v2656, 0
      %v2725 = vsel %vm433, %v2658, 0
      %2727 = vmatprep.subr.mxu0 0.0
      %2728 = vmatpush1.msra.mxu0 %v2659
      %2729 = vmatprep.subr.mxu0 0.0
      %2730 = vmatpush1.msra.mxu0 %v2660
      %2731 = vmatprep.subr.mxu0 0.0
      %2732 = vmatpush1.msra.mxu0 %v2661
      %2733 = vmatprep.subr.mxu0 0.0
      %2734 = vmatpush1.msra.mxu0 %v2662
      %2735 = vmatprep.subr.mxu0 0.0
      %2736 = vmatpush1.msra.mxu0 0.0
      %2737 = vmatprep.subr.mxu0 0.0
      %2738 = vmatpush1.msra.mxu0 0.0
      %2739 = vmatprep.subr.mxu0 0.0
      %2740 = vmatpush1.msra.mxu0 0.0
      %2741 = vmatprep.subr.mxu0 0.0
      %2742 = vmatpush1.msra.mxu0 0.0
      %2743 = vmatprep.subr.mxu0 0.0
      %2744 = vmatpush1.msra.mxu0 0.0
      %2745 = vmatprep.subr.mxu0 0.0
      %2746 = vmatpush1.msra.mxu0 0.0
      %2747 = vmatprep.subr.mxu0 0.0
      %2748 = vmatpush1.msra.mxu0 0.0
      %2749 = vmatprep.subr.mxu0 0.0
      %2750 = vmatpush1.msra.mxu0 0.0
      %2751 = vmatprep.subr.mxu0 0.0
      %2752 = vmatpush1.msra.mxu0 0.0
      %2753 = vmatprep.subr.mxu0 0.0
      %2754 = vmatpush1.msra.mxu0 0.0
      %2755 = vmatprep.subr.mxu0 0.0
      %2756 = vmatpush1.msra.mxu0 0.0
      %2757 = vmatprep.subr.mxu0 0.0
      %2758 = vmatpush1.msra.mxu0 0.0
      %2759 = vmatprep.subr.mxu0 0.0
      %2760 = vmatpush1.msra.mxu0 0.0
      %2761 = vmatprep.subr.mxu0 0.0
      %2762 = vmatpush1.msra.mxu0 0.0
      %2763 = vmatprep.subr.mxu0 0.0
      %2764 = vmatpush1.msra.mxu0 0.0
      %2765 = vmatprep.subr.mxu0 0.0
      %2766 = vmatpush1.msra.mxu0 0.0
      %2767 = vmatprep.subr.mxu0 0.0
      %2768 = vmatpush1.msra.mxu0 0.0
      %2769 = vmatprep.subr.mxu0 0.0
      %2770 = vmatpush1.msra.mxu0 0.0
      %2771 = vmatprep.subr.mxu0 0.0
      %2772 = vmatpush1.msra.mxu0 0.0
      %2773 = vmatprep.subr.mxu0 0.0
      %2774 = vmatpush1.msra.mxu0 0.0
      %2775 = vmatprep.subr.mxu0 0.0
      %2776 = vmatpush1.msra.mxu0 0.0
      %2777 = vmatprep.subr.mxu0 0.0
      %2778 = vmatpush1.msra.mxu0 0.0
      %2779 = vmatprep.subr.mxu0 0.0
      %2780 = vmatpush1.msra.mxu0 0.0
      %2781 = vmatprep.subr.mxu0 0.0
      %2782 = vmatpush1.msra.mxu0 0.0
      %2783 = vmatprep.subr.mxu0 0.0
      %2784 = vmatpush1.msra.mxu0 0.0
      %2785 = vmatprep.subr.mxu0 0.0
      %2786 = vmatpush1.msra.mxu0 0.0
      %2787 = vmatprep.subr.mxu0 0.0
      %2788 = vmatpush1.msra.mxu0 0.0
      %2789 = vmatprep.subr.mxu0 0.0
      %2790 = vmatpush1.msra.mxu0 0.0
      %2791 = vmatprep.mubr.f32.mxu0 0.0
      %2792 = vmatmul.mubr.f32.gmra.mrb[0].mxu0 %v2663
      %v2793 = vpop.f32.mrb[0].mxu0
      %v2794 = vadd.f32 0.0, %v2793
      %v2795 = vpop.f32.mrb[0].mxu0
      %2796 = vmatprep.mubr.f32.mxu0 0.0
      %2797 = vmatmul.mubr.f32.gmra.mrb[0].mxu0 %v2665
      %v2798 = vpop.f32.mrb[0].mxu0
      %v2799 = vadd.f32 0.0, %v2798
      %v2800 = vpop.f32.mrb[0].mxu0
      %2801 = vmatprep.mubr.f32.mxu0 0.0
      %2802 = vmatmul.mubr.f32.gmra.mrb[0].mxu0 %v2667
      %v2803 = vpop.f32.mrb[0].mxu0
      %v2804 = vadd.f32 0.0, %v2803
      %v2805 = vpop.f32.mrb[0].mxu0
      %2806 = vmatprep.mubr.f32.mxu0 0.0
      %2807 = vmatmul.mubr.f32.gmra.mrb[0].mxu0 %v2669
      %v2808 = vpop.f32.mrb[0].mxu0
      %v2809 = vadd.f32 0.0, %v2808
      %v2810 = vpop.f32.mrb[0].mxu0
      %2811 = vmatprep.mubr.f32.mxu0 0.0
      %2812 = vmatmul.mubr.f32.gmra.mrb[0].mxu0 %v2671
      %v2813 = vpop.f32.mrb[0].mxu0
      %v2814 = vadd.f32 0.0, %v2813
      %v2815 = vpop.f32.mrb[0].mxu0
      %2816 = vmatprep.mubr.f32.mxu0 0.0
      %2817 = vmatmul.mubr.f32.gmra.mrb[0].mxu0 %v2673
      %v2818 = vpop.f32.mrb[0].mxu0
      %v2819 = vadd.f32 0.0, %v2818
      %v2820 = vpop.f32.mrb[0].mxu0
      %2821 = vmatprep.mubr.f32.mxu0 0.0
      %2822 = vmatmul.mubr.f32.gmra.mrb[0].mxu0 %v2675
      %v2823 = vpop.f32.mrb[0].mxu0
      %v2824 = vadd.f32 0.0, %v2823
      %v2825 = vpop.f32.mrb[0].mxu0
      %2826 = vmatprep.mubr.f32.mxu0 0.0
      %2827 = vmatmul.mubr.f32.gmra.mrb[0].mxu0 %v2677
      %v2828 = vpop.f32.mrb[0].mxu0
      %v2829 = vadd.f32 0.0, %v2828
      %v2830 = vpop.f32.mrb[0].mxu0
      %2831 = vmatprep.mubr.f32.mxu0 0.0
      %2832 = vmatmul.mubr.f32.gmra.mrb[0].mxu0 %v2679
      %v2833 = vpop.f32.mrb[0].mxu0
      %v2834 = vadd.f32 0.0, %v2833
      %v2835 = vpop.f32.mrb[0].mxu0
      %2836 = vmatprep.mubr.f32.mxu0 0.0
      %2837 = vmatmul.mubr.f32.gmra.mrb[0].mxu0 %v2681
      %v2838 = vpop.f32.mrb[0].mxu0
      %v2839 = vadd.f32 0.0, %v2838
      %v2840 = vpop.f32.mrb[0].mxu0
      %2841 = vmatprep.mubr.f32.mxu0 0.0
      %2842 = vmatmul.mubr.f32.gmra.mrb[0].mxu0 %v2683
      %v2843 = vpop.f32.mrb[0].mxu0
      %v2844 = vadd.f32 0.0, %v2843
      %v2845 = vpop.f32.mrb[0].mxu0
      %2846 = vmatprep.mubr.f32.mxu0 0.0
      %2847 = vmatmul.mubr.f32.gmra.mrb[0].mxu0 %v2685
      %v2848 = vpop.f32.mrb[0].mxu0
      %v2849 = vadd.f32 0.0, %v2848
      %v2850 = vpop.f32.mrb[0].mxu0
      %2851 = vmatprep.mubr.f32.mxu0 0.0
      %2852 = vmatmul.mubr.f32.gmra.mrb[0].mxu0 %v2687
      %v2853 = vpop.f32.mrb[0].mxu0
      %v2854 = vadd.f32 0.0, %v2853
      %v2855 = vpop.f32.mrb[0].mxu0
      %2856 = vmatprep.mubr.f32.mxu0 0.0
      %2857 = vmatmul.mubr.f32.gmra.mrb[0].mxu0 %v2689
      %v2858 = vpop.f32.mrb[0].mxu0
      %v2859 = vadd.f32 0.0, %v2858
      %v2860 = vpop.f32.mrb[0].mxu0
      %2861 = vmatprep.mubr.f32.mxu0 0.0
      %2862 = vmatmul.mubr.f32.gmra.mrb[0].mxu0 %v2691
      %v2863 = vpop.f32.mrb[0].mxu0
      %v2864 = vadd.f32 0.0, %v2863
      %v2865 = vpop.f32.mrb[0].mxu0
      %2866 = vmatprep.mubr.f32.mxu0 0.0
      %2867 = vmatmul.mubr.f32.gmra.mrb[0].mxu0 %v2693
      %v2868 = vpop.f32.mrb[0].mxu0
      %v2869 = vadd.f32 0.0, %v2868
      %v2870 = vpop.f32.mrb[0].mxu0
      %2871 = vmatprep.mubr.f32.mxu0 0.0
      %2872 = vmatmul.mubr.f32.gmra.mrb[0].mxu0 %v2695
      %v2873 = vpop.f32.mrb[0].mxu0
      %v2874 = vadd.f32 0.0, %v2873
      %v2875 = vpop.f32.mrb[0].mxu0
      %2876 = vmatprep.mubr.f32.mxu0 0.0
      %2877 = vmatmul.mubr.f32.gmra.mrb[0].mxu0 %v2697
      %v2878 = vpop.f32.mrb[0].mxu0
      %v2879 = vadd.f32 0.0, %v2878
      %v2880 = vpop.f32.mrb[0].mxu0
      %2881 = vmatprep.mubr.f32.mxu0 0.0
      %2882 = vmatmul.mubr.f32.gmra.mrb[0].mxu0 %v2699
      %v2883 = vpop.f32.mrb[0].mxu0
      %v2884 = vadd.f32 0.0, %v2883
      %v2885 = vpop.f32.mrb[0].mxu0
      %2886 = vmatprep.mubr.f32.mxu0 0.0
      %2887 = vmatmul.mubr.f32.gmra.mrb[0].mxu0 %v2701
      %v2888 = vpop.f32.mrb[0].mxu0
      %v2889 = vadd.f32 0.0, %v2888
      %v2890 = vpop.f32.mrb[0].mxu0
      %2891 = vmatprep.mubr.f32.mxu0 0.0
      %2892 = vmatmul.mubr.f32.gmra.mrb[0].mxu0 %v2703
      %v2893 = vpop.f32.mrb[0].mxu0
      %v2894 = vadd.f32 0.0, %v2893
      %v2895 = vpop.f32.mrb[0].mxu0
      %2896 = vmatprep.mubr.f32.mxu0 0.0
      %2897 = vmatmul.mubr.f32.gmra.mrb[0].mxu0 %v2705
      %v2898 = vpop.f32.mrb[0].mxu0
      %v2899 = vadd.f32 0.0, %v2898
      %v2900 = vpop.f32.mrb[0].mxu0
      %2901 = vmatprep.mubr.f32.mxu0 0.0
      %2902 = vmatmul.mubr.f32.gmra.mrb[0].mxu0 %v2707
      %v2903 = vpop.f32.mrb[0].mxu0
      %v2904 = vadd.f32 0.0, %v2903
      %v2905 = vpop.f32.mrb[0].mxu0
      %2906 = vmatprep.mubr.f32.mxu0 0.0
      %2907 = vmatmul.mubr.f32.gmra.mrb[0].mxu0 %v2709
      %v2908 = vpop.f32.mrb[0].mxu0
      %v2909 = vadd.f32 0.0, %v2908
      %v2910 = vpop.f32.mrb[0].mxu0
      %2911 = vmatprep.mubr.f32.mxu0 0.0
      %2912 = vmatmul.mubr.f32.gmra.mrb[0].mxu0 %v2711
      %v2913 = vpop.f32.mrb[0].mxu0
      %v2914 = vadd.f32 0.0, %v2913
      %v2915 = vpop.f32.mrb[0].mxu0
      %2916 = vmatprep.mubr.f32.mxu0 0.0
      %2917 = vmatmul.mubr.f32.gmra.mrb[0].mxu0 %v2713
      %v2918 = vpop.f32.mrb[0].mxu0
      %v2919 = vadd.f32 0.0, %v2918
      %v2920 = vpop.f32.mrb[0].mxu0
      %2921 = vmatprep.mubr.f32.mxu0 0.0
      %2922 = vmatmul.mubr.f32.gmra.mrb[0].mxu0 %v2715
      %v2923 = vpop.f32.mrb[0].mxu0
      %v2924 = vadd.f32 0.0, %v2923
      %v2925 = vpop.f32.mrb[0].mxu0
      %2926 = vmatprep.mubr.f32.mxu0 0.0
      %2927 = vmatmul.mubr.f32.gmra.mrb[0].mxu0 %v2717
      %v2928 = vpop.f32.mrb[0].mxu0
      %v2929 = vadd.f32 0.0, %v2928
      %v2930 = vpop.f32.mrb[0].mxu0
      %2931 = vmatprep.mubr.f32.mxu0 0.0
      %2932 = vmatmul.mubr.f32.gmra.mrb[0].mxu0 %v2719
      %v2933 = vpop.f32.mrb[0].mxu0
      %v2934 = vadd.f32 0.0, %v2933
      %v2935 = vpop.f32.mrb[0].mxu0
      %2936 = vmatprep.mubr.f32.mxu0 0.0
      %2937 = vmatmul.mubr.f32.gmra.mrb[0].mxu0 %v2721
      %v2938 = vpop.f32.mrb[0].mxu0
      %v2939 = vadd.f32 0.0, %v2938
      %v2940 = vpop.f32.mrb[0].mxu0
      %2941 = vmatprep.mubr.f32.mxu0 0.0
      %2942 = vmatmul.mubr.f32.gmra.mrb[0].mxu0 %v2723
      %v2943 = vpop.f32.mrb[0].mxu0
      %v2944 = vadd.f32 0.0, %v2943
      %v2945 = vpop.f32.mrb[0].mxu0
      %2946 = vmatprep.mubr.f32.mxu0 0.0
      %2947 = vmatmul.mubr.f32.gmra.mrb[0].mxu0 %v2725
      %v2948 = vpop.f32.mrb[0].mxu0
      %v2949 = vadd.f32 0.0, %v2948
      %v2950 = vpop.f32.mrb[0].mxu0
      %2951 = vdwg.mxu0
      %vm2952 = vcmask 31744
      %2953 = vst.msk [vmem:[%s316] sm:$0xff] %vm2952, %v2794
      %2954 = vst.msk [vmem:[%s316 + $0x8] sm:$0xff] %vm2952, %v2799
      %2955 = vst.msk [vmem:[%s316 + $0x10] sm:$0xff] %vm2952, %v2804
      %2956 = vst.msk [vmem:[%s316 + $0x18] sm:$0xff] %vm2952, %v2809
      %2957 = vst.msk [vmem:[%s316 + $0x20] sm:$0xff] %vm2952, %v2814
      %2958 = vst.msk [vmem:[%s316 + $0x28] sm:$0xff] %vm2952, %v2819
      %2959 = vst.msk [vmem:[%s316 + $0x30] sm:$0xff] %vm2952, %v2824
      %2960 = vst.msk [vmem:[%s316 + $0x38] sm:$0xff] %vm2952, %v2829
      %2961 = vst.msk [vmem:[%s316 + $0x40] sm:$0xff] %vm2952, %v2834
      %2962 = vst.msk [vmem:[%s316 + $0x48] sm:$0xff] %vm2952, %v2839
      %2963 = vst.msk [vmem:[%s316 + $0x50] sm:$0xff] %vm2952, %v2844
      %2964 = vst.msk [vmem:[%s316 + $0x58] sm:$0xff] %vm2952, %v2849
      %2965 = vst.msk [vmem:[%s316 + $0x60] sm:$0xff] %vm2952, %v2854
      %2966 = vst.msk [vmem:[%s316 + $0x68] sm:$0xff] %vm2952, %v2859
      %2967 = vst.msk [vmem:[%s316 + $0x70] sm:$0xff] %vm2952, %v2864
      %2968 = vst.msk [vmem:[%s316 + $0x78] sm:$0xff] %vm2952, %v2869
      %2969 = vst.msk [vmem:[%s316 + $0x80] sm:$0xff] %vm2952, %v2874
      %2970 = vst.msk [vmem:[%s316 + $0x88] sm:$0xff] %vm2952, %v2879
      %2971 = vst.msk [vmem:[%s316 + $0x90] sm:$0xff] %vm2952, %v2884
      %2972 = vst.msk [vmem:[%s316 + $0x98] sm:$0xff] %vm2952, %v2889
      %2973 = vst.msk [vmem:[%s316 + $0xa0] sm:$0xff] %vm2952, %v2894
      %2974 = vst.msk [vmem:[%s316 + $0xa8] sm:$0xff] %vm2952, %v2899
      %2975 = vst.msk [vmem:[%s316 + $0xb0] sm:$0xff] %vm2952, %v2904
      %2976 = vst.msk [vmem:[%s316 + $0xb8] sm:$0xff] %vm2952, %v2909
      %2977 = vst.msk [vmem:[%s316 + $0xc0] sm:$0xff] %vm2952, %v2914
      %2978 = vst.msk [vmem:[%s316 + $0xc8] sm:$0xff] %vm2952, %v2919
      %2979 = vst.msk [vmem:[%s316 + $0xd0] sm:$0xff] %vm2952, %v2924
      %2980 = vst.msk [vmem:[%s316 + $0xd8] sm:$0xff] %vm2952, %v2929
      %2981 = vst.msk [vmem:[%s316 + $0xe0] sm:$0xff] %vm2952, %v2934
      %2982 = vst.msk [vmem:[%s316 + $0xe8] sm:$0xff] %vm2952, %v2939
      %2983 = vst.msk [vmem:[%s316 + $0xf0] sm:$0xff] %vm2952, %v2944
      %2984 = vst.msk [vmem:[%s316 + $0xf8] sm:$0xff] %vm2952, %v2949
      %v2985 = vsel %vm2952, %v2794, 0.0
      %v2986 = vsel %vm2952, %v2799, 0.0
      %v2987 = vadd.f32 %v2985, %v2986
      %v2988 = vsel %vm2952, %v2804, 0.0
      %v2989 = vadd.f32 %v2987, %v2988
      %v2990 = vsel %vm2952, %v2809, 0.0
      %v2991 = vadd.f32 %v2989, %v2990
      %v2992 = vsel %vm2952, %v2814, 0.0
      %v2993 = vadd.f32 %v2991, %v2992
      %v2994 = vsel %vm2952, %v2819, 0.0
      %v2995 = vadd.f32 %v2993, %v2994
      %v2996 = vsel %vm2952, %v2824, 0.0
      %v2997 = vadd.f32 %v2995, %v2996
      %v2998 = vsel %vm2952, %v2829, 0.0
      %v2999 = vadd.f32 %v2997, %v2998
      %v3000 = vsel %vm2952, %v2834, 0.0
      %v3001 = vadd.f32 %v2999, %v3000
      %v3002 = vsel %vm2952, %v2839, 0.0
      %v3003 = vadd.f32 %v3001, %v3002
      %v3004 = vsel %vm2952, %v2844, 0.0
      %v3005 = vadd.f32 %v3003, %v3004
      %v3006 = vsel %vm2952, %v2849, 0.0
      %v3007 = vadd.f32 %v3005, %v3006
      %v3008 = vsel %vm2952, %v2854, 0.0
      %v3009 = vadd.f32 %v3007, %v3008
      %v3010 = vsel %vm2952, %v2859, 0.0
      %v3011 = vadd.f32 %v3009, %v3010
      %v3012 = vsel %vm2952, %v2864, 0.0
      %v3013 = vadd.f32 %v3011, %v3012
      %v3014 = vsel %vm2952, %v2869, 0.0
      %v3015 = vadd.f32 %v3013, %v3014
      %v3016 = vsel %vm2952, %v2874, 0.0
      %v3017 = vadd.f32 %v3015, %v3016
      %v3018 = vsel %vm2952, %v2879, 0.0
      %v3019 = vadd.f32 %v3017, %v3018
      %v3020 = vsel %vm2952, %v2884, 0.0
      %v3021 = vadd.f32 %v3019, %v3020
      %v3022 = vsel %vm2952, %v2889, 0.0
      %v3023 = vadd.f32 %v3021, %v3022
      %v3024 = vsel %vm2952, %v2894, 0.0
      %v3025 = vadd.f32 %v3023, %v3024
      %v3026 = vsel %vm2952, %v2899, 0.0
      %v3027 = vadd.f32 %v3025, %v3026
      %v3028 = vsel %vm2952, %v2904, 0.0
      %v3029 = vadd.f32 %v3027, %v3028
      %v3030 = vsel %vm2952, %v2909, 0.0
      %v3031 = vadd.f32 %v3029, %v3030
      %v3032 = vsel %vm2952, %v2914, 0.0
      %v3033 = vadd.f32 %v3031, %v3032
      %v3034 = vsel %vm2952, %v2919, 0.0
      %v3035 = vadd.f32 %v3033, %v3034
      %v3036 = vsel %vm2952, %v2924, 0.0
      %v3037 = vadd.f32 %v3035, %v3036
      %v3038 = vsel %vm2952, %v2929, 0.0
      %v3039 = vadd.f32 %v3037, %v3038
      %v3040 = vsel %vm2952, %v2934, 0.0
      %v3041 = vadd.f32 %v3039, %v3040
      %v3042 = vsel %vm2952, %v2939, 0.0
      %v3043 = vadd.f32 %v3041, %v3042
      %v3044 = vsel %vm2952, %v2944, 0.0
      %v3045 = vadd.f32 %v3043, %v3044
      %v3046 = vsel %vm2952, %v2949, 0.0
      %v3047 = vadd.f32 %v3045, %v3046
      %v3048 = vrot.slane %v3047, 4
      %v3049 = vadd.f32 %v3047, %v3048
      %v3050 = vrot.slane %v3049, 2
      %v3051 = vadd.f32 %v3049, %v3050
      %v3052 = vrot.slane %v3051, 1
      %v3053 = vadd.f32 %v3051, %v3052
      %vm3054 = vcmask 24576
      %3055 = vst.msk [vmem:[%s319] sm:$0x1] %vm3054, %v3053
      %v3056 = vmul.f32 %v2794, %v2794
      %v3057 = vmul.f32 %v2799, %v2799
      %v3058 = vmul.f32 %v2804, %v2804
      %v3059 = vmul.f32 %v2809, %v2809
      %v3060 = vmul.f32 %v2814, %v2814
      %v3061 = vmul.f32 %v2819, %v2819
      %v3062 = vmul.f32 %v2824, %v2824
      %v3063 = vmul.f32 %v2829, %v2829
      %v3064 = vmul.f32 %v2834, %v2834
      %v3065 = vmul.f32 %v2839, %v2839
      %v3066 = vmul.f32 %v2844, %v2844
      %v3067 = vmul.f32 %v2849, %v2849
      %v3068 = vmul.f32 %v2854, %v2854
      %v3069 = vmul.f32 %v2859, %v2859
      %v3070 = vmul.f32 %v2864, %v2864
      %v3071 = vmul.f32 %v2869, %v2869
      %v3072 = vmul.f32 %v2874, %v2874
      %v3073 = vmul.f32 %v2879, %v2879
      %v3074 = vmul.f32 %v2884, %v2884
      %v3075 = vmul.f32 %v2889, %v2889
      %v3076 = vmul.f32 %v2894, %v2894
      %v3077 = vmul.f32 %v2899, %v2899
      %v3078 = vmul.f32 %v2904, %v2904
      %v3079 = vmul.f32 %v2909, %v2909
      %v3080 = vmul.f32 %v2914, %v2914
      %v3081 = vmul.f32 %v2919, %v2919
      %v3082 = vmul.f32 %v2924, %v2924
      %v3083 = vmul.f32 %v2929, %v2929
      %v3084 = vmul.f32 %v2934, %v2934
      %v3085 = vmul.f32 %v2939, %v2939
      %v3086 = vmul.f32 %v2944, %v2944
      %v3087 = vmul.f32 %v2949, %v2949
      %v3088 = vsel %vm2952, %v3056, 0.0
      %v3089 = vsel %vm2952, %v3057, 0.0
      %v3090 = vadd.f32 %v3088, %v3089
      %v3091 = vsel %vm2952, %v3058, 0.0
      %v3092 = vadd.f32 %v3090, %v3091
      %v3093 = vsel %vm2952, %v3059, 0.0
      %v3094 = vadd.f32 %v3092, %v3093
      %v3095 = vsel %vm2952, %v3060, 0.0
      %v3096 = vadd.f32 %v3094, %v3095
      %v3097 = vsel %vm2952, %v3061, 0.0
      %v3098 = vadd.f32 %v3096, %v3097
      %v3099 = vsel %vm2952, %v3062, 0.0
      %v3100 = vadd.f32 %v3098, %v3099
      %v3101 = vsel %vm2952, %v3063, 0.0
      %v3102 = vadd.f32 %v3100, %v3101
      %v3103 = vsel %vm2952, %v3064, 0.0
      %v3104 = vadd.f32 %v3102, %v3103
      %v3105 = vsel %vm2952, %v3065, 0.0
      %v3106 = vadd.f32 %v3104, %v3105
      %v3107 = vsel %vm2952, %v3066, 0.0
      %v3108 = vadd.f32 %v3106, %v3107
      %v3109 = vsel %vm2952, %v3067, 0.0
      %v3110 = vadd.f32 %v3108, %v3109
      %v3111 = vsel %vm2952, %v3068, 0.0
      %v3112 = vadd.f32 %v3110, %v3111
      %v3113 = vsel %vm2952, %v3069, 0.0
      %v3114 = vadd.f32 %v3112, %v3113
      %v3115 = vsel %vm2952, %v3070, 0.0
      %v3116 = vadd.f32 %v3114, %v3115
      %v3117 = vsel %vm2952, %v3071, 0.0
      %v3118 = vadd.f32 %v3116, %v3117
      %v3119 = vsel %vm2952, %v3072, 0.0
      %v3120 = vadd.f32 %v3118, %v3119
      %v3121 = vsel %vm2952, %v3073, 0.0
      %v3122 = vadd.f32 %v3120, %v3121
      %v3123 = vsel %vm2952, %v3074, 0.0
      %v3124 = vadd.f32 %v3122, %v3123
      %v3125 = vsel %vm2952, %v3075, 0.0
      %v3126 = vadd.f32 %v3124, %v3125
      %v3127 = vsel %vm2952, %v3076, 0.0
      %v3128 = vadd.f32 %v3126, %v3127
      %v3129 = vsel %vm2952, %v3077, 0.0
      %v3130 = vadd.f32 %v3128, %v3129
      %v3131 = vsel %vm2952, %v3078, 0.0
      %v3132 = vadd.f32 %v3130, %v3131
      %v3133 = vsel %vm2952, %v3079, 0.0
      %v3134 = vadd.f32 %v3132, %v3133
      %v3135 = vsel %vm2952, %v3080, 0.0
      %v3136 = vadd.f32 %v3134, %v3135
      %v3137 = vsel %vm2952, %v3081, 0.0
      %v3138 = vadd.f32 %v3136, %v3137
      %v3139 = vsel %vm2952, %v3082, 0.0
      %v3140 = vadd.f32 %v3138, %v3139
      %v3141 = vsel %vm2952, %v3083, 0.0
      %v3142 = vadd.f32 %v3140, %v3141
      %v3143 = vsel %vm2952, %v3084, 0.0
      %v3144 = vadd.f32 %v3142, %v3143
      %v3145 = vsel %vm2952, %v3085, 0.0
      %v3146 = vadd.f32 %v3144, %v3145
      %v3147 = vsel %vm2952, %v3086, 0.0
      %v3148 = vadd.f32 %v3146, %v3147
      %v3149 = vsel %vm2952, %v3087, 0.0
      %v3150 = vadd.f32 %v3148, %v3149
      %v3151 = vrot.slane %v3150, 4
      %v3152 = vadd.f32 %v3150, %v3151
      %v3153 = vrot.slane %v3152, 2
      %v3154 = vadd.f32 %v3152, %v3153
      %v3155 = vrot.slane %v3154, 1
      %v3156 = vadd.f32 %v3154, %v3155
      %3157 = vst.msk [vmem:[%s322] sm:$0x1] %vm3054, %v3156
      %p3158 = scmp.lt.s32.totalorder %s20, 1
      %s3159 = scalar_select %p3158, %s20, 1
      %s3160 = smul.addr %s3159, 32
      %s3161 = smul.addr %s3160, 8
      %s3162 = scalar_lea.vmem %s6, %s3161
      %p3163 = scmp.lt.s32.totalorder %s20, 1
      %s3164 = scalar_select %p3163, %s20, 1
      %s3165 = scalar_lea.vmem %s7, %s3164
      %p3166 = scmp.lt.s32.totalorder %s20, 1
      %s3167 = scalar_select %p3166, %s20, 1
      %s3168 = scalar_lea.vmem %s8, %s3167
      // Predicated region
      $region45: #{mlp_forward.4} parent=43 // pred_check
        %p3169 = pneg %p169
      $region46: #{mlp_forward.4} parent=43 // pred_check_branch
        %3171 = sbr.rel (%p3169) target = $region48
      $region47: #{mlp_forward.4} parent=43 // pred_region
        _
      $region48: #{mlp_forward.4} parent=43 // pred_fallthru
        _
      // Predicated region
      $region49: #{mlp_forward.4} parent=43 // pred_check
        %p3172 = pneg %p195
      $region50: #{mlp_forward.4} parent=43 // pred_check_branch
        %3174 = sbr.rel (%p3172) target = $region52
      $region51: #{mlp_forward.4} parent=43 // pred_region
        _
      $region52: #{mlp_forward.4} parent=43 // pred_fallthru
        _
      // Predicated region
      $region53: #{mlp_forward.4} parent=43 // pred_check
        %p3175 = pneg %p221
      $region54: #{mlp_forward.4} parent=43 // pred_check_branch
        %3177 = sbr.rel (%p3175) target = $region56
      $region55: #{mlp_forward.4} parent=43 // pred_region
        _
      $region56: #{mlp_forward.4} parent=43 // pred_fallthru
        _
    $region44: #{mlp_forward.4} parent=5 // pred_fallthru
      _
    %p3178 = scmp.le.s32.totalorder 2, %s15
    // Predicated region
    $region57: #{mlp_forward.4} parent=5 // pred_check
      %p3179 = pneg %p3178
    $region58: #{mlp_forward.4} parent=5 // pred_check_branch
      %3181 = sbr.rel (%p3179) target = $region60
    $region59: #{mlp_forward.4} parent=5 // pred_region
      %s3182 = ssub.s32 %s15, 2
      // Predicated region
      $region61: #{mlp_forward.4} parent=59 // pred_check
        %p3183 = pneg %p175
      $region62: #{mlp_forward.4} parent=59 // pred_check_branch
        %3185 = sbr.rel (%p3183) target = $region64
      $region63: #{mlp_forward.4} parent=59 // pred_region
        %p3186 = scmp.lt.s32.totalorder %s21, 1
        %s3187 = scalar_select %p3186, %s21, 1
        %s3188 = smul.addr %s3187, 32
        %s3189 = smul.addr %s3188, 8
        %s3190 = scalar_lea.vmem %s6, %s3189
      $region64: #{mlp_forward.4} parent=59 // pred_fallthru
        _
      // Predicated region
      $region65: #{mlp_forward.4} parent=59 // pred_check
        %p3191 = pneg %p201
      $region66: #{mlp_forward.4} parent=59 // pred_check_branch
        %3193 = sbr.rel (%p3191) target = $region68
      $region67: #{mlp_forward.4} parent=59 // pred_region
        %p3194 = scmp.lt.s32.totalorder %s21, 1
        %s3195 = scalar_select %p3194, %s21, 1
        %s3196 = scalar_lea.vmem %s7, %s3195
      $region68: #{mlp_forward.4} parent=59 // pred_fallthru
        _
      // Predicated region
      $region69: #{mlp_forward.4} parent=59 // pred_check
        %p3197 = pneg %p227
      $region70: #{mlp_forward.4} parent=59 // pred_check_branch
        %3199 = sbr.rel (%p3197) target = $region72
      $region71: #{mlp_forward.4} parent=59 // pred_region
        %p3200 = scmp.lt.s32.totalorder %s21, 1
        %s3201 = scalar_select %p3200, %s21, 1
        %s3202 = scalar_lea.vmem %s8, %s3201
      $region72: #{mlp_forward.4} parent=59 // pred_fallthru
        _
    $region60: #{mlp_forward.4} parent=5 // pred_fallthru
      _
  $region6: #{mlp_forward.4} parent=0 // loop_footer
    %s19 = sadd.s32 1, %s15
  $region7: #{mlp_forward.4} parent=0 // loop_footer_branch
    %14 = sbr.rel target = $region3
  $region8: #{mlp_forward.4} parent=0 // loop_exit
    _

</llo_original>
